<compile_context>
chip_gen: v5e
topology: v5e:2x2
jax: 0.10.0
libtpu: 0.0.40
codegen_flags: <defaults>
</compile_context>

<pallas_src>
import functools
import numpy as np
import jax
import jax.numpy as jnp
from jax import lax
from jax.experimental import pallas as pl
from jax.experimental.pallas import tpu as pltpu

EPS = 1e-5          # nn.BatchNorm2d default
NEG_SLOPE = 0.01    # nn.LeakyReLU default


# ----------------------------------------------------------------------------
# Bicubic-antialias resize matrices (Pillow / PyTorch antialias=True, a=-0.5)
# ----------------------------------------------------------------------------
def _cubic(x, a=-0.5):
    x = np.abs(x)
    return np.where(
        x < 1.0, (a + 2.0) * x ** 3 - (a + 3.0) * x ** 2 + 1.0,
        np.where(x < 2.0, a * x ** 3 - 5.0 * a * x ** 2 + 8.0 * a * x - 4.0 * a, 0.0))


def resize_matrix(in_size, out_size):
    """Dense (out_size, in_size) matrix for one axis of
    F.interpolate(mode='bicubic', antialias=True, align_corners=False)."""
    scale = in_size / out_size
    sup_scale = max(scale, 1.0)
    support = 2.0 * sup_scale
    M = np.zeros((out_size, in_size), dtype=np.float64)
    for i in range(out_size):
        center = (i + 0.5) * scale
        lo = max(int(center - support + 0.5), 0)
        hi = min(int(center + support + 0.5), in_size)
        js = np.arange(lo, hi)
        w = _cubic((js + 0.5 - center) / sup_scale)
        M[i, lo:hi] = w / w.sum()
    return M.astype(np.float32)


def make_tap_masks(S, R):
    """(9, R, S*S) {0,1} f32 masks: zero-padding validity of each 3x3 conv tap.
    Lanes that would wrap around under a lane rotation are always invalid here."""
    L = S * S
    xi = np.arange(L) % S
    yi = np.arange(L) // S
    masks = np.zeros((9, R, L), np.float32)
    t = 0
    for dy in (-1, 0, 1):
        for dx in (-1, 0, 1):
            valid = ((xi + dx >= 0) & (xi + dx < S) &
                     (yi + dy >= 0) & (yi + dy < S))
            masks[t] = np.broadcast_to(valid.astype(np.float32), (R, L))
            t += 1
    return masks


# ----------------------------------------------------------------------------
# Fused kernel: whole ResNet forward in a single invocation
# ----------------------------------------------------------------------------
def _resnet_kernel(x_ref, kut_ref, kdt_ref, abn_ref, mask_ref, wconv_ref, pbgb_ref,
                   o_ref, *, S, num_blocks):
    L = S * S

    # Grid-invariant operands: loaded / built ONCE and reused by every block and
    # both convs of a block (JAX does not CSE loads or broadcasts).
    kut = kut_ref[...]                           # (L, 4L)  bf16  kron(U,U)^T
    kdt = kdt_ref[...]                           # (4L, L)  bf16  kron(D,D)^T
    abn = abn_ref[...]                           # (R, R)   f32   per-channel averaging
    masks = [mask_ref[t] for t in range(9)]      # 9 x (R, L) zero-padding masks
    offs = [dy * S + dx for dy in (-1, 0, 1) for dx in (-1, 0, 1)]

    def conv_bn(h, idx):
        """3x3 conv (padding=1) + training-mode BatchNorm2d, fused in VMEM."""
        w = wconv_ref[idx]                       # (R, 9R) = kron(conv weight, I_N)
        p = pbgb_ref[idx]                        # (R, 3)  = [bias | gamma | beta]
        bias, gamma, beta = p[:, 0:1], p[:, 1:2], p[:, 2:3]

        # im2col: 9 XLU lane rotations x precomputed masks -> (9R, L) patch slab.
        taps = []
        for t in range(9):
            if offs[t] == 0:
                rolled = h
            else:
                rolled = pltpu.roll(h, shift=(-offs[t]) % L, axis=1)
            taps.append(rolled * masks[t])
        patches = jnp.concatenate(taps, axis=0)                        # (9R, L)

        y = jnp.dot(w, patches, preferred_element_type=jnp.float32) + bias

        # BN batch stats: lane-reduce first, then the tiny (R,R) channel average.
        s1 = jnp.sum(y, axis=1, keepdims=True)                         # sum x
        s2 = jnp.sum(y * y, axis=1, keepdims=True)                     # sum x^2
        st = jnp.dot(abn, jnp.concatenate([s1, s2], axis=1),
                     preferred_element_type=jnp.float32)               # (R, 2)
        mean = st[:, 0:1]
        var = jnp.maximum(st[:, 1:2] - mean * mean, 0.0)               # biased var
        return (y - mean) * lax.rsqrt(var + EPS) * gamma + beta

    def cno_act(h):
        """CNO_LReLu: bicubic x2 up -> LeakyReLU -> bicubic x2 down for all N*C
        images at once (bf16 MXU operands, f32 accumulation)."""
        up = jnp.dot(h.astype(jnp.bfloat16), kut,
                     preferred_element_type=jnp.float32)               # (R, 4L)
        up = jnp.where(up >= 0.0, up, NEG_SLOPE * up)
        return jnp.dot(up.astype(jnp.bfloat16), kdt,
                       preferred_element_type=jnp.float32)             # (R, L)

    h = x_ref[...]
    # Fully unrolled static loop (num_blocks is tiny and known at trace time):
    # gives Mosaic static parameter-slab indices; equivalent to
    # lax.fori_loop(0, num_blocks, ..., unroll=True).
    for blk in range(num_blocks):
        y = conv_bn(h, 2 * blk)
        y = cno_act(y)
        y = conv_bn(y, 2 * blk + 1)
        h = h + y
    o_ref[...] = h


# ----------------------------------------------------------------------------
# Parameter packing + pallas_call wrapper
# ----------------------------------------------------------------------------
def pack_params(params, N):
    """Pack per-block params into two VMEM-resident slabs:
       wconv: (2B, R, 9R)  kron(conv weight matrix, I_N), conv1/conv2 interleaved
       pbgb : (2B, R, 3)   [bias | gamma | beta] per (C*N) row."""
    C = params[0]['w1'].shape[0]
    eye_n = jnp.eye(N, dtype=jnp.float32)

    def conv_mat(w):
        # (Cout, Cin, 3, 3) -> (Cout, 9*Cin) with columns ordered (ky, kx, ci),
        # then kron with I_N so the whole batch is one matmul.
        w2 = jnp.transpose(w, (0, 2, 3, 1)).reshape(C, 9 * C)
        return jnp.kron(w2, eye_n)                                     # (R, 9R)

    def rows(v):
        return jnp.repeat(v, N)                                        # row c*N+n -> v[c]

    wmats, scal = [], []
    for p in params:
        for w, b, g, be in ((p['w1'], p['b1'], p['g1'], p['be1']),
                            (p['w2'], p['b2'], p['g2'], p['be2'])):
            wmats.append(conv_mat(w))
            scal.append(jnp.stack([rows(b), rows(g), rows(be)], axis=1))
    return jnp.stack(wmats), jnp.stack(scal)


def resnet_forward(x, wconv, pbgb, kut, kdt, abn, masks):
    N, C, H, W = x.shape
    assert H == W, "CNO ResidualBlock assumes square spatial size"
    S, L, R = H, H * W, C * N
    num_blocks = wconv.shape[0] // 2

    # rows: c*N + n, lanes: y*S + x (single small transpose at the boundary)
    xr = jnp.transpose(x, (1, 0, 2, 3)).reshape(R, L)

    def full(shape):
        if len(shape) == 2:
            return pl.BlockSpec(shape, lambda i: (0, 0))
        return pl.BlockSpec(shape, lambda i: (0, 0, 0))

    # Single grid step: every operand is DMA'd exactly once and stays resident
    # (total working set ~1.2 MiB).  Scaling note (v7x, 64 MiB VMEM): kut/kdt
    # grow as 16*S^4 bytes, so for S >= 32 the 4L axis must be K-tiled (LeakyReLU
    # fused per tile) or the resize made separable per axis.
    out = pl.pallas_call(
        functools.partial(_resnet_kernel, S=S, num_blocks=num_blocks),
        out_shape=jax.ShapeDtypeStruct((R, L), jnp.float32),
        grid=(1,),
        in_specs=[full((R, L)),               # activation
                  full((L, 4 * L)),           # kron(U,U)^T  (bf16)
                  full((4 * L, L)),           # kron(D,D)^T  (bf16)
                  full((R, R)),               # BN channel-averaging matrix
                  full((9, R, L)),            # conv tap validity masks
                  full(tuple(wconv.shape)),   # all conv weight matrices
                  full(tuple(pbgb.shape))],   # all bias/gamma/beta rows
        out_specs=pl.BlockSpec((R, L), lambda i: (0, 0)),
        input_output_aliases={0: 0},          # reuse the activation HBM buffer
        compiler_params=pltpu.CompilerParams(
            dimension_semantics=("arbitrary",),
            vmem_limit_bytes=32 * 1024 * 1024),
    )(xr, kut, kdt, abn, masks, wconv, pbgb)

    return jnp.transpose(out.reshape(C, N, H, W), (1, 0, 2, 3))


# ----------------------------------------------------------------------------
# Pure-XLA reference (mirrors the PyTorch module) -- used only for a self-check
# ----------------------------------------------------------------------------
def reference_forward(x, params, U, D):
    hi = lax.Precision.HIGHEST

    def conv3x3(h, w, b):
        return lax.conv_general_dilated(
            h, w, (1, 1), ((1, 1), (1, 1)),
            dimension_numbers=('NCHW', 'OIHW', 'NCHW'),
            precision=hi) + b[None, :, None, None]

    def bn(h, g, be):
        m = jnp.mean(h, axis=(0, 2, 3), keepdims=True)
        v = jnp.mean((h - m) ** 2, axis=(0, 2, 3), keepdims=True)
        return ((h - m) * lax.rsqrt(v + EPS) * g[None, :, None, None]
                + be[None, :, None, None])

    def act(h):
        up = jnp.einsum('ai,ncij,bj->ncab', U, h, U, precision=hi)
        up = jnp.where(up >= 0, up, NEG_SLOPE * up)
        return jnp.einsum('ai,ncij,bj->ncab', D, up, D, precision=hi)

    for p in params:
        out = conv3x3(x, p['w1'], p['b1'])
        out = bn(out, p['g1'], p['be1'])
        out = act(out)
        out = conv3x3(out, p['w2'], p['b2'])
        out = bn(out, p['g2'], p['be2'])
        x = x + out
    return x


# ----------------------------------------------------------------------------
# Deterministic parameter init (PyTorch Conv2d default: U(-1/sqrt(fan_in), +))
# ----------------------------------------------------------------------------
def init_params(key, channels, num_blocks):
    bound = float(1.0 / np.sqrt(channels * 9))
    params = []
    for _ in range(num_blocks):
        key, k1, k2, k3, k4 = jax.random.split(key, 5)
        params.append(dict(
            w1=jax.random.uniform(k1, (channels, channels, 3, 3), jnp.float32, -bound, bound),
            b1=jax.random.uniform(k2, (channels,), jnp.float32, -bound, bound),
            g1=jnp.ones((channels,), jnp.float32),
            be1=jnp.zeros((channels,), jnp.float32),
            w2=jax.random.uniform(k3, (channels, channels, 3, 3), jnp.float32, -bound, bound),
            b2=jax.random.uniform(k4, (channels,), jnp.float32, -bound, bound),
            g2=jnp.ones((channels,), jnp.float32),
            be2=jnp.zeros((channels,), jnp.float32),
        ))
    return params


if __name__ == "__main__":
    channels, size, num_blocks, batch = 4, 16, 2, 2

    key = jax.random.PRNGKey(0)
    key, kx, kp = jax.random.split(key, 3)
    x = jax.random.normal(kx, (batch, channels, size, size), jnp.float32)
    params = init_params(kp, channels, num_blocks)

    U = resize_matrix(size, 2 * size)                      # (2S, S) upsample
    D = resize_matrix(2 * size, size)                      # (S, 2S) downsample
    kut = jnp.asarray(np.kron(U, U).T, dtype=jnp.bfloat16)   # (S*S, 4*S*S)
    kdt = jnp.asarray(np.kron(D, D).T, dtype=jnp.bfloat16)   # (4*S*S, S*S)
    abn = jnp.asarray(np.kron(np.eye(channels, dtype=np.float32),
                              np.ones((batch, batch), np.float32))
                      / (batch * size * size))
    masks = jnp.asarray(make_tap_masks(size, channels * batch))
    wconv, pbgb = pack_params(params, batch)

    fwd = jax.jit(resnet_forward)
    y = fwd(x, wconv, pbgb, kut, kdt, abn, masks)
    jax.block_until_ready(y)

    assert y.shape == x.shape, y.shape
    assert bool(jnp.all(jnp.isfinite(y)))

    # Cross-check the fused kernel against a pure-XLA f32 reference of the module
    # (tolerance covers the bf16 Kronecker-resize matmuls).
    y_ref = jax.jit(reference_forward)(x, params, jnp.asarray(U), jnp.asarray(D))
    assert bool(jnp.allclose(y, y_ref, atol=5e-2, rtol=5e-2)), \
        float(jnp.max(jnp.abs(y - y_ref)))

    print("KERNEL_OK")
</pallas_src>

<mosaic_0001>
module attributes {stable_mosaic.version = 11 : i64} {
  func.func @_resnet_kernel(%arg0: i32, %arg1: memref<8x256xf32, #tpu.memory_space<vmem>>, %arg2: memref<256x1024xbf16, #tpu.memory_space<vmem>>, %arg3: memref<1024x256xbf16, #tpu.memory_space<vmem>>, %arg4: memref<8x8xf32, #tpu.memory_space<vmem>>, %arg5: memref<9x8x256xf32, #tpu.memory_space<vmem>>, %arg6: memref<4x8x72xf32, #tpu.memory_space<vmem>>, %arg7: memref<4x8x3xf32, #tpu.memory_space<vmem>>, %arg8: memref<8x256xf32, #tpu.memory_space<vmem>>) attributes {dimension_semantics = [#tpu.dimension_semantics<arbitrary>], iteration_bounds = array<i64: 1>, scalar_prefetch = 0 : i64, scratch_operands = 0 : i64, tpu.core_type = #tpu.core_type<tc>, window_params = [{pipeline_mode = #tpu.pipeline_mode<synchronous>, transform_indices = @transform_0, window_bounds = array<i64: 8, 256>}, {pipeline_mode = #tpu.pipeline_mode<synchronous>, transform_indices = @transform_1, window_bounds = array<i64: 256, 1024>}, {pipeline_mode = #tpu.pipeline_mode<synchronous>, transform_indices = @transform_2, window_bounds = array<i64: 1024, 256>}, {pipeline_mode = #tpu.pipeline_mode<synchronous>, transform_indices = @transform_3, window_bounds = array<i64: 8, 8>}, {pipeline_mode = #tpu.pipeline_mode<synchronous>, transform_indices = @transform_4, window_bounds = array<i64: 9, 8, 256>}, {pipeline_mode = #tpu.pipeline_mode<synchronous>, transform_indices = @transform_5, window_bounds = array<i64: 4, 8, 72>}, {pipeline_mode = #tpu.pipeline_mode<synchronous>, transform_indices = @transform_6, window_bounds = array<i64: 4, 8, 3>}, {pipeline_mode = #tpu.pipeline_mode<synchronous>, transform_indices = @transform_7, window_bounds = array<i64: 8, 256>}]} {
    %c0 = arith.constant 0 : index
    %c0_0 = arith.constant 0 : index
    %0 = vector.load %arg2[%c0, %c0_0] : memref<256x1024xbf16, #tpu.memory_space<vmem>>, vector<256x1024xbf16>
    %c0_1 = arith.constant 0 : index
    %c0_2 = arith.constant 0 : index
    %1 = vector.load %arg3[%c0_1, %c0_2] : memref<1024x256xbf16, #tpu.memory_space<vmem>>, vector<1024x256xbf16>
    %c0_3 = arith.constant 0 : index
    %c0_4 = arith.constant 0 : index
    %2 = vector.load %arg4[%c0_3, %c0_4] : memref<8x8xf32, #tpu.memory_space<vmem>>, vector<8x8xf32>
    %c0_5 = arith.constant 0 : index
    %c0_6 = arith.constant 0 : index
    %c0_7 = arith.constant 0 : index
    %3 = vector.load %arg5[%c0_5, %c0_6, %c0_7] : memref<9x8x256xf32, #tpu.memory_space<vmem>>, vector<1x8x256xf32>
    %4 = vector.shape_cast %3 : vector<1x8x256xf32> to vector<8x256xf32>
    %c1 = arith.constant 1 : index
    %c0_8 = arith.constant 0 : index
    %c0_9 = arith.constant 0 : index
    %5 = vector.load %arg5[%c1, %c0_8, %c0_9] : memref<9x8x256xf32, #tpu.memory_space<vmem>>, vector<1x8x256xf32>
    %6 = vector.shape_cast %5 : vector<1x8x256xf32> to vector<8x256xf32>
    %c2 = arith.constant 2 : index
    %c0_10 = arith.constant 0 : index
    %c0_11 = arith.constant 0 : index
    %7 = vector.load %arg5[%c2, %c0_10, %c0_11] : memref<9x8x256xf32, #tpu.memory_space<vmem>>, vector<1x8x256xf32>
    %8 = vector.shape_cast %7 : vector<1x8x256xf32> to vector<8x256xf32>
    %c3 = arith.constant 3 : index
    %c0_12 = arith.constant 0 : index
    %c0_13 = arith.constant 0 : index
    %9 = vector.load %arg5[%c3, %c0_12, %c0_13] : memref<9x8x256xf32, #tpu.memory_space<vmem>>, vector<1x8x256xf32>
    %10 = vector.shape_cast %9 : vector<1x8x256xf32> to vector<8x256xf32>
    %c4 = arith.constant 4 : index
    %c0_14 = arith.constant 0 : index
    %c0_15 = arith.constant 0 : index
    %11 = vector.load %arg5[%c4, %c0_14, %c0_15] : memref<9x8x256xf32, #tpu.memory_space<vmem>>, vector<1x8x256xf32>
    %12 = vector.shape_cast %11 : vector<1x8x256xf32> to vector<8x256xf32>
    %c5 = arith.constant 5 : index
    %c0_16 = arith.constant 0 : index
    %c0_17 = arith.constant 0 : index
    %13 = vector.load %arg5[%c5, %c0_16, %c0_17] : memref<9x8x256xf32, #tpu.memory_space<vmem>>, vector<1x8x256xf32>
    %14 = vector.shape_cast %13 : vector<1x8x256xf32> to vector<8x256xf32>
    %c6 = arith.constant 6 : index
    %c0_18 = arith.constant 0 : index
    %c0_19 = arith.constant 0 : index
    %15 = vector.load %arg5[%c6, %c0_18, %c0_19] : memref<9x8x256xf32, #tpu.memory_space<vmem>>, vector<1x8x256xf32>
    %16 = vector.shape_cast %15 : vector<1x8x256xf32> to vector<8x256xf32>
    %c7 = arith.constant 7 : index
    %c0_20 = arith.constant 0 : index
    %c0_21 = arith.constant 0 : index
    %17 = vector.load %arg5[%c7, %c0_20, %c0_21] : memref<9x8x256xf32, #tpu.memory_space<vmem>>, vector<1x8x256xf32>
    %18 = vector.shape_cast %17 : vector<1x8x256xf32> to vector<8x256xf32>
    %c8 = arith.constant 8 : index
    %c0_22 = arith.constant 0 : index
    %c0_23 = arith.constant 0 : index
    %19 = vector.load %arg5[%c8, %c0_22, %c0_23] : memref<9x8x256xf32, #tpu.memory_space<vmem>>, vector<1x8x256xf32>
    %20 = vector.shape_cast %19 : vector<1x8x256xf32> to vector<8x256xf32>
    %c0_24 = arith.constant 0 : index
    %c0_25 = arith.constant 0 : index
    %21 = vector.load %arg1[%c0_24, %c0_25] : memref<8x256xf32, #tpu.memory_space<vmem>>, vector<8x256xf32>
    %c0_26 = arith.constant 0 : index
    %c0_27 = arith.constant 0 : index
    %c0_28 = arith.constant 0 : index
    %22 = vector.load %arg6[%c0_26, %c0_27, %c0_28] : memref<4x8x72xf32, #tpu.memory_space<vmem>>, vector<1x8x72xf32>
    %23 = vector.shape_cast %22 : vector<1x8x72xf32> to vector<8x72xf32>
    %c0_29 = arith.constant 0 : index
    %c0_30 = arith.constant 0 : index
    %c0_31 = arith.constant 0 : index
    %24 = vector.load %arg7[%c0_29, %c0_30, %c0_31] : memref<4x8x3xf32, #tpu.memory_space<vmem>>, vector<1x8x3xf32>
    %25 = vector.shape_cast %24 : vector<1x8x3xf32> to vector<8x3xf32>
    %26 = vector.extract_strided_slice %25 {offsets = [0, 0], sizes = [8, 1], strides = [1, 1]} : vector<8x3xf32> to vector<8x1xf32>
    %27 = vector.extract_strided_slice %25 {offsets = [0, 1], sizes = [8, 1], strides = [1, 1]} : vector<8x3xf32> to vector<8x1xf32>
    %28 = vector.extract_strided_slice %25 {offsets = [0, 2], sizes = [8, 1], strides = [1, 1]} : vector<8x3xf32> to vector<8x1xf32>
    %c17_i32 = arith.constant 17 : i32
    %29 = tpu.dynamic_rotate %21 by %c17_i32 dim 1 : vector<8x256xf32>, i32 -> vector<8x256xf32>
    %30 = arith.mulf %29, %4 : vector<8x256xf32>
    %c16_i32 = arith.constant 16 : i32
    %31 = tpu.dynamic_rotate %21 by %c16_i32 dim 1 : vector<8x256xf32>, i32 -> vector<8x256xf32>
    %32 = arith.mulf %31, %6 : vector<8x256xf32>
    %c15_i32 = arith.constant 15 : i32
    %33 = tpu.dynamic_rotate %21 by %c15_i32 dim 1 : vector<8x256xf32>, i32 -> vector<8x256xf32>
    %34 = arith.mulf %33, %8 : vector<8x256xf32>
    %c1_i32 = arith.constant 1 : i32
    %35 = tpu.dynamic_rotate %21 by %c1_i32 dim 1 : vector<8x256xf32>, i32 -> vector<8x256xf32>
    %36 = arith.mulf %35, %10 : vector<8x256xf32>
    %37 = arith.mulf %21, %12 : vector<8x256xf32>
    %c255_i32 = arith.constant 255 : i32
    %38 = tpu.dynamic_rotate %21 by %c255_i32 dim 1 : vector<8x256xf32>, i32 -> vector<8x256xf32>
    %39 = arith.mulf %38, %14 : vector<8x256xf32>
    %c241_i32 = arith.constant 241 : i32
    %40 = tpu.dynamic_rotate %21 by %c241_i32 dim 1 : vector<8x256xf32>, i32 -> vector<8x256xf32>
    %41 = arith.mulf %40, %16 : vector<8x256xf32>
    %c240_i32 = arith.constant 240 : i32
    %42 = tpu.dynamic_rotate %21 by %c240_i32 dim 1 : vector<8x256xf32>, i32 -> vector<8x256xf32>
    %43 = arith.mulf %42, %18 : vector<8x256xf32>
    %c239_i32 = arith.constant 239 : i32
    %44 = tpu.dynamic_rotate %21 by %c239_i32 dim 1 : vector<8x256xf32>, i32 -> vector<8x256xf32>
    %45 = arith.mulf %44, %20 : vector<8x256xf32>
    %46 = tpu.concatenate %30, %32, %34, %36, %37, %39, %41, %43, %45 in 0 : vector<8x256xf32>, vector<8x256xf32>, vector<8x256xf32>, vector<8x256xf32>, vector<8x256xf32>, vector<8x256xf32>, vector<8x256xf32>, vector<8x256xf32>, vector<8x256xf32> -> vector<72x256xf32>
    %cst = arith.constant dense<0.000000e+00> : vector<8x256xf32>
    %47 = tpu.matmul %23, %46, %cst {dimension_numbers = #tpu.dot_dimension_numbers<[1], [0], [0], [1], [0, 0, 1, 1], [], []>} : vector<8x72xf32>, vector<72x256xf32>, vector<8x256xf32> -> vector<8x256xf32>
    %48 = vector.broadcast %26 : vector<8x1xf32> to vector<8x256xf32>
    %49 = arith.addf %47, %48 : vector<8x256xf32>
    %cst_32 = arith.constant dense<0.000000e+00> : vector<8xf32>
    %50 = vector.multi_reduction <add>, %49, %cst_32 [1] : vector<8x256xf32> to vector<8xf32>
    %51 = vector.shape_cast %50 : vector<8xf32> to vector<8x1xf32>
    %52 = arith.mulf %49, %49 : vector<8x256xf32>
    %cst_33 = arith.constant dense<0.000000e+00> : vector<8xf32>
    %53 = vector.multi_reduction <add>, %52, %cst_33 [1] : vector<8x256xf32> to vector<8xf32>
    %54 = vector.shape_cast %53 : vector<8xf32> to vector<8x1xf32>
    %55 = tpu.concatenate %51, %54 in 1 : vector<8x1xf32>, vector<8x1xf32> -> vector<8x2xf32>
    %cst_34 = arith.constant dense<0.000000e+00> : vector<8x2xf32>
    %56 = tpu.matmul %2, %55, %cst_34 {dimension_numbers = #tpu.dot_dimension_numbers<[1], [0], [0], [1], [0, 0, 1, 1], [], []>} : vector<8x8xf32>, vector<8x2xf32>, vector<8x2xf32> -> vector<8x2xf32>
    %57 = vector.extract_strided_slice %56 {offsets = [0, 0], sizes = [8, 1], strides = [1, 1]} : vector<8x2xf32> to vector<8x1xf32>
    %58 = vector.extract_strided_slice %56 {offsets = [0, 1], sizes = [8, 1], strides = [1, 1]} : vector<8x2xf32> to vector<8x1xf32>
    %59 = arith.mulf %57, %57 : vector<8x1xf32>
    %60 = arith.subf %58, %59 : vector<8x1xf32>
    %cst_35 = arith.constant 0.000000e+00 : f32
    %61 = vector.broadcast %cst_35 : f32 to vector<8x1xf32>
    %62 = arith.maximumf %60, %61 : vector<8x1xf32>
    %63 = vector.broadcast %57 : vector<8x1xf32> to vector<8x256xf32>
    %64 = arith.subf %49, %63 : vector<8x256xf32>
    %cst_36 = arith.constant 9.99999974E-6 : f32
    %65 = vector.broadcast %cst_36 : f32 to vector<8x1xf32>
    %66 = arith.addf %62, %65 : vector<8x1xf32>
    %67 = math.rsqrt %66 : vector<8x1xf32>
    %68 = vector.broadcast %67 : vector<8x1xf32> to vector<8x256xf32>
    %69 = arith.mulf %64, %68 : vector<8x256xf32>
    %70 = vector.broadcast %27 : vector<8x1xf32> to vector<8x256xf32>
    %71 = arith.mulf %69, %70 : vector<8x256xf32>
    %72 = vector.broadcast %28 : vector<8x1xf32> to vector<8x256xf32>
    %73 = arith.addf %71, %72 : vector<8x256xf32>
    %74 = arith.truncf %73 : vector<8x256xf32> to vector<8x256xbf16>
    %cst_37 = arith.constant dense<0.000000e+00> : vector<8x1024xf32>
    %75 = tpu.matmul %74, %0, %cst_37 {dimension_numbers = #tpu.dot_dimension_numbers<[1], [0], [0], [1], [0, 0, 1, 1], [], []>} : vector<8x256xbf16>, vector<256x1024xbf16>, vector<8x1024xf32> -> vector<8x1024xf32>
    %cst_38 = arith.constant 0.000000e+00 : f32
    %76 = vector.broadcast %cst_38 : f32 to vector<8x1024xf32>
    %77 = arith.cmpf oge, %75, %76 : vector<8x1024xf32>
    %cst_39 = arith.constant 0.00999999977 : f32
    %78 = vector.broadcast %cst_39 : f32 to vector<8x1024xf32>
    %79 = arith.mulf %78, %75 : vector<8x1024xf32>
    %80 = arith.select %77, %75, %79 : vector<8x1024xi1>, vector<8x1024xf32>
    %81 = arith.truncf %80 : vector<8x1024xf32> to vector<8x1024xbf16>
    %cst_40 = arith.constant dense<0.000000e+00> : vector<8x256xf32>
    %82 = tpu.matmul %81, %1, %cst_40 {dimension_numbers = #tpu.dot_dimension_numbers<[1], [0], [0], [1], [0, 0, 1, 1], [], []>} : vector<8x1024xbf16>, vector<1024x256xbf16>, vector<8x256xf32> -> vector<8x256xf32>
    %c1_41 = arith.constant 1 : index
    %c0_42 = arith.constant 0 : index
    %c0_43 = arith.constant 0 : index
    %83 = vector.load %arg6[%c1_41, %c0_42, %c0_43] : memref<4x8x72xf32, #tpu.memory_space<vmem>>, vector<1x8x72xf32>
    %84 = vector.shape_cast %83 : vector<1x8x72xf32> to vector<8x72xf32>
    %c1_44 = arith.constant 1 : index
    %c0_45 = arith.constant 0 : index
    %c0_46 = arith.constant 0 : index
    %85 = vector.load %arg7[%c1_44, %c0_45, %c0_46] : memref<4x8x3xf32, #tpu.memory_space<vmem>>, vector<1x8x3xf32>
    %86 = vector.shape_cast %85 : vector<1x8x3xf32> to vector<8x3xf32>
    %87 = vector.extract_strided_slice %86 {offsets = [0, 0], sizes = [8, 1], strides = [1, 1]} : vector<8x3xf32> to vector<8x1xf32>
    %88 = vector.extract_strided_slice %86 {offsets = [0, 1], sizes = [8, 1], strides = [1, 1]} : vector<8x3xf32> to vector<8x1xf32>
    %89 = vector.extract_strided_slice %86 {offsets = [0, 2], sizes = [8, 1], strides = [1, 1]} : vector<8x3xf32> to vector<8x1xf32>
    %c17_i32_47 = arith.constant 17 : i32
    %90 = tpu.dynamic_rotate %82 by %c17_i32_47 dim 1 : vector<8x256xf32>, i32 -> vector<8x256xf32>
    %91 = arith.mulf %90, %4 : vector<8x256xf32>
    %c16_i32_48 = arith.constant 16 : i32
    %92 = tpu.dynamic_rotate %82 by %c16_i32_48 dim 1 : vector<8x256xf32>, i32 -> vector<8x256xf32>
    %93 = arith.mulf %92, %6 : vector<8x256xf32>
    %c15_i32_49 = arith.constant 15 : i32
    %94 = tpu.dynamic_rotate %82 by %c15_i32_49 dim 1 : vector<8x256xf32>, i32 -> vector<8x256xf32>
    %95 = arith.mulf %94, %8 : vector<8x256xf32>
    %c1_i32_50 = arith.constant 1 : i32
    %96 = tpu.dynamic_rotate %82 by %c1_i32_50 dim 1 : vector<8x256xf32>, i32 -> vector<8x256xf32>
    %97 = arith.mulf %96, %10 : vector<8x256xf32>
    %98 = arith.mulf %82, %12 : vector<8x256xf32>
    %c255_i32_51 = arith.constant 255 : i32
    %99 = tpu.dynamic_rotate %82 by %c255_i32_51 dim 1 : vector<8x256xf32>, i32 -> vector<8x256xf32>
    %100 = arith.mulf %99, %14 : vector<8x256xf32>
    %c241_i32_52 = arith.constant 241 : i32
    %101 = tpu.dynamic_rotate %82 by %c241_i32_52 dim 1 : vector<8x256xf32>, i32 -> vector<8x256xf32>
    %102 = arith.mulf %101, %16 : vector<8x256xf32>
    %c240_i32_53 = arith.constant 240 : i32
    %103 = tpu.dynamic_rotate %82 by %c240_i32_53 dim 1 : vector<8x256xf32>, i32 -> vector<8x256xf32>
    %104 = arith.mulf %103, %18 : vector<8x256xf32>
    %c239_i32_54 = arith.constant 239 : i32
    %105 = tpu.dynamic_rotate %82 by %c239_i32_54 dim 1 : vector<8x256xf32>, i32 -> vector<8x256xf32>
    %106 = arith.mulf %105, %20 : vector<8x256xf32>
    %107 = tpu.concatenate %91, %93, %95, %97, %98, %100, %102, %104, %106 in 0 : vector<8x256xf32>, vector<8x256xf32>, vector<8x256xf32>, vector<8x256xf32>, vector<8x256xf32>, vector<8x256xf32>, vector<8x256xf32>, vector<8x256xf32>, vector<8x256xf32> -> vector<72x256xf32>
    %cst_55 = arith.constant dense<0.000000e+00> : vector<8x256xf32>
    %108 = tpu.matmul %84, %107, %cst_55 {dimension_numbers = #tpu.dot_dimension_numbers<[1], [0], [0], [1], [0, 0, 1, 1], [], []>} : vector<8x72xf32>, vector<72x256xf32>, vector<8x256xf32> -> vector<8x256xf32>
    %109 = vector.broadcast %87 : vector<8x1xf32> to vector<8x256xf32>
    %110 = arith.addf %108, %109 : vector<8x256xf32>
    %cst_56 = arith.constant dense<0.000000e+00> : vector<8xf32>
    %111 = vector.multi_reduction <add>, %110, %cst_56 [1] : vector<8x256xf32> to vector<8xf32>
    %112 = vector.shape_cast %111 : vector<8xf32> to vector<8x1xf32>
    %113 = arith.mulf %110, %110 : vector<8x256xf32>
    %cst_57 = arith.constant dense<0.000000e+00> : vector<8xf32>
    %114 = vector.multi_reduction <add>, %113, %cst_57 [1] : vector<8x256xf32> to vector<8xf32>
    %115 = vector.shape_cast %114 : vector<8xf32> to vector<8x1xf32>
    %116 = tpu.concatenate %112, %115 in 1 : vector<8x1xf32>, vector<8x1xf32> -> vector<8x2xf32>
    %cst_58 = arith.constant dense<0.000000e+00> : vector<8x2xf32>
    %117 = tpu.matmul %2, %116, %cst_58 {dimension_numbers = #tpu.dot_dimension_numbers<[1], [0], [0], [1], [0, 0, 1, 1], [], []>} : vector<8x8xf32>, vector<8x2xf32>, vector<8x2xf32> -> vector<8x2xf32>
    %118 = vector.extract_strided_slice %117 {offsets = [0, 0], sizes = [8, 1], strides = [1, 1]} : vector<8x2xf32> to vector<8x1xf32>
    %119 = vector.extract_strided_slice %117 {offsets = [0, 1], sizes = [8, 1], strides = [1, 1]} : vector<8x2xf32> to vector<8x1xf32>
    %120 = arith.mulf %118, %118 : vector<8x1xf32>
    %121 = arith.subf %119, %120 : vector<8x1xf32>
    %cst_59 = arith.constant 0.000000e+00 : f32
    %122 = vector.broadcast %cst_59 : f32 to vector<8x1xf32>
    %123 = arith.maximumf %121, %122 : vector<8x1xf32>
    %124 = vector.broadcast %118 : vector<8x1xf32> to vector<8x256xf32>
    %125 = arith.subf %110, %124 : vector<8x256xf32>
    %cst_60 = arith.constant 9.99999974E-6 : f32
    %126 = vector.broadcast %cst_60 : f32 to vector<8x1xf32>
    %127 = arith.addf %123, %126 : vector<8x1xf32>
    %128 = math.rsqrt %127 : vector<8x1xf32>
    %129 = vector.broadcast %128 : vector<8x1xf32> to vector<8x256xf32>
    %130 = arith.mulf %125, %129 : vector<8x256xf32>
    %131 = vector.broadcast %88 : vector<8x1xf32> to vector<8x256xf32>
    %132 = arith.mulf %130, %131 : vector<8x256xf32>
    %133 = vector.broadcast %89 : vector<8x1xf32> to vector<8x256xf32>
    %134 = arith.addf %132, %133 : vector<8x256xf32>
    %135 = arith.addf %21, %134 : vector<8x256xf32>
    %c2_61 = arith.constant 2 : index
    %c0_62 = arith.constant 0 : index
    %c0_63 = arith.constant 0 : index
    %136 = vector.load %arg6[%c2_61, %c0_62, %c0_63] : memref<4x8x72xf32, #tpu.memory_space<vmem>>, vector<1x8x72xf32>
    %137 = vector.shape_cast %136 : vector<1x8x72xf32> to vector<8x72xf32>
    %c2_64 = arith.constant 2 : index
    %c0_65 = arith.constant 0 : index
    %c0_66 = arith.constant 0 : index
    %138 = vector.load %arg7[%c2_64, %c0_65, %c0_66] : memref<4x8x3xf32, #tpu.memory_space<vmem>>, vector<1x8x3xf32>
    %139 = vector.shape_cast %138 : vector<1x8x3xf32> to vector<8x3xf32>
    %140 = vector.extract_strided_slice %139 {offsets = [0, 0], sizes = [8, 1], strides = [1, 1]} : vector<8x3xf32> to vector<8x1xf32>
    %141 = vector.extract_strided_slice %139 {offsets = [0, 1], sizes = [8, 1], strides = [1, 1]} : vector<8x3xf32> to vector<8x1xf32>
    %142 = vector.extract_strided_slice %139 {offsets = [0, 2], sizes = [8, 1], strides = [1, 1]} : vector<8x3xf32> to vector<8x1xf32>
    %c17_i32_67 = arith.constant 17 : i32
    %143 = tpu.dynamic_rotate %135 by %c17_i32_67 dim 1 : vector<8x256xf32>, i32 -> vector<8x256xf32>
    %144 = arith.mulf %143, %4 : vector<8x256xf32>
    %c16_i32_68 = arith.constant 16 : i32
    %145 = tpu.dynamic_rotate %135 by %c16_i32_68 dim 1 : vector<8x256xf32>, i32 -> vector<8x256xf32>
    %146 = arith.mulf %145, %6 : vector<8x256xf32>
    %c15_i32_69 = arith.constant 15 : i32
    %147 = tpu.dynamic_rotate %135 by %c15_i32_69 dim 1 : vector<8x256xf32>, i32 -> vector<8x256xf32>
    %148 = arith.mulf %147, %8 : vector<8x256xf32>
    %c1_i32_70 = arith.constant 1 : i32
    %149 = tpu.dynamic_rotate %135 by %c1_i32_70 dim 1 : vector<8x256xf32>, i32 -> vector<8x256xf32>
    %150 = arith.mulf %149, %10 : vector<8x256xf32>
    %151 = arith.mulf %135, %12 : vector<8x256xf32>
    %c255_i32_71 = arith.constant 255 : i32
    %152 = tpu.dynamic_rotate %135 by %c255_i32_71 dim 1 : vector<8x256xf32>, i32 -> vector<8x256xf32>
    %153 = arith.mulf %152, %14 : vector<8x256xf32>
    %c241_i32_72 = arith.constant 241 : i32
    %154 = tpu.dynamic_rotate %135 by %c241_i32_72 dim 1 : vector<8x256xf32>, i32 -> vector<8x256xf32>
    %155 = arith.mulf %154, %16 : vector<8x256xf32>
    %c240_i32_73 = arith.constant 240 : i32
    %156 = tpu.dynamic_rotate %135 by %c240_i32_73 dim 1 : vector<8x256xf32>, i32 -> vector<8x256xf32>
    %157 = arith.mulf %156, %18 : vector<8x256xf32>
    %c239_i32_74 = arith.constant 239 : i32
    %158 = tpu.dynamic_rotate %135 by %c239_i32_74 dim 1 : vector<8x256xf32>, i32 -> vector<8x256xf32>
    %159 = arith.mulf %158, %20 : vector<8x256xf32>
    %160 = tpu.concatenate %144, %146, %148, %150, %151, %153, %155, %157, %159 in 0 : vector<8x256xf32>, vector<8x256xf32>, vector<8x256xf32>, vector<8x256xf32>, vector<8x256xf32>, vector<8x256xf32>, vector<8x256xf32>, vector<8x256xf32>, vector<8x256xf32> -> vector<72x256xf32>
    %cst_75 = arith.constant dense<0.000000e+00> : vector<8x256xf32>
    %161 = tpu.matmul %137, %160, %cst_75 {dimension_numbers = #tpu.dot_dimension_numbers<[1], [0], [0], [1], [0, 0, 1, 1], [], []>} : vector<8x72xf32>, vector<72x256xf32>, vector<8x256xf32> -> vector<8x256xf32>
    %162 = vector.broadcast %140 : vector<8x1xf32> to vector<8x256xf32>
    %163 = arith.addf %161, %162 : vector<8x256xf32>
    %cst_76 = arith.constant dense<0.000000e+00> : vector<8xf32>
    %164 = vector.multi_reduction <add>, %163, %cst_76 [1] : vector<8x256xf32> to vector<8xf32>
    %165 = vector.shape_cast %164 : vector<8xf32> to vector<8x1xf32>
    %166 = arith.mulf %163, %163 : vector<8x256xf32>
    %cst_77 = arith.constant dense<0.000000e+00> : vector<8xf32>
    %167 = vector.multi_reduction <add>, %166, %cst_77 [1] : vector<8x256xf32> to vector<8xf32>
    %168 = vector.shape_cast %167 : vector<8xf32> to vector<8x1xf32>
    %169 = tpu.concatenate %165, %168 in 1 : vector<8x1xf32>, vector<8x1xf32> -> vector<8x2xf32>
    %cst_78 = arith.constant dense<0.000000e+00> : vector<8x2xf32>
    %170 = tpu.matmul %2, %169, %cst_78 {dimension_numbers = #tpu.dot_dimension_numbers<[1], [0], [0], [1], [0, 0, 1, 1], [], []>} : vector<8x8xf32>, vector<8x2xf32>, vector<8x2xf32> -> vector<8x2xf32>
    %171 = vector.extract_strided_slice %170 {offsets = [0, 0], sizes = [8, 1], strides = [1, 1]} : vector<8x2xf32> to vector<8x1xf32>
    %172 = vector.extract_strided_slice %170 {offsets = [0, 1], sizes = [8, 1], strides = [1, 1]} : vector<8x2xf32> to vector<8x1xf32>
    %173 = arith.mulf %171, %171 : vector<8x1xf32>
    %174 = arith.subf %172, %173 : vector<8x1xf32>
    %cst_79 = arith.constant 0.000000e+00 : f32
    %175 = vector.broadcast %cst_79 : f32 to vector<8x1xf32>
    %176 = arith.maximumf %174, %175 : vector<8x1xf32>
    %177 = vector.broadcast %171 : vector<8x1xf32> to vector<8x256xf32>
    %178 = arith.subf %163, %177 : vector<8x256xf32>
    %cst_80 = arith.constant 9.99999974E-6 : f32
    %179 = vector.broadcast %cst_80 : f32 to vector<8x1xf32>
    %180 = arith.addf %176, %179 : vector<8x1xf32>
    %181 = math.rsqrt %180 : vector<8x1xf32>
    %182 = vector.broadcast %181 : vector<8x1xf32> to vector<8x256xf32>
    %183 = arith.mulf %178, %182 : vector<8x256xf32>
    %184 = vector.broadcast %141 : vector<8x1xf32> to vector<8x256xf32>
    %185 = arith.mulf %183, %184 : vector<8x256xf32>
    %186 = vector.broadcast %142 : vector<8x1xf32> to vector<8x256xf32>
    %187 = arith.addf %185, %186 : vector<8x256xf32>
    %188 = arith.truncf %187 : vector<8x256xf32> to vector<8x256xbf16>
    %cst_81 = arith.constant dense<0.000000e+00> : vector<8x1024xf32>
    %189 = tpu.matmul %188, %0, %cst_81 {dimension_numbers = #tpu.dot_dimension_numbers<[1], [0], [0], [1], [0, 0, 1, 1], [], []>} : vector<8x256xbf16>, vector<256x1024xbf16>, vector<8x1024xf32> -> vector<8x1024xf32>
    %cst_82 = arith.constant 0.000000e+00 : f32
    %190 = vector.broadcast %cst_82 : f32 to vector<8x1024xf32>
    %191 = arith.cmpf oge, %189, %190 : vector<8x1024xf32>
    %cst_83 = arith.constant 0.00999999977 : f32
    %192 = vector.broadcast %cst_83 : f32 to vector<8x1024xf32>
    %193 = arith.mulf %192, %189 : vector<8x1024xf32>
    %194 = arith.select %191, %189, %193 : vector<8x1024xi1>, vector<8x1024xf32>
    %195 = arith.truncf %194 : vector<8x1024xf32> to vector<8x1024xbf16>
    %cst_84 = arith.constant dense<0.000000e+00> : vector<8x256xf32>
    %196 = tpu.matmul %195, %1, %cst_84 {dimension_numbers = #tpu.dot_dimension_numbers<[1], [0], [0], [1], [0, 0, 1, 1], [], []>} : vector<8x1024xbf16>, vector<1024x256xbf16>, vector<8x256xf32> -> vector<8x256xf32>
    %c3_85 = arith.constant 3 : index
    %c0_86 = arith.constant 0 : index
    %c0_87 = arith.constant 0 : index
    %197 = vector.load %arg6[%c3_85, %c0_86, %c0_87] : memref<4x8x72xf32, #tpu.memory_space<vmem>>, vector<1x8x72xf32>
    %198 = vector.shape_cast %197 : vector<1x8x72xf32> to vector<8x72xf32>
    %c3_88 = arith.constant 3 : index
    %c0_89 = arith.constant 0 : index
    %c0_90 = arith.constant 0 : index
    %199 = vector.load %arg7[%c3_88, %c0_89, %c0_90] : memref<4x8x3xf32, #tpu.memory_space<vmem>>, vector<1x8x3xf32>
    %200 = vector.shape_cast %199 : vector<1x8x3xf32> to vector<8x3xf32>
    %201 = vector.extract_strided_slice %200 {offsets = [0, 0], sizes = [8, 1], strides = [1, 1]} : vector<8x3xf32> to vector<8x1xf32>
    %202 = vector.extract_strided_slice %200 {offsets = [0, 1], sizes = [8, 1], strides = [1, 1]} : vector<8x3xf32> to vector<8x1xf32>
    %203 = vector.extract_strided_slice %200 {offsets = [0, 2], sizes = [8, 1], strides = [1, 1]} : vector<8x3xf32> to vector<8x1xf32>
    %c17_i32_91 = arith.constant 17 : i32
    %204 = tpu.dynamic_rotate %196 by %c17_i32_91 dim 1 : vector<8x256xf32>, i32 -> vector<8x256xf32>
    %205 = arith.mulf %204, %4 : vector<8x256xf32>
    %c16_i32_92 = arith.constant 16 : i32
    %206 = tpu.dynamic_rotate %196 by %c16_i32_92 dim 1 : vector<8x256xf32>, i32 -> vector<8x256xf32>
    %207 = arith.mulf %206, %6 : vector<8x256xf32>
    %c15_i32_93 = arith.constant 15 : i32
    %208 = tpu.dynamic_rotate %196 by %c15_i32_93 dim 1 : vector<8x256xf32>, i32 -> vector<8x256xf32>
    %209 = arith.mulf %208, %8 : vector<8x256xf32>
    %c1_i32_94 = arith.constant 1 : i32
    %210 = tpu.dynamic_rotate %196 by %c1_i32_94 dim 1 : vector<8x256xf32>, i32 -> vector<8x256xf32>
    %211 = arith.mulf %210, %10 : vector<8x256xf32>
    %212 = arith.mulf %196, %12 : vector<8x256xf32>
    %c255_i32_95 = arith.constant 255 : i32
    %213 = tpu.dynamic_rotate %196 by %c255_i32_95 dim 1 : vector<8x256xf32>, i32 -> vector<8x256xf32>
    %214 = arith.mulf %213, %14 : vector<8x256xf32>
    %c241_i32_96 = arith.constant 241 : i32
    %215 = tpu.dynamic_rotate %196 by %c241_i32_96 dim 1 : vector<8x256xf32>, i32 -> vector<8x256xf32>
    %216 = arith.mulf %215, %16 : vector<8x256xf32>
    %c240_i32_97 = arith.constant 240 : i32
    %217 = tpu.dynamic_rotate %196 by %c240_i32_97 dim 1 : vector<8x256xf32>, i32 -> vector<8x256xf32>
    %218 = arith.mulf %217, %18 : vector<8x256xf32>
    %c239_i32_98 = arith.constant 239 : i32
    %219 = tpu.dynamic_rotate %196 by %c239_i32_98 dim 1 : vector<8x256xf32>, i32 -> vector<8x256xf32>
    %220 = arith.mulf %219, %20 : vector<8x256xf32>
    %221 = tpu.concatenate %205, %207, %209, %211, %212, %214, %216, %218, %220 in 0 : vector<8x256xf32>, vector<8x256xf32>, vector<8x256xf32>, vector<8x256xf32>, vector<8x256xf32>, vector<8x256xf32>, vector<8x256xf32>, vector<8x256xf32>, vector<8x256xf32> -> vector<72x256xf32>
    %cst_99 = arith.constant dense<0.000000e+00> : vector<8x256xf32>
    %222 = tpu.matmul %198, %221, %cst_99 {dimension_numbers = #tpu.dot_dimension_numbers<[1], [0], [0], [1], [0, 0, 1, 1], [], []>} : vector<8x72xf32>, vector<72x256xf32>, vector<8x256xf32> -> vector<8x256xf32>
    %223 = vector.broadcast %201 : vector<8x1xf32> to vector<8x256xf32>
    %224 = arith.addf %222, %223 : vector<8x256xf32>
    %cst_100 = arith.constant dense<0.000000e+00> : vector<8xf32>
    %225 = vector.multi_reduction <add>, %224, %cst_100 [1] : vector<8x256xf32> to vector<8xf32>
    %226 = vector.shape_cast %225 : vector<8xf32> to vector<8x1xf32>
    %227 = arith.mulf %224, %224 : vector<8x256xf32>
    %cst_101 = arith.constant dense<0.000000e+00> : vector<8xf32>
    %228 = vector.multi_reduction <add>, %227, %cst_101 [1] : vector<8x256xf32> to vector<8xf32>
    %229 = vector.shape_cast %228 : vector<8xf32> to vector<8x1xf32>
    %230 = tpu.concatenate %226, %229 in 1 : vector<8x1xf32>, vector<8x1xf32> -> vector<8x2xf32>
    %cst_102 = arith.constant dense<0.000000e+00> : vector<8x2xf32>
    %231 = tpu.matmul %2, %230, %cst_102 {dimension_numbers = #tpu.dot_dimension_numbers<[1], [0], [0], [1], [0, 0, 1, 1], [], []>} : vector<8x8xf32>, vector<8x2xf32>, vector<8x2xf32> -> vector<8x2xf32>
    %232 = vector.extract_strided_slice %231 {offsets = [0, 0], sizes = [8, 1], strides = [1, 1]} : vector<8x2xf32> to vector<8x1xf32>
    %233 = vector.extract_strided_slice %231 {offsets = [0, 1], sizes = [8, 1], strides = [1, 1]} : vector<8x2xf32> to vector<8x1xf32>
    %234 = arith.mulf %232, %232 : vector<8x1xf32>
    %235 = arith.subf %233, %234 : vector<8x1xf32>
    %cst_103 = arith.constant 0.000000e+00 : f32
    %236 = vector.broadcast %cst_103 : f32 to vector<8x1xf32>
    %237 = arith.maximumf %235, %236 : vector<8x1xf32>
    %238 = vector.broadcast %232 : vector<8x1xf32> to vector<8x256xf32>
    %239 = arith.subf %224, %238 : vector<8x256xf32>
    %cst_104 = arith.constant 9.99999974E-6 : f32
    %240 = vector.broadcast %cst_104 : f32 to vector<8x1xf32>
    %241 = arith.addf %237, %240 : vector<8x1xf32>
    %242 = math.rsqrt %241 : vector<8x1xf32>
    %243 = vector.broadcast %242 : vector<8x1xf32> to vector<8x256xf32>
    %244 = arith.mulf %239, %243 : vector<8x256xf32>
    %245 = vector.broadcast %202 : vector<8x1xf32> to vector<8x256xf32>
    %246 = arith.mulf %244, %245 : vector<8x256xf32>
    %247 = vector.broadcast %203 : vector<8x1xf32> to vector<8x256xf32>
    %248 = arith.addf %246, %247 : vector<8x256xf32>
    %249 = arith.addf %135, %248 : vector<8x256xf32>
    %c0_105 = arith.constant 0 : index
    %c0_106 = arith.constant 0 : index
    %250 = vector.load %arg8[%c0_105, %c0_106] : memref<8x256xf32, #tpu.memory_space<vmem>>, vector<8x256xf32>
    tpu.vector_store %arg8[%c0_105, %c0_106], %249 {strides = array<i32>} : memref<8x256xf32, #tpu.memory_space<vmem>>, vector<8x256xf32>,
    return
  }
  func.func @transform_0(%arg0: i32) -> (i32, i32) {
    %c0_i32 = arith.constant 0 : i32
    %c0_i32_0 = arith.constant 0 : i32
    %c0_i32_1 = arith.constant 0 : i32
    return %c0_i32, %c0_i32_0 : i32, i32
  }
  func.func @transform_1(%arg0: i32) -> (i32, i32) {
    %c0_i32 = arith.constant 0 : i32
    %c0_i32_0 = arith.constant 0 : i32
    %c0_i32_1 = arith.constant 0 : i32
    return %c0_i32, %c0_i32_0 : i32, i32
  }
  func.func @transform_2(%arg0: i32) -> (i32, i32) {
    %c0_i32 = arith.constant 0 : i32
    %c0_i32_0 = arith.constant 0 : i32
    %c0_i32_1 = arith.constant 0 : i32
    return %c0_i32, %c0_i32_0 : i32, i32
  }
  func.func @transform_3(%arg0: i32) -> (i32, i32) {
    %c0_i32 = arith.constant 0 : i32
    %c0_i32_0 = arith.constant 0 : i32
    %c0_i32_1 = arith.constant 0 : i32
    return %c0_i32, %c0_i32_0 : i32, i32
  }
  func.func @transform_4(%arg0: i32) -> (i32, i32, i32) {
    %c0_i32 = arith.constant 0 : i32
    %c0_i32_0 = arith.constant 0 : i32
    %c0_i32_1 = arith.constant 0 : i32
    %c0_i32_2 = arith.constant 0 : i32
    return %c0_i32, %c0_i32_0, %c0_i32_1 : i32, i32, i32
  }
  func.func @transform_5(%arg0: i32) -> (i32, i32, i32) {
    %c0_i32 = arith.constant 0 : i32
    %c0_i32_0 = arith.constant 0 : i32
    %c0_i32_1 = arith.constant 0 : i32
    %c0_i32_2 = arith.constant 0 : i32
    return %c0_i32, %c0_i32_0, %c0_i32_1 : i32, i32, i32
  }
  func.func @transform_6(%arg0: i32) -> (i32, i32, i32) {
    %c0_i32 = arith.constant 0 : i32
    %c0_i32_0 = arith.constant 0 : i32
    %c0_i32_1 = arith.constant 0 : i32
    %c0_i32_2 = arith.constant 0 : i32
    return %c0_i32, %c0_i32_0, %c0_i32_1 : i32, i32, i32
  }
  func.func @transform_7(%arg0: i32) -> (i32, i32) {
    %c0_i32 = arith.constant 0 : i32
    %c0_i32_0 = arith.constant 0 : i32
    %c0_i32_1 = arith.constant 0 : i32
    return %c0_i32, %c0_i32_0 : i32, i32
  }
}

</mosaic_0001>

<llo_original>
// kernel: resnet_forward.1
$region0: #{resnet_forward.1}
  #allocation0 [shape = 'u32[]', space=smem, size = 0x4, offset = 0x4, fixed_abs, tag = 'smem constant byte address 0x4 - core index']
  #allocation1 [shape = 'u32[72,128]{1,0:T(1,128)}', space=vmem, size = 0x9000, scoped, tag = 'internal scratch']
  %s0 = inlined_call_operand.vmem [shape: f32[8,256], index: 0, kind: input, shape index: {}, may-alias: {0,7}]
  %s1 = inlined_call_operand.hbm [shape: bf16[256,1024], index: 1, kind: input, shape index: {}]
  %s2 = inlined_call_operand.hbm [shape: bf16[1024,256], index: 2, kind: input, shape index: {}]
  %s3 = inlined_call_operand.vmem [shape: f32[8,8], index: 3, kind: input, shape index: {}]
  %s4 = inlined_call_operand.vmem [shape: f32[9,8,256], index: 4, kind: input, shape index: {}]
  %s5 = inlined_call_operand.vmem [shape: f32[4,8,72], index: 5, kind: input, shape index: {}]
  %s6 = inlined_call_operand.vmem [shape: f32[4,8,3], index: 6, kind: input, shape index: {}]
  %s7 = inlined_call_operand.vmem [shape: f32[8,256], index: 7, kind: output, shape index: {}, may-alias: {0,7}]
  %s8 = sld [smem:[#allocation0]]
  $region46: #{resnet_forward.1} parent=0
    _
  %s10 = ssub.s32 1, %s8
  %s11 = scalar_select 0, %s10, %s8
  $region1: #{resnet_forward.1} parent=0
    #allocation2 [shape = 'u8[524288]{0}', space=vmem, size = 0x80000, scoped, tag = 'input window, operand 1, single buffered']
    #allocation3 [shape = 's32[1]{0}', space=sflag, size = 0x4, scoped, tag = 'scoped memory for resnet_forward.1']
    #allocation4 [shape = 'u8[524288]{0}', space=vmem, size = 0x80000, scoped, tag = 'input window, operand 2, single buffered']
    #allocation5 [shape = 's32[1]{0}', space=sflag, size = 0x4, scoped, tag = 'scoped memory for resnet_forward.1']
    %12 = vsyncpa [#allocation3], 0
    %13 = vsyncpa [#allocation5], 0
    // Predicated region
    $region2: #{resnet_forward.1} parent=1 // pred_check
      _
    $region3: #{resnet_forward.1} parent=1 // pred_check_branch
      %15 = sbr.rel (0) target = $region5
    $region4: #{resnet_forward.1} parent=1 // pred_region
      _
    $region5: #{resnet_forward.1} parent=1 // pred_fallthru
      _
    // Predicated region
    $region6: #{resnet_forward.1} parent=1 // pred_check
      _
    $region7: #{resnet_forward.1} parent=1 // pred_check_branch
      %17 = sbr.rel (0) target = $region9
    $region8: #{resnet_forward.1} parent=1 // pred_region
      %19 = vsyncadd [#allocation3], 0
      %s20 = sshll.u32 %s1, 4
      %s21 = int_to_ptr.hbm [resolvable:$true] %s20
      %s22 = sshll.u32 [#allocation2], 4
      %s23 = int_to_ptr.vmem [resolvable:$true] %s22
      %28 = dma.hbm_to_vmem [thread:$0]  %s21, 16384, %s23, [#allocation3], 512, 512, 32
    $region9: #{resnet_forward.1} parent=1 // pred_fallthru
      _
    // Predicated region
    $region10: #{resnet_forward.1} parent=1 // pred_check
      _
    $region11: #{resnet_forward.1} parent=1 // pred_check_branch
      %30 = sbr.rel (0) target = $region13
    $region12: #{resnet_forward.1} parent=1 // pred_region
      %32 = vsyncadd [#allocation5], 0
      %s33 = sshll.u32 %s2, 4
      %s34 = int_to_ptr.hbm [resolvable:$true] %s33
      %s35 = sshll.u32 [#allocation4], 4
      %s36 = int_to_ptr.vmem [resolvable:$true] %s35
      %41 = dma.hbm_to_vmem [thread:$0]  %s34, 16384, %s36, [#allocation5], 128, 128, 8
    $region13: #{resnet_forward.1} parent=1 // pred_fallthru
      _
    // Predicated region
    $region14: #{resnet_forward.1} parent=1 // pred_check
      _
    $region15: #{resnet_forward.1} parent=1 // pred_check_branch
      %43 = sbr.rel (0) target = $region17
    $region16: #{resnet_forward.1} parent=1 // pred_region
      _
    $region17: #{resnet_forward.1} parent=1 // pred_fallthru
      _
    // Predicated region
    $region18: #{resnet_forward.1} parent=1 // pred_check
      _
    $region19: #{resnet_forward.1} parent=1 // pred_check_branch
      %45 = sbr.rel (0) target = $region21
    $region20: #{resnet_forward.1} parent=1 // pred_region
      _
    $region21: #{resnet_forward.1} parent=1 // pred_fallthru
      _
    // Predicated region
    $region22: #{resnet_forward.1} parent=1 // pred_check
      _
    $region23: #{resnet_forward.1} parent=1 // pred_check_branch
      %47 = sbr.rel (0) target = $region25
    $region24: #{resnet_forward.1} parent=1 // pred_region
      _
    $region25: #{resnet_forward.1} parent=1 // pred_fallthru
      _
    // Predicated region
    $region26: #{resnet_forward.1} parent=1 // pred_check
      _
    $region27: #{resnet_forward.1} parent=1 // pred_check_branch
      %49 = sbr.rel (0) target = $region29
    $region28: #{resnet_forward.1} parent=1 // pred_region
      _
    $region29: #{resnet_forward.1} parent=1 // pred_fallthru
      _
    // Predicated region
    $region30: #{resnet_forward.1} parent=1 // pred_check
      _
    $region31: #{resnet_forward.1} parent=1 // pred_check_branch
      %51 = sbr.rel (0) target = $region33
    $region32: #{resnet_forward.1} parent=1 // pred_region
      %53 = dma.done [#allocation3], 16384
    $region33: #{resnet_forward.1} parent=1 // pred_fallthru
      _
    // Predicated region
    $region34: #{resnet_forward.1} parent=1 // pred_check
      _
    $region35: #{resnet_forward.1} parent=1 // pred_check_branch
      %55 = sbr.rel (0) target = $region37
    $region36: #{resnet_forward.1} parent=1 // pred_region
      %57 = dma.done [#allocation5], 16384
    $region37: #{resnet_forward.1} parent=1 // pred_fallthru
      _
    %v58 = vld [vmem:[#allocation2] sm:$0xff]
    %v59 = vld [vmem:[#allocation2 + $0x8] sm:$0xff]
    %v60 = vld [vmem:[#allocation2 + $0x10] sm:$0xff]
    %v61 = vld [vmem:[#allocation2 + $0x18] sm:$0xff]
    %v62 = vld [vmem:[#allocation2 + $0x20] sm:$0xff]
    %v63 = vld [vmem:[#allocation2 + $0x28] sm:$0xff]
    %v64 = vld [vmem:[#allocation2 + $0x30] sm:$0xff]
    %v65 = vld [vmem:[#allocation2 + $0x38] sm:$0xff]
    %v66 = vld [vmem:[#allocation2 + $0x40] sm:$0xff]
    %v67 = vld [vmem:[#allocation2 + $0x48] sm:$0xff]
    %v68 = vld [vmem:[#allocation2 + $0x50] sm:$0xff]
    %v69 = vld [vmem:[#allocation2 + $0x58] sm:$0xff]
    %v70 = vld [vmem:[#allocation2 + $0x60] sm:$0xff]
    %v71 = vld [vmem:[#allocation2 + $0x68] sm:$0xff]
    %v72 = vld [vmem:[#allocation2 + $0x70] sm:$0xff]
    %v73 = vld [vmem:[#allocation2 + $0x78] sm:$0xff]
    %v74 = vld [vmem:[#allocation2 + $0x80] sm:$0xff]
    %v75 = vld [vmem:[#allocation2 + $0x88] sm:$0xff]
    %v76 = vld [vmem:[#allocation2 + $0x90] sm:$0xff]
    %v77 = vld [vmem:[#allocation2 + $0x98] sm:$0xff]
    %v78 = vld [vmem:[#allocation2 + $0xa0] sm:$0xff]
    %v79 = vld [vmem:[#allocation2 + $0xa8] sm:$0xff]
    %v80 = vld [vmem:[#allocation2 + $0xb0] sm:$0xff]
    %v81 = vld [vmem:[#allocation2 + $0xb8] sm:$0xff]
    %v82 = vld [vmem:[#allocation2 + $0xc0] sm:$0xff]
    %v83 = vld [vmem:[#allocation2 + $0xc8] sm:$0xff]
    %v84 = vld [vmem:[#allocation2 + $0xd0] sm:$0xff]
    %v85 = vld [vmem:[#allocation2 + $0xd8] sm:$0xff]
    %v86 = vld [vmem:[#allocation2 + $0xe0] sm:$0xff]
    %v87 = vld [vmem:[#allocation2 + $0xe8] sm:$0xff]
    %v88 = vld [vmem:[#allocation2 + $0xf0] sm:$0xff]
    %v89 = vld [vmem:[#allocation2 + $0xf8] sm:$0xff]
    %v90 = vld [vmem:[#allocation2 + $0x100] sm:$0xff]
    %v91 = vld [vmem:[#allocation2 + $0x108] sm:$0xff]
    %v92 = vld [vmem:[#allocation2 + $0x110] sm:$0xff]
    %v93 = vld [vmem:[#allocation2 + $0x118] sm:$0xff]
    %v94 = vld [vmem:[#allocation2 + $0x120] sm:$0xff]
    %v95 = vld [vmem:[#allocation2 + $0x128] sm:$0xff]
    %v96 = vld [vmem:[#allocation2 + $0x130] sm:$0xff]
    %v97 = vld [vmem:[#allocation2 + $0x138] sm:$0xff]
    %v98 = vld [vmem:[#allocation2 + $0x140] sm:$0xff]
    %v99 = vld [vmem:[#allocation2 + $0x148] sm:$0xff]
    %v100 = vld [vmem:[#allocation2 + $0x150] sm:$0xff]
    %v101 = vld [vmem:[#allocation2 + $0x158] sm:$0xff]
    %v102 = vld [vmem:[#allocation2 + $0x160] sm:$0xff]
    %v103 = vld [vmem:[#allocation2 + $0x168] sm:$0xff]
    %v104 = vld [vmem:[#allocation2 + $0x170] sm:$0xff]
    %v105 = vld [vmem:[#allocation2 + $0x178] sm:$0xff]
    %v106 = vld [vmem:[#allocation2 + $0x180] sm:$0xff]
    %v107 = vld [vmem:[#allocation2 + $0x188] sm:$0xff]
    %v108 = vld [vmem:[#allocation2 + $0x190] sm:$0xff]
    %v109 = vld [vmem:[#allocation2 + $0x198] sm:$0xff]
    %v110 = vld [vmem:[#allocation2 + $0x1a0] sm:$0xff]
    %v111 = vld [vmem:[#allocation2 + $0x1a8] sm:$0xff]
    %v112 = vld [vmem:[#allocation2 + $0x1b0] sm:$0xff]
    %v113 = vld [vmem:[#allocation2 + $0x1b8] sm:$0xff]
    %v114 = vld [vmem:[#allocation2 + $0x1c0] sm:$0xff]
    %v115 = vld [vmem:[#allocation2 + $0x1c8] sm:$0xff]
    %v116 = vld [vmem:[#allocation2 + $0x1d0] sm:$0xff]
    %v117 = vld [vmem:[#allocation2 + $0x1d8] sm:$0xff]
    %v118 = vld [vmem:[#allocation2 + $0x1e0] sm:$0xff]
    %v119 = vld [vmem:[#allocation2 + $0x1e8] sm:$0xff]
    %v120 = vld [vmem:[#allocation2 + $0x1f0] sm:$0xff]
    %v121 = vld [vmem:[#allocation2 + $0x1f8] sm:$0xff]
    %v122 = vld [vmem:[#allocation2 + $0x200] sm:$0xff]
    %v123 = vld [vmem:[#allocation2 + $0x208] sm:$0xff]
    %v124 = vld [vmem:[#allocation2 + $0x210] sm:$0xff]
    %v125 = vld [vmem:[#allocation2 + $0x218] sm:$0xff]
    %v126 = vld [vmem:[#allocation2 + $0x220] sm:$0xff]
    %v127 = vld [vmem:[#allocation2 + $0x228] sm:$0xff]
    %v128 = vld [vmem:[#allocation2 + $0x230] sm:$0xff]
    %v129 = vld [vmem:[#allocation2 + $0x238] sm:$0xff]
    %v130 = vld [vmem:[#allocation2 + $0x240] sm:$0xff]
    %v131 = vld [vmem:[#allocation2 + $0x248] sm:$0xff]
    %v132 = vld [vmem:[#allocation2 + $0x250] sm:$0xff]
    %v133 = vld [vmem:[#allocation2 + $0x258] sm:$0xff]
    %v134 = vld [vmem:[#allocation2 + $0x260] sm:$0xff]
    %v135 = vld [vmem:[#allocation2 + $0x268] sm:$0xff]
    %v136 = vld [vmem:[#allocation2 + $0x270] sm:$0xff]
    %v137 = vld [vmem:[#allocation2 + $0x278] sm:$0xff]
    %v138 = vld [vmem:[#allocation2 + $0x280] sm:$0xff]
    %v139 = vld [vmem:[#allocation2 + $0x288] sm:$0xff]
    %v140 = vld [vmem:[#allocation2 + $0x290] sm:$0xff]
    %v141 = vld [vmem:[#allocation2 + $0x298] sm:$0xff]
    %v142 = vld [vmem:[#allocation2 + $0x2a0] sm:$0xff]
    %v143 = vld [vmem:[#allocation2 + $0x2a8] sm:$0xff]
    %v144 = vld [vmem:[#allocation2 + $0x2b0] sm:$0xff]
    %v145 = vld [vmem:[#allocation2 + $0x2b8] sm:$0xff]
    %v146 = vld [vmem:[#allocation2 + $0x2c0] sm:$0xff]
    %v147 = vld [vmem:[#allocation2 + $0x2c8] sm:$0xff]
    %v148 = vld [vmem:[#allocation2 + $0x2d0] sm:$0xff]
    %v149 = vld [vmem:[#allocation2 + $0x2d8] sm:$0xff]
    %v150 = vld [vmem:[#allocation2 + $0x2e0] sm:$0xff]
    %v151 = vld [vmem:[#allocation2 + $0x2e8] sm:$0xff]
    %v152 = vld [vmem:[#allocation2 + $0x2f0] sm:$0xff]
    %v153 = vld [vmem:[#allocation2 + $0x2f8] sm:$0xff]
    %v154 = vld [vmem:[#allocation2 + $0x300] sm:$0xff]
    %v155 = vld [vmem:[#allocation2 + $0x308] sm:$0xff]
    %v156 = vld [vmem:[#allocation2 + $0x310] sm:$0xff]
    %v157 = vld [vmem:[#allocation2 + $0x318] sm:$0xff]
    %v158 = vld [vmem:[#allocation2 + $0x320] sm:$0xff]
    %v159 = vld [vmem:[#allocation2 + $0x328] sm:$0xff]
    %v160 = vld [vmem:[#allocation2 + $0x330] sm:$0xff]
    %v161 = vld [vmem:[#allocation2 + $0x338] sm:$0xff]
    %v162 = vld [vmem:[#allocation2 + $0x340] sm:$0xff]
    %v163 = vld [vmem:[#allocation2 + $0x348] sm:$0xff]
    %v164 = vld [vmem:[#allocation2 + $0x350] sm:$0xff]
    %v165 = vld [vmem:[#allocation2 + $0x358] sm:$0xff]
    %v166 = vld [vmem:[#allocation2 + $0x360] sm:$0xff]
    %v167 = vld [vmem:[#allocation2 + $0x368] sm:$0xff]
    %v168 = vld [vmem:[#allocation2 + $0x370] sm:$0xff]
    %v169 = vld [vmem:[#allocation2 + $0x378] sm:$0xff]
    %v170 = vld [vmem:[#allocation2 + $0x380] sm:$0xff]
    %v171 = vld [vmem:[#allocation2 + $0x388] sm:$0xff]
    %v172 = vld [vmem:[#allocation2 + $0x390] sm:$0xff]
    %v173 = vld [vmem:[#allocation2 + $0x398] sm:$0xff]
    %v174 = vld [vmem:[#allocation2 + $0x3a0] sm:$0xff]
    %v175 = vld [vmem:[#allocation2 + $0x3a8] sm:$0xff]
    %v176 = vld [vmem:[#allocation2 + $0x3b0] sm:$0xff]
    %v177 = vld [vmem:[#allocation2 + $0x3b8] sm:$0xff]
    %v178 = vld [vmem:[#allocation2 + $0x3c0] sm:$0xff]
    %v179 = vld [vmem:[#allocation2 + $0x3c8] sm:$0xff]
    %v180 = vld [vmem:[#allocation2 + $0x3d0] sm:$0xff]
    %v181 = vld [vmem:[#allocation2 + $0x3d8] sm:$0xff]
    %v182 = vld [vmem:[#allocation2 + $0x3e0] sm:$0xff]
    %v183 = vld [vmem:[#allocation2 + $0x3e8] sm:$0xff]
    %v184 = vld [vmem:[#allocation2 + $0x3f0] sm:$0xff]
    %v185 = vld [vmem:[#allocation2 + $0x3f8] sm:$0xff]
    %v186 = vld [vmem:[#allocation4] sm:$0xff]
    %v187 = vld [vmem:[#allocation4 + $0x8] sm:$0xff]
    %v188 = vld [vmem:[#allocation4 + $0x10] sm:$0xff]
    %v189 = vld [vmem:[#allocation4 + $0x18] sm:$0xff]
    %v190 = vld [vmem:[#allocation4 + $0x20] sm:$0xff]
    %v191 = vld [vmem:[#allocation4 + $0x28] sm:$0xff]
    %v192 = vld [vmem:[#allocation4 + $0x30] sm:$0xff]
    %v193 = vld [vmem:[#allocation4 + $0x38] sm:$0xff]
    %v194 = vld [vmem:[#allocation4 + $0x40] sm:$0xff]
    %v195 = vld [vmem:[#allocation4 + $0x48] sm:$0xff]
    %v196 = vld [vmem:[#allocation4 + $0x50] sm:$0xff]
    %v197 = vld [vmem:[#allocation4 + $0x58] sm:$0xff]
    %v198 = vld [vmem:[#allocation4 + $0x60] sm:$0xff]
    %v199 = vld [vmem:[#allocation4 + $0x68] sm:$0xff]
    %v200 = vld [vmem:[#allocation4 + $0x70] sm:$0xff]
    %v201 = vld [vmem:[#allocation4 + $0x78] sm:$0xff]
    %v202 = vld [vmem:[#allocation4 + $0x80] sm:$0xff]
    %v203 = vld [vmem:[#allocation4 + $0x88] sm:$0xff]
    %v204 = vld [vmem:[#allocation4 + $0x90] sm:$0xff]
    %v205 = vld [vmem:[#allocation4 + $0x98] sm:$0xff]
    %v206 = vld [vmem:[#allocation4 + $0xa0] sm:$0xff]
    %v207 = vld [vmem:[#allocation4 + $0xa8] sm:$0xff]
    %v208 = vld [vmem:[#allocation4 + $0xb0] sm:$0xff]
    %v209 = vld [vmem:[#allocation4 + $0xb8] sm:$0xff]
    %v210 = vld [vmem:[#allocation4 + $0xc0] sm:$0xff]
    %v211 = vld [vmem:[#allocation4 + $0xc8] sm:$0xff]
    %v212 = vld [vmem:[#allocation4 + $0xd0] sm:$0xff]
    %v213 = vld [vmem:[#allocation4 + $0xd8] sm:$0xff]
    %v214 = vld [vmem:[#allocation4 + $0xe0] sm:$0xff]
    %v215 = vld [vmem:[#allocation4 + $0xe8] sm:$0xff]
    %v216 = vld [vmem:[#allocation4 + $0xf0] sm:$0xff]
    %v217 = vld [vmem:[#allocation4 + $0xf8] sm:$0xff]
    %v218 = vld [vmem:[#allocation4 + $0x100] sm:$0xff]
    %v219 = vld [vmem:[#allocation4 + $0x108] sm:$0xff]
    %v220 = vld [vmem:[#allocation4 + $0x110] sm:$0xff]
    %v221 = vld [vmem:[#allocation4 + $0x118] sm:$0xff]
    %v222 = vld [vmem:[#allocation4 + $0x120] sm:$0xff]
    %v223 = vld [vmem:[#allocation4 + $0x128] sm:$0xff]
    %v224 = vld [vmem:[#allocation4 + $0x130] sm:$0xff]
    %v225 = vld [vmem:[#allocation4 + $0x138] sm:$0xff]
    %v226 = vld [vmem:[#allocation4 + $0x140] sm:$0xff]
    %v227 = vld [vmem:[#allocation4 + $0x148] sm:$0xff]
    %v228 = vld [vmem:[#allocation4 + $0x150] sm:$0xff]
    %v229 = vld [vmem:[#allocation4 + $0x158] sm:$0xff]
    %v230 = vld [vmem:[#allocation4 + $0x160] sm:$0xff]
    %v231 = vld [vmem:[#allocation4 + $0x168] sm:$0xff]
    %v232 = vld [vmem:[#allocation4 + $0x170] sm:$0xff]
    %v233 = vld [vmem:[#allocation4 + $0x178] sm:$0xff]
    %v234 = vld [vmem:[#allocation4 + $0x180] sm:$0xff]
    %v235 = vld [vmem:[#allocation4 + $0x188] sm:$0xff]
    %v236 = vld [vmem:[#allocation4 + $0x190] sm:$0xff]
    %v237 = vld [vmem:[#allocation4 + $0x198] sm:$0xff]
    %v238 = vld [vmem:[#allocation4 + $0x1a0] sm:$0xff]
    %v239 = vld [vmem:[#allocation4 + $0x1a8] sm:$0xff]
    %v240 = vld [vmem:[#allocation4 + $0x1b0] sm:$0xff]
    %v241 = vld [vmem:[#allocation4 + $0x1b8] sm:$0xff]
    %v242 = vld [vmem:[#allocation4 + $0x1c0] sm:$0xff]
    %v243 = vld [vmem:[#allocation4 + $0x1c8] sm:$0xff]
    %v244 = vld [vmem:[#allocation4 + $0x1d0] sm:$0xff]
    %v245 = vld [vmem:[#allocation4 + $0x1d8] sm:$0xff]
    %v246 = vld [vmem:[#allocation4 + $0x1e0] sm:$0xff]
    %v247 = vld [vmem:[#allocation4 + $0x1e8] sm:$0xff]
    %v248 = vld [vmem:[#allocation4 + $0x1f0] sm:$0xff]
    %v249 = vld [vmem:[#allocation4 + $0x1f8] sm:$0xff]
    %v250 = vld [vmem:[#allocation4 + $0x200] sm:$0xff]
    %v251 = vld [vmem:[#allocation4 + $0x208] sm:$0xff]
    %v252 = vld [vmem:[#allocation4 + $0x210] sm:$0xff]
    %v253 = vld [vmem:[#allocation4 + $0x218] sm:$0xff]
    %v254 = vld [vmem:[#allocation4 + $0x220] sm:$0xff]
    %v255 = vld [vmem:[#allocation4 + $0x228] sm:$0xff]
    %v256 = vld [vmem:[#allocation4 + $0x230] sm:$0xff]
    %v257 = vld [vmem:[#allocation4 + $0x238] sm:$0xff]
    %v258 = vld [vmem:[#allocation4 + $0x240] sm:$0xff]
    %v259 = vld [vmem:[#allocation4 + $0x248] sm:$0xff]
    %v260 = vld [vmem:[#allocation4 + $0x250] sm:$0xff]
    %v261 = vld [vmem:[#allocation4 + $0x258] sm:$0xff]
    %v262 = vld [vmem:[#allocation4 + $0x260] sm:$0xff]
    %v263 = vld [vmem:[#allocation4 + $0x268] sm:$0xff]
    %v264 = vld [vmem:[#allocation4 + $0x270] sm:$0xff]
    %v265 = vld [vmem:[#allocation4 + $0x278] sm:$0xff]
    %v266 = vld [vmem:[#allocation4 + $0x280] sm:$0xff]
    %v267 = vld [vmem:[#allocation4 + $0x288] sm:$0xff]
    %v268 = vld [vmem:[#allocation4 + $0x290] sm:$0xff]
    %v269 = vld [vmem:[#allocation4 + $0x298] sm:$0xff]
    %v270 = vld [vmem:[#allocation4 + $0x2a0] sm:$0xff]
    %v271 = vld [vmem:[#allocation4 + $0x2a8] sm:$0xff]
    %v272 = vld [vmem:[#allocation4 + $0x2b0] sm:$0xff]
    %v273 = vld [vmem:[#allocation4 + $0x2b8] sm:$0xff]
    %v274 = vld [vmem:[#allocation4 + $0x2c0] sm:$0xff]
    %v275 = vld [vmem:[#allocation4 + $0x2c8] sm:$0xff]
    %v276 = vld [vmem:[#allocation4 + $0x2d0] sm:$0xff]
    %v277 = vld [vmem:[#allocation4 + $0x2d8] sm:$0xff]
    %v278 = vld [vmem:[#allocation4 + $0x2e0] sm:$0xff]
    %v279 = vld [vmem:[#allocation4 + $0x2e8] sm:$0xff]
    %v280 = vld [vmem:[#allocation4 + $0x2f0] sm:$0xff]
    %v281 = vld [vmem:[#allocation4 + $0x2f8] sm:$0xff]
    %v282 = vld [vmem:[#allocation4 + $0x300] sm:$0xff]
    %v283 = vld [vmem:[#allocation4 + $0x308] sm:$0xff]
    %v284 = vld [vmem:[#allocation4 + $0x310] sm:$0xff]
    %v285 = vld [vmem:[#allocation4 + $0x318] sm:$0xff]
    %v286 = vld [vmem:[#allocation4 + $0x320] sm:$0xff]
    %v287 = vld [vmem:[#allocation4 + $0x328] sm:$0xff]
    %v288 = vld [vmem:[#allocation4 + $0x330] sm:$0xff]
    %v289 = vld [vmem:[#allocation4 + $0x338] sm:$0xff]
    %v290 = vld [vmem:[#allocation4 + $0x340] sm:$0xff]
    %v291 = vld [vmem:[#allocation4 + $0x348] sm:$0xff]
    %v292 = vld [vmem:[#allocation4 + $0x350] sm:$0xff]
    %v293 = vld [vmem:[#allocation4 + $0x358] sm:$0xff]
    %v294 = vld [vmem:[#allocation4 + $0x360] sm:$0xff]
    %v295 = vld [vmem:[#allocation4 + $0x368] sm:$0xff]
    %v296 = vld [vmem:[#allocation4 + $0x370] sm:$0xff]
    %v297 = vld [vmem:[#allocation4 + $0x378] sm:$0xff]
    %v298 = vld [vmem:[#allocation4 + $0x380] sm:$0xff]
    %v299 = vld [vmem:[#allocation4 + $0x388] sm:$0xff]
    %v300 = vld [vmem:[#allocation4 + $0x390] sm:$0xff]
    %v301 = vld [vmem:[#allocation4 + $0x398] sm:$0xff]
    %v302 = vld [vmem:[#allocation4 + $0x3a0] sm:$0xff]
    %v303 = vld [vmem:[#allocation4 + $0x3a8] sm:$0xff]
    %v304 = vld [vmem:[#allocation4 + $0x3b0] sm:$0xff]
    %v305 = vld [vmem:[#allocation4 + $0x3b8] sm:$0xff]
    %v306 = vld [vmem:[#allocation4 + $0x3c0] sm:$0xff]
    %v307 = vld [vmem:[#allocation4 + $0x3c8] sm:$0xff]
    %v308 = vld [vmem:[#allocation4 + $0x3d0] sm:$0xff]
    %v309 = vld [vmem:[#allocation4 + $0x3d8] sm:$0xff]
    %v310 = vld [vmem:[#allocation4 + $0x3e0] sm:$0xff]
    %v311 = vld [vmem:[#allocation4 + $0x3e8] sm:$0xff]
    %v312 = vld [vmem:[#allocation4 + $0x3f0] sm:$0xff]
    %v313 = vld [vmem:[#allocation4 + $0x3f8] sm:$0xff]
    %v314 = vld [vmem:[%s3] sm:$0xff]
    %v315 = vld [vmem:[%s4] sm:$0xff]
    %v316 = vld [vmem:[%s4 + $0x8] sm:$0xff]
    %s317 = scalar_lea.vmem %s4, 16
    %v318 = vld [vmem:[%s317] sm:$0xff]
    %v319 = vld [vmem:[%s317 + $0x8] sm:$0xff]
    %s320 = scalar_lea.vmem %s4, 32
    %v321 = vld [vmem:[%s320] sm:$0xff]
    %v322 = vld [vmem:[%s320 + $0x8] sm:$0xff]
    %s323 = scalar_lea.vmem %s4, 48
    %v324 = vld [vmem:[%s323] sm:$0xff]
    %v325 = vld [vmem:[%s323 + $0x8] sm:$0xff]
    %s326 = scalar_lea.vmem %s4, 64
    %v327 = vld [vmem:[%s326] sm:$0xff]
    %v328 = vld [vmem:[%s326 + $0x8] sm:$0xff]
    %s329 = scalar_lea.vmem %s4, 80
    %v330 = vld [vmem:[%s329] sm:$0xff]
    %v331 = vld [vmem:[%s329 + $0x8] sm:$0xff]
    %s332 = scalar_lea.vmem %s4, 96
    %v333 = vld [vmem:[%s332] sm:$0xff]
    %v334 = vld [vmem:[%s332 + $0x8] sm:$0xff]
    %s335 = scalar_lea.vmem %s4, 112
    %v336 = vld [vmem:[%s335] sm:$0xff]
    %v337 = vld [vmem:[%s335 + $0x8] sm:$0xff]
    %s338 = scalar_lea.vmem %s4, 128
    %v339 = vld [vmem:[%s338] sm:$0xff]
    %v340 = vld [vmem:[%s338 + $0x8] sm:$0xff]
    %v341 = vld [vmem:[%s0] sm:$0xff]
    %v342 = vld [vmem:[%s0 + $0x8] sm:$0xff]
    %v343 = vld [vmem:[%s5] sm:$0xff]
    %v344 = vld [vmem:[%s6] sm:$0xff]
    %345 = vrot.lane.b32.xlu0 %v341, 17
    %v346 = vpop.permute.xlu0 %345
    %347 = vrot.lane.b32.xlu0 %v342, 17
    %v348 = vpop.permute.xlu0 %347
    %v349 = vlaneseq
    %v350 = vand.u32 %v349, 127
    %vm351 = vcmp.lt.s32.totalorder %v350, 17
    %v352 = vsel %vm351, %v346, %v348
    %v353 = vsel %vm351, %v348, %v346
    %v354 = vmul.f32 %v353, %v315
    %v355 = vmul.f32 %v352, %v316
    %356 = vrot.lane.b32.xlu0 %v341, 16
    %v357 = vpop.permute.xlu0 %356
    %358 = vrot.lane.b32.xlu0 %v342, 16
    %v359 = vpop.permute.xlu0 %358
    %vm360 = vcmp.lt.s32.totalorder %v350, 16
    %v361 = vsel %vm360, %v357, %v359
    %v362 = vsel %vm360, %v359, %v357
    %v363 = vmul.f32 %v362, %v318
    %v364 = vmul.f32 %v361, %v319
    %365 = vrot.lane.b32.xlu0 %v341, 15
    %v366 = vpop.permute.xlu0 %365
    %367 = vrot.lane.b32.xlu0 %v342, 15
    %v368 = vpop.permute.xlu0 %367
    %vm369 = vcmp.lt.s32.totalorder %v350, 15
    %v370 = vsel %vm369, %v366, %v368
    %v371 = vsel %vm369, %v368, %v366
    %v372 = vmul.f32 %v371, %v321
    %v373 = vmul.f32 %v370, %v322
    %374 = vrot.lane.b32.xlu0 %v341, 1
    %v375 = vpop.permute.xlu0 %374
    %376 = vrot.lane.b32.xlu0 %v342, 1
    %v377 = vpop.permute.xlu0 %376
    %vm378 = vcmp.lt.s32.totalorder %v350, 1
    %v379 = vsel %vm378, %v375, %v377
    %v380 = vsel %vm378, %v377, %v375
    %v381 = vmul.f32 %v380, %v324
    %v382 = vmul.f32 %v379, %v325
    %v383 = vmul.f32 %v341, %v327
    %v384 = vmul.f32 %v342, %v328
    %385 = vrot.lane.b32.xlu0 %v341, 127
    %v386 = vpop.permute.xlu0 %385
    %387 = vrot.lane.b32.xlu0 %v342, 127
    %v388 = vpop.permute.xlu0 %387
    %vm389 = vcmp.lt.s32.totalorder %v350, 127
    %v390 = vsel %vm389, %v386, %v388
    %v391 = vsel %vm389, %v388, %v386
    %v392 = vmul.f32 %v390, %v330
    %v393 = vmul.f32 %v391, %v331
    %394 = vrot.lane.b32.xlu0 %v341, 113
    %v395 = vpop.permute.xlu0 %394
    %396 = vrot.lane.b32.xlu0 %v342, 113
    %v397 = vpop.permute.xlu0 %396
    %vm398 = vcmp.lt.s32.totalorder %v350, 113
    %v399 = vsel %vm398, %v395, %v397
    %v400 = vsel %vm398, %v397, %v395
    %v401 = vmul.f32 %v399, %v333
    %v402 = vmul.f32 %v400, %v334
    %403 = vrot.lane.b32.xlu0 %v341, 112
    %v404 = vpop.permute.xlu0 %403
    %405 = vrot.lane.b32.xlu0 %v342, 112
    %v406 = vpop.permute.xlu0 %405
    %vm407 = vcmp.lt.s32.totalorder %v350, 112
    %v408 = vsel %vm407, %v404, %v406
    %v409 = vsel %vm407, %v406, %v404
    %v410 = vmul.f32 %v408, %v336
    %v411 = vmul.f32 %v409, %v337
    %412 = vrot.lane.b32.xlu0 %v341, 111
    %v413 = vpop.permute.xlu0 %412
    %414 = vrot.lane.b32.xlu0 %v342, 111
    %v415 = vpop.permute.xlu0 %414
    %vm416 = vcmp.lt.s32.totalorder %v350, 111
    %v417 = vsel %vm416, %v413, %v415
    %v418 = vsel %vm416, %v415, %v413
    %v419 = vmul.f32 %v417, %v339
    %v420 = vmul.f32 %v418, %v340
    %422 = vset.pattern.permute.xlu0 0
    %423 = vperm.xlu0 %422, %v344
    %v424 = vpop.permute.xlu0 %423
    %vm426 = vcmask 588800
    %v428 = vsel %vm426, %v343, 0
    %430 = vmatpush.msra.mxu0 0.0
    %431 = vmatpush.msra.mxu0 0.0
    %432 = vmatpush.msra.mxu0 0.0
    %433 = vmatpush.msra.mxu0 0.0
    %434 = vmatpush.msra.mxu0 0.0
    %435 = vmatpush.msra.mxu0 0.0
    %436 = vmatpush.msra.mxu0 0.0
    %437 = vmatpush.msra.mxu0 %v419
    %438 = vmatpush.msra.mxu0 %v410
    %439 = vmatpush.msra.mxu0 %v401
    %440 = vmatpush.msra.mxu0 %v392
    %441 = vmatpush.msra.mxu0 %v383
    %442 = vmatpush.msra.mxu0 %v381
    %443 = vmatpush.msra.mxu0 %v372
    %444 = vmatpush.msra.mxu0 %v363
    %445 = vmatpush.msra.mxu0 %v354
    %446 = vmatmul.f32.gmra.mxu0 %v428
    %v447 = vpop.f32.mrf.mxu0
    %v448 = vadd.f32 %v424, %v447
    %449 = vdwg.mxu0
    %450 = vmatpush.msra.mxu0 0.0
    %451 = vmatpush.msra.mxu0 0.0
    %452 = vmatpush.msra.mxu0 0.0
    %453 = vmatpush.msra.mxu0 0.0
    %454 = vmatpush.msra.mxu0 0.0
    %455 = vmatpush.msra.mxu0 0.0
    %456 = vmatpush.msra.mxu0 0.0
    %457 = vmatpush.msra.mxu0 %v420
    %458 = vmatpush.msra.mxu0 %v411
    %459 = vmatpush.msra.mxu0 %v402
    %460 = vmatpush.msra.mxu0 %v393
    %461 = vmatpush.msra.mxu0 %v384
    %462 = vmatpush.msra.mxu0 %v382
    %463 = vmatpush.msra.mxu0 %v373
    %464 = vmatpush.msra.mxu0 %v364
    %465 = vmatpush.msra.mxu0 %v355
    %466 = vmatmul.f32.gmra.mxu0 %v428
    %v467 = vpop.f32.mrf.mxu0
    %v468 = vadd.f32 %v424, %v467
    %469 = vdwg.mxu0
    %v470 = vadd.f32 %v448, %v468
    %471 = vadd.xlane.f32.xlu0 %v470
    %v472 = vpop.xlane.xlu0 %471
    %v473 = vmul.f32 %v448, %v448
    %v474 = vmul.f32 %v468, %v468
    %v475 = vadd.f32 %v473, %v474
    %476 = vadd.xlane.f32.xlu0 %v475
    %v477 = vpop.xlane.xlu0 %476
    %vm478 = vcmask 7168
    %v479 = vsel %vm478, %v472, %v477
    %vm480 = vcmask 64512
    %v482 = vsel %vm480, %v314, 0
    %484 = vmatpush.msra.mxu0 0.0
    %485 = vmatpush.msra.mxu0 0.0
    %486 = vmatpush.msra.mxu0 0.0
    %487 = vmatpush.msra.mxu0 0.0
    %488 = vmatpush.msra.mxu0 0.0
    %489 = vmatpush.msra.mxu0 0.0
    %490 = vmatpush.msra.mxu0 0.0
    %491 = vmatpush.msra.mxu0 0.0
    %492 = vmatpush.msra.mxu0 0.0
    %493 = vmatpush.msra.mxu0 0.0
    %494 = vmatpush.msra.mxu0 0.0
    %495 = vmatpush.msra.mxu0 0.0
    %496 = vmatpush.msra.mxu0 0.0
    %497 = vmatpush.msra.mxu0 0.0
    %498 = vmatpush.msra.mxu0 0.0
    %499 = vmatpush.msra.mxu0 %v479
    %500 = vmatmul.f32.gmra.mxu0 %v482
    %v501 = vpop.f32.mrf.mxu0
    %v502 = vadd.f32 0.0, %v501
    %503 = vdwg.mxu0
    %v504 = vmul.f32 %v502, %v502
    %506 = vrot.lane.b32.xlu0 %v504, 1
    %v507 = vpop.permute.xlu0 %506
    %v509 = vsub.f32 %v502, %v507
    %v510 = vmax.f32 %v509, 0.0
    %512 = vset.pattern.permute.xlu0 0
    %513 = vperm.xlu0 %512, %v502
    %v514 = vpop.permute.xlu0 %513
    %v516 = vsub.f32 %v448, %v514
    %v517 = vsub.f32 %v468, %v514
    %v518 = vadd.f32 %v510, 1e-05
    %v519 = vrsqrt.pop %v518
    %v520 = vmul.f32 %v519, %v518
    %v521 = vmul.f32 %v520, %v519
    %v522 = vmul.f32 0.5, %v521
    %v523 = vsub.f32 1.5, %v522
    %v524 = vmul.f32 %v519, %v523
    %vm525 = vweird.f32 %v518
    %vm526 = vweird.f32 %v519
    %vm527 = vmor %vm525, %vm526
    %v528 = vsel %vm527, %v519, %v524
    %530 = vset.pattern.permute.xlu0 1
    %531 = vperm.xlu0 %530, %v528
    %v532 = vpop.permute.xlu0 %531
    %v534 = vmul.f32 %v516, %v532
    %v535 = vmul.f32 %v517, %v532
    %536 = vset.pattern.permute.xlu0 1
    %537 = vperm.xlu0 %536, %v344
    %v538 = vpop.permute.xlu0 %537
    %v540 = vmul.f32 %v534, %v538
    %v541 = vmul.f32 %v535, %v538
    %542 = vset.pattern.permute.xlu0 2
    %543 = vperm.xlu0 %542, %v344
    %v544 = vpop.permute.xlu0 %543
    %v546 = vadd.f32 %v540, %v544
    %v547 = vadd.f32 %v541, %v544
    %v548 = vpack.c.bf16 %v546, %v546
    %v549 = vpack.c.bf16 %v547, %v547
    %v678 = vunpack.c.l.b16 %v58
    %v679 = vunpack.c.h.b16 %v58
    %v680 = vunpack.c.l.b16 %v59
    %v681 = vunpack.c.h.b16 %v59
    %v682 = vunpack.c.l.b16 %v60
    %v683 = vunpack.c.h.b16 %v60
    %v684 = vunpack.c.l.b16 %v61
    %v685 = vunpack.c.h.b16 %v61
    %v686 = vunpack.c.l.b16 %v62
    %v687 = vunpack.c.h.b16 %v62
    %v688 = vunpack.c.l.b16 %v63
    %v689 = vunpack.c.h.b16 %v63
    %v690 = vunpack.c.l.b16 %v64
    %v691 = vunpack.c.h.b16 %v64
    %v692 = vunpack.c.l.b16 %v65
    %v693 = vunpack.c.h.b16 %v65
    %v694 = vunpack.c.l.b16 %v66
    %v695 = vunpack.c.h.b16 %v66
    %v696 = vunpack.c.l.b16 %v67
    %v697 = vunpack.c.h.b16 %v67
    %v698 = vunpack.c.l.b16 %v68
    %v699 = vunpack.c.h.b16 %v68
    %v700 = vunpack.c.l.b16 %v69
    %v701 = vunpack.c.h.b16 %v69
    %v702 = vunpack.c.l.b16 %v70
    %v703 = vunpack.c.h.b16 %v70
    %v704 = vunpack.c.l.b16 %v71
    %v705 = vunpack.c.h.b16 %v71
    %v706 = vunpack.c.l.b16 %v72
    %v707 = vunpack.c.h.b16 %v72
    %v708 = vunpack.c.l.b16 %v73
    %v709 = vunpack.c.h.b16 %v73
    %v710 = vunpack.c.l.b16 %v74
    %v711 = vunpack.c.h.b16 %v74
    %v712 = vunpack.c.l.b16 %v75
    %v713 = vunpack.c.h.b16 %v75
    %v714 = vunpack.c.l.b16 %v76
    %v715 = vunpack.c.h.b16 %v76
    %v716 = vunpack.c.l.b16 %v77
    %v717 = vunpack.c.h.b16 %v77
    %v718 = vunpack.c.l.b16 %v78
    %v719 = vunpack.c.h.b16 %v78
    %v720 = vunpack.c.l.b16 %v79
    %v721 = vunpack.c.h.b16 %v79
    %v722 = vunpack.c.l.b16 %v80
    %v723 = vunpack.c.h.b16 %v80
    %v724 = vunpack.c.l.b16 %v81
    %v725 = vunpack.c.h.b16 %v81
    %v726 = vunpack.c.l.b16 %v82
    %v727 = vunpack.c.h.b16 %v82
    %v728 = vunpack.c.l.b16 %v83
    %v729 = vunpack.c.h.b16 %v83
    %v730 = vunpack.c.l.b16 %v84
    %v731 = vunpack.c.h.b16 %v84
    %v732 = vunpack.c.l.b16 %v85
    %v733 = vunpack.c.h.b16 %v85
    %v734 = vunpack.c.l.b16 %v86
    %v735 = vunpack.c.h.b16 %v86
    %v736 = vunpack.c.l.b16 %v87
    %v737 = vunpack.c.h.b16 %v87
    %v738 = vunpack.c.l.b16 %v88
    %v739 = vunpack.c.h.b16 %v88
    %v740 = vunpack.c.l.b16 %v89
    %v741 = vunpack.c.h.b16 %v89
    %v742 = vunpack.c.l.b16 %v90
    %v743 = vunpack.c.h.b16 %v90
    %v744 = vunpack.c.l.b16 %v91
    %v745 = vunpack.c.h.b16 %v91
    %v746 = vunpack.c.l.b16 %v92
    %v747 = vunpack.c.h.b16 %v92
    %v748 = vunpack.c.l.b16 %v93
    %v749 = vunpack.c.h.b16 %v93
    %v750 = vunpack.c.l.b16 %v94
    %v751 = vunpack.c.h.b16 %v94
    %v752 = vunpack.c.l.b16 %v95
    %v753 = vunpack.c.h.b16 %v95
    %v754 = vunpack.c.l.b16 %v96
    %v755 = vunpack.c.h.b16 %v96
    %v756 = vunpack.c.l.b16 %v97
    %v757 = vunpack.c.h.b16 %v97
    %v758 = vunpack.c.l.b16 %v98
    %v759 = vunpack.c.h.b16 %v98
    %v760 = vunpack.c.l.b16 %v99
    %v761 = vunpack.c.h.b16 %v99
    %v762 = vunpack.c.l.b16 %v100
    %v763 = vunpack.c.h.b16 %v100
    %v764 = vunpack.c.l.b16 %v101
    %v765 = vunpack.c.h.b16 %v101
    %v766 = vunpack.c.l.b16 %v102
    %v767 = vunpack.c.h.b16 %v102
    %v768 = vunpack.c.l.b16 %v103
    %v769 = vunpack.c.h.b16 %v103
    %v770 = vunpack.c.l.b16 %v104
    %v771 = vunpack.c.h.b16 %v104
    %v772 = vunpack.c.l.b16 %v105
    %v773 = vunpack.c.h.b16 %v105
    %v774 = vunpack.c.l.b16 %v106
    %v775 = vunpack.c.h.b16 %v106
    %v776 = vunpack.c.l.b16 %v107
    %v777 = vunpack.c.h.b16 %v107
    %v778 = vunpack.c.l.b16 %v108
    %v779 = vunpack.c.h.b16 %v108
    %v780 = vunpack.c.l.b16 %v109
    %v781 = vunpack.c.h.b16 %v109
    %v782 = vunpack.c.l.b16 %v110
    %v783 = vunpack.c.h.b16 %v110
    %v784 = vunpack.c.l.b16 %v111
    %v785 = vunpack.c.h.b16 %v111
    %v786 = vunpack.c.l.b16 %v112
    %v787 = vunpack.c.h.b16 %v112
    %v788 = vunpack.c.l.b16 %v113
    %v789 = vunpack.c.h.b16 %v113
    %v790 = vunpack.c.l.b16 %v114
    %v791 = vunpack.c.h.b16 %v114
    %v792 = vunpack.c.l.b16 %v115
    %v793 = vunpack.c.h.b16 %v115
    %v794 = vunpack.c.l.b16 %v116
    %v795 = vunpack.c.h.b16 %v116
    %v796 = vunpack.c.l.b16 %v117
    %v797 = vunpack.c.h.b16 %v117
    %v798 = vunpack.c.l.b16 %v118
    %v799 = vunpack.c.h.b16 %v118
    %v800 = vunpack.c.l.b16 %v119
    %v801 = vunpack.c.h.b16 %v119
    %v802 = vunpack.c.l.b16 %v120
    %v803 = vunpack.c.h.b16 %v120
    %v804 = vunpack.c.l.b16 %v121
    %v805 = vunpack.c.h.b16 %v121
    %v806 = vunpack.c.l.b16 %v122
    %v807 = vunpack.c.h.b16 %v122
    %v808 = vunpack.c.l.b16 %v123
    %v809 = vunpack.c.h.b16 %v123
    %v810 = vunpack.c.l.b16 %v124
    %v811 = vunpack.c.h.b16 %v124
    %v812 = vunpack.c.l.b16 %v125
    %v813 = vunpack.c.h.b16 %v125
    %v814 = vunpack.c.l.b16 %v126
    %v815 = vunpack.c.h.b16 %v126
    %v816 = vunpack.c.l.b16 %v127
    %v817 = vunpack.c.h.b16 %v127
    %v818 = vunpack.c.l.b16 %v128
    %v819 = vunpack.c.h.b16 %v128
    %v820 = vunpack.c.l.b16 %v129
    %v821 = vunpack.c.h.b16 %v129
    %v822 = vunpack.c.l.b16 %v130
    %v823 = vunpack.c.h.b16 %v130
    %v824 = vunpack.c.l.b16 %v131
    %v825 = vunpack.c.h.b16 %v131
    %v826 = vunpack.c.l.b16 %v132
    %v827 = vunpack.c.h.b16 %v132
    %v828 = vunpack.c.l.b16 %v133
    %v829 = vunpack.c.h.b16 %v133
    %v830 = vunpack.c.l.b16 %v134
    %v831 = vunpack.c.h.b16 %v134
    %v832 = vunpack.c.l.b16 %v135
    %v833 = vunpack.c.h.b16 %v135
    %v834 = vunpack.c.l.b16 %v136
    %v835 = vunpack.c.h.b16 %v136
    %v836 = vunpack.c.l.b16 %v137
    %v837 = vunpack.c.h.b16 %v137
    %v838 = vunpack.c.l.b16 %v138
    %v839 = vunpack.c.h.b16 %v138
    %v840 = vunpack.c.l.b16 %v139
    %v841 = vunpack.c.h.b16 %v139
    %v842 = vunpack.c.l.b16 %v140
    %v843 = vunpack.c.h.b16 %v140
    %v844 = vunpack.c.l.b16 %v141
    %v845 = vunpack.c.h.b16 %v141
    %v846 = vunpack.c.l.b16 %v142
    %v847 = vunpack.c.h.b16 %v142
    %v848 = vunpack.c.l.b16 %v143
    %v849 = vunpack.c.h.b16 %v143
    %v850 = vunpack.c.l.b16 %v144
    %v851 = vunpack.c.h.b16 %v144
    %v852 = vunpack.c.l.b16 %v145
    %v853 = vunpack.c.h.b16 %v145
    %v854 = vunpack.c.l.b16 %v146
    %v855 = vunpack.c.h.b16 %v146
    %v856 = vunpack.c.l.b16 %v147
    %v857 = vunpack.c.h.b16 %v147
    %v858 = vunpack.c.l.b16 %v148
    %v859 = vunpack.c.h.b16 %v148
    %v860 = vunpack.c.l.b16 %v149
    %v861 = vunpack.c.h.b16 %v149
    %v862 = vunpack.c.l.b16 %v150
    %v863 = vunpack.c.h.b16 %v150
    %v864 = vunpack.c.l.b16 %v151
    %v865 = vunpack.c.h.b16 %v151
    %v866 = vunpack.c.l.b16 %v152
    %v867 = vunpack.c.h.b16 %v152
    %v868 = vunpack.c.l.b16 %v153
    %v869 = vunpack.c.h.b16 %v153
    %v870 = vunpack.c.l.b16 %v154
    %v871 = vunpack.c.h.b16 %v154
    %v872 = vunpack.c.l.b16 %v155
    %v873 = vunpack.c.h.b16 %v155
    %v874 = vunpack.c.l.b16 %v156
    %v875 = vunpack.c.h.b16 %v156
    %v876 = vunpack.c.l.b16 %v157
    %v877 = vunpack.c.h.b16 %v157
    %v878 = vunpack.c.l.b16 %v158
    %v879 = vunpack.c.h.b16 %v158
    %v880 = vunpack.c.l.b16 %v159
    %v881 = vunpack.c.h.b16 %v159
    %v882 = vunpack.c.l.b16 %v160
    %v883 = vunpack.c.h.b16 %v160
    %v884 = vunpack.c.l.b16 %v161
    %v885 = vunpack.c.h.b16 %v161
    %v886 = vunpack.c.l.b16 %v162
    %v887 = vunpack.c.h.b16 %v162
    %v888 = vunpack.c.l.b16 %v163
    %v889 = vunpack.c.h.b16 %v163
    %v890 = vunpack.c.l.b16 %v164
    %v891 = vunpack.c.h.b16 %v164
    %v892 = vunpack.c.l.b16 %v165
    %v893 = vunpack.c.h.b16 %v165
    %v894 = vunpack.c.l.b16 %v166
    %v895 = vunpack.c.h.b16 %v166
    %v896 = vunpack.c.l.b16 %v167
    %v897 = vunpack.c.h.b16 %v167
    %v898 = vunpack.c.l.b16 %v168
    %v899 = vunpack.c.h.b16 %v168
    %v900 = vunpack.c.l.b16 %v169
    %v901 = vunpack.c.h.b16 %v169
    %v902 = vunpack.c.l.b16 %v170
    %v903 = vunpack.c.h.b16 %v170
    %v904 = vunpack.c.l.b16 %v171
    %v905 = vunpack.c.h.b16 %v171
    %v906 = vunpack.c.l.b16 %v172
    %v907 = vunpack.c.h.b16 %v172
    %v908 = vunpack.c.l.b16 %v173
    %v909 = vunpack.c.h.b16 %v173
    %v910 = vunpack.c.l.b16 %v174
    %v911 = vunpack.c.h.b16 %v174
    %v912 = vunpack.c.l.b16 %v175
    %v913 = vunpack.c.h.b16 %v175
    %v914 = vunpack.c.l.b16 %v176
    %v915 = vunpack.c.h.b16 %v176
    %v916 = vunpack.c.l.b16 %v177
    %v917 = vunpack.c.h.b16 %v177
    %v918 = vunpack.c.l.b16 %v178
    %v919 = vunpack.c.h.b16 %v178
    %v920 = vunpack.c.l.b16 %v179
    %v921 = vunpack.c.h.b16 %v179
    %v922 = vunpack.c.l.b16 %v180
    %v923 = vunpack.c.h.b16 %v180
    %v924 = vunpack.c.l.b16 %v181
    %v925 = vunpack.c.h.b16 %v181
    %v926 = vunpack.c.l.b16 %v182
    %v927 = vunpack.c.h.b16 %v182
    %v928 = vunpack.c.l.b16 %v183
    %v929 = vunpack.c.h.b16 %v183
    %v930 = vunpack.c.l.b16 %v184
    %v931 = vunpack.c.h.b16 %v184
    %v932 = vunpack.c.l.b16 %v185
    %v933 = vunpack.c.h.b16 %v185
    %v934 = vpack.c.b16 %v686, %v678
    %v935 = vpack.c.b16 %v687, %v679
    %v936 = vpack.c.b16 %v688, %v680
    %v937 = vpack.c.b16 %v689, %v681
    %v938 = vpack.c.b16 %v690, %v682
    %v939 = vpack.c.b16 %v691, %v683
    %v940 = vpack.c.b16 %v692, %v684
    %v941 = vpack.c.b16 %v693, %v685
    %v942 = vpack.c.b16 %v702, %v694
    %v943 = vpack.c.b16 %v703, %v695
    %v944 = vpack.c.b16 %v704, %v696
    %v945 = vpack.c.b16 %v705, %v697
    %v946 = vpack.c.b16 %v706, %v698
    %v947 = vpack.c.b16 %v707, %v699
    %v948 = vpack.c.b16 %v708, %v700
    %v949 = vpack.c.b16 %v709, %v701
    %v950 = vpack.c.b16 %v718, %v710
    %v951 = vpack.c.b16 %v719, %v711
    %v952 = vpack.c.b16 %v720, %v712
    %v953 = vpack.c.b16 %v721, %v713
    %v954 = vpack.c.b16 %v722, %v714
    %v955 = vpack.c.b16 %v723, %v715
    %v956 = vpack.c.b16 %v724, %v716
    %v957 = vpack.c.b16 %v725, %v717
    %v958 = vpack.c.b16 %v734, %v726
    %v959 = vpack.c.b16 %v735, %v727
    %v960 = vpack.c.b16 %v736, %v728
    %v961 = vpack.c.b16 %v737, %v729
    %v962 = vpack.c.b16 %v738, %v730
    %v963 = vpack.c.b16 %v739, %v731
    %v964 = vpack.c.b16 %v740, %v732
    %v965 = vpack.c.b16 %v741, %v733
    %v966 = vpack.c.b16 %v750, %v742
    %v967 = vpack.c.b16 %v751, %v743
    %v968 = vpack.c.b16 %v752, %v744
    %v969 = vpack.c.b16 %v753, %v745
    %v970 = vpack.c.b16 %v754, %v746
    %v971 = vpack.c.b16 %v755, %v747
    %v972 = vpack.c.b16 %v756, %v748
    %v973 = vpack.c.b16 %v757, %v749
    %v974 = vpack.c.b16 %v766, %v758
    %v975 = vpack.c.b16 %v767, %v759
    %v976 = vpack.c.b16 %v768, %v760
    %v977 = vpack.c.b16 %v769, %v761
    %v978 = vpack.c.b16 %v770, %v762
    %v979 = vpack.c.b16 %v771, %v763
    %v980 = vpack.c.b16 %v772, %v764
    %v981 = vpack.c.b16 %v773, %v765
    %v982 = vpack.c.b16 %v782, %v774
    %v983 = vpack.c.b16 %v783, %v775
    %v984 = vpack.c.b16 %v784, %v776
    %v985 = vpack.c.b16 %v785, %v777
    %v986 = vpack.c.b16 %v786, %v778
    %v987 = vpack.c.b16 %v787, %v779
    %v988 = vpack.c.b16 %v788, %v780
    %v989 = vpack.c.b16 %v789, %v781
    %v990 = vpack.c.b16 %v798, %v790
    %v991 = vpack.c.b16 %v799, %v791
    %v992 = vpack.c.b16 %v800, %v792
    %v993 = vpack.c.b16 %v801, %v793
    %v994 = vpack.c.b16 %v802, %v794
    %v995 = vpack.c.b16 %v803, %v795
    %v996 = vpack.c.b16 %v804, %v796
    %v997 = vpack.c.b16 %v805, %v797
    %v998 = vpack.c.b16 %v814, %v806
    %v999 = vpack.c.b16 %v815, %v807
    %v1000 = vpack.c.b16 %v816, %v808
    %v1001 = vpack.c.b16 %v817, %v809
    %v1002 = vpack.c.b16 %v818, %v810
    %v1003 = vpack.c.b16 %v819, %v811
    %v1004 = vpack.c.b16 %v820, %v812
    %v1005 = vpack.c.b16 %v821, %v813
    %v1006 = vpack.c.b16 %v830, %v822
    %v1007 = vpack.c.b16 %v831, %v823
    %v1008 = vpack.c.b16 %v832, %v824
    %v1009 = vpack.c.b16 %v833, %v825
    %v1010 = vpack.c.b16 %v834, %v826
    %v1011 = vpack.c.b16 %v835, %v827
    %v1012 = vpack.c.b16 %v836, %v828
    %v1013 = vpack.c.b16 %v837, %v829
    %v1014 = vpack.c.b16 %v846, %v838
    %v1015 = vpack.c.b16 %v847, %v839
    %v1016 = vpack.c.b16 %v848, %v840
    %v1017 = vpack.c.b16 %v849, %v841
    %v1018 = vpack.c.b16 %v850, %v842
    %v1019 = vpack.c.b16 %v851, %v843
    %v1020 = vpack.c.b16 %v852, %v844
    %v1021 = vpack.c.b16 %v853, %v845
    %v1022 = vpack.c.b16 %v862, %v854
    %v1023 = vpack.c.b16 %v863, %v855
    %v1024 = vpack.c.b16 %v864, %v856
    %v1025 = vpack.c.b16 %v865, %v857
    %v1026 = vpack.c.b16 %v866, %v858
    %v1027 = vpack.c.b16 %v867, %v859
    %v1028 = vpack.c.b16 %v868, %v860
    %v1029 = vpack.c.b16 %v869, %v861
    %v1030 = vpack.c.b16 %v878, %v870
    %v1031 = vpack.c.b16 %v879, %v871
    %v1032 = vpack.c.b16 %v880, %v872
    %v1033 = vpack.c.b16 %v881, %v873
    %v1034 = vpack.c.b16 %v882, %v874
    %v1035 = vpack.c.b16 %v883, %v875
    %v1036 = vpack.c.b16 %v884, %v876
    %v1037 = vpack.c.b16 %v885, %v877
    %v1038 = vpack.c.b16 %v894, %v886
    %v1039 = vpack.c.b16 %v895, %v887
    %v1040 = vpack.c.b16 %v896, %v888
    %v1041 = vpack.c.b16 %v897, %v889
    %v1042 = vpack.c.b16 %v898, %v890
    %v1043 = vpack.c.b16 %v899, %v891
    %v1044 = vpack.c.b16 %v900, %v892
    %v1045 = vpack.c.b16 %v901, %v893
    %v1046 = vpack.c.b16 %v910, %v902
    %v1047 = vpack.c.b16 %v911, %v903
    %v1048 = vpack.c.b16 %v912, %v904
    %v1049 = vpack.c.b16 %v913, %v905
    %v1050 = vpack.c.b16 %v914, %v906
    %v1051 = vpack.c.b16 %v915, %v907
    %v1052 = vpack.c.b16 %v916, %v908
    %v1053 = vpack.c.b16 %v917, %v909
    %v1054 = vpack.c.b16 %v926, %v918
    %v1055 = vpack.c.b16 %v927, %v919
    %v1056 = vpack.c.b16 %v928, %v920
    %v1057 = vpack.c.b16 %v929, %v921
    %v1058 = vpack.c.b16 %v930, %v922
    %v1059 = vpack.c.b16 %v931, %v923
    %v1060 = vpack.c.b16 %v932, %v924
    %v1061 = vpack.c.b16 %v933, %v925
    %1190 = vmatpush.bf16.msra.mxu0 %v990
    %1191 = vmatpush.bf16.msra.mxu0 %v982
    %1192 = vmatpush.bf16.msra.mxu0 %v974
    %1193 = vmatpush.bf16.msra.mxu0 %v966
    %1194 = vmatpush.bf16.msra.mxu0 %v958
    %1195 = vmatpush.bf16.msra.mxu0 %v950
    %1196 = vmatpush.bf16.msra.mxu0 %v942
    %1197 = vmatpush.bf16.msra.mxu0 %v934
    %1198 = vmatmul.bf16.gmra.mxu0 %v548
    %v1199 = vpop.f32.mrf.mxu0
    %v1200 = vadd.f32 0.0, %v1199
    %v1201 = vpop.f32.mrf.mxu0
    %1202 = vdwg.mxu0
    %1203 = vmatpush.bf16.msra.mxu0 %v1054
    %1204 = vmatpush.bf16.msra.mxu0 %v1046
    %1205 = vmatpush.bf16.msra.mxu0 %v1038
    %1206 = vmatpush.bf16.msra.mxu0 %v1030
    %1207 = vmatpush.bf16.msra.mxu0 %v1022
    %1208 = vmatpush.bf16.msra.mxu0 %v1014
    %1209 = vmatpush.bf16.msra.mxu0 %v1006
    %1210 = vmatpush.bf16.msra.mxu0 %v998
    %1211 = vmatmul.bf16.gmra.mxu0 %v549
    %v1212 = vpop.f32.mrf.mxu0
    %v1213 = vadd.f32 %v1200, %v1212
    %v1214 = vpop.f32.mrf.mxu0
    %1215 = vdwg.mxu0
    %1216 = vmatpush.bf16.msra.mxu0 %v991
    %1217 = vmatpush.bf16.msra.mxu0 %v983
    %1218 = vmatpush.bf16.msra.mxu0 %v975
    %1219 = vmatpush.bf16.msra.mxu0 %v967
    %1220 = vmatpush.bf16.msra.mxu0 %v959
    %1221 = vmatpush.bf16.msra.mxu0 %v951
    %1222 = vmatpush.bf16.msra.mxu0 %v943
    %1223 = vmatpush.bf16.msra.mxu0 %v935
    %1224 = vmatmul.bf16.gmra.mxu0 %v548
    %v1225 = vpop.f32.mrf.mxu0
    %v1226 = vadd.f32 0.0, %v1225
    %v1227 = vpop.f32.mrf.mxu0
    %1228 = vdwg.mxu0
    %1229 = vmatpush.bf16.msra.mxu0 %v1055
    %1230 = vmatpush.bf16.msra.mxu0 %v1047
    %1231 = vmatpush.bf16.msra.mxu0 %v1039
    %1232 = vmatpush.bf16.msra.mxu0 %v1031
    %1233 = vmatpush.bf16.msra.mxu0 %v1023
    %1234 = vmatpush.bf16.msra.mxu0 %v1015
    %1235 = vmatpush.bf16.msra.mxu0 %v1007
    %1236 = vmatpush.bf16.msra.mxu0 %v999
    %1237 = vmatmul.bf16.gmra.mxu0 %v549
    %v1238 = vpop.f32.mrf.mxu0
    %v1239 = vadd.f32 %v1226, %v1238
    %v1240 = vpop.f32.mrf.mxu0
    %1241 = vdwg.mxu0
    %1242 = vmatpush.bf16.msra.mxu0 %v992
    %1243 = vmatpush.bf16.msra.mxu0 %v984
    %1244 = vmatpush.bf16.msra.mxu0 %v976
    %1245 = vmatpush.bf16.msra.mxu0 %v968
    %1246 = vmatpush.bf16.msra.mxu0 %v960
    %1247 = vmatpush.bf16.msra.mxu0 %v952
    %1248 = vmatpush.bf16.msra.mxu0 %v944
    %1249 = vmatpush.bf16.msra.mxu0 %v936
    %1250 = vmatmul.bf16.gmra.mxu0 %v548
    %v1251 = vpop.f32.mrf.mxu0
    %v1252 = vadd.f32 0.0, %v1251
    %v1253 = vpop.f32.mrf.mxu0
    %1254 = vdwg.mxu0
    %1255 = vmatpush.bf16.msra.mxu0 %v1056
    %1256 = vmatpush.bf16.msra.mxu0 %v1048
    %1257 = vmatpush.bf16.msra.mxu0 %v1040
    %1258 = vmatpush.bf16.msra.mxu0 %v1032
    %1259 = vmatpush.bf16.msra.mxu0 %v1024
    %1260 = vmatpush.bf16.msra.mxu0 %v1016
    %1261 = vmatpush.bf16.msra.mxu0 %v1008
    %1262 = vmatpush.bf16.msra.mxu0 %v1000
    %1263 = vmatmul.bf16.gmra.mxu0 %v549
    %v1264 = vpop.f32.mrf.mxu0
    %v1265 = vadd.f32 %v1252, %v1264
    %v1266 = vpop.f32.mrf.mxu0
    %1267 = vdwg.mxu0
    %1268 = vmatpush.bf16.msra.mxu0 %v993
    %1269 = vmatpush.bf16.msra.mxu0 %v985
    %1270 = vmatpush.bf16.msra.mxu0 %v977
    %1271 = vmatpush.bf16.msra.mxu0 %v969
    %1272 = vmatpush.bf16.msra.mxu0 %v961
    %1273 = vmatpush.bf16.msra.mxu0 %v953
    %1274 = vmatpush.bf16.msra.mxu0 %v945
    %1275 = vmatpush.bf16.msra.mxu0 %v937
    %1276 = vmatmul.bf16.gmra.mxu0 %v548
    %v1277 = vpop.f32.mrf.mxu0
    %v1278 = vadd.f32 0.0, %v1277
    %v1279 = vpop.f32.mrf.mxu0
    %1280 = vdwg.mxu0
    %1281 = vmatpush.bf16.msra.mxu0 %v1057
    %1282 = vmatpush.bf16.msra.mxu0 %v1049
    %1283 = vmatpush.bf16.msra.mxu0 %v1041
    %1284 = vmatpush.bf16.msra.mxu0 %v1033
    %1285 = vmatpush.bf16.msra.mxu0 %v1025
    %1286 = vmatpush.bf16.msra.mxu0 %v1017
    %1287 = vmatpush.bf16.msra.mxu0 %v1009
    %1288 = vmatpush.bf16.msra.mxu0 %v1001
    %1289 = vmatmul.bf16.gmra.mxu0 %v549
    %v1290 = vpop.f32.mrf.mxu0
    %v1291 = vadd.f32 %v1278, %v1290
    %v1292 = vpop.f32.mrf.mxu0
    %1293 = vdwg.mxu0
    %1294 = vmatpush.bf16.msra.mxu0 %v994
    %1295 = vmatpush.bf16.msra.mxu0 %v986
    %1296 = vmatpush.bf16.msra.mxu0 %v978
    %1297 = vmatpush.bf16.msra.mxu0 %v970
    %1298 = vmatpush.bf16.msra.mxu0 %v962
    %1299 = vmatpush.bf16.msra.mxu0 %v954
    %1300 = vmatpush.bf16.msra.mxu0 %v946
    %1301 = vmatpush.bf16.msra.mxu0 %v938
    %1302 = vmatmul.bf16.gmra.mxu0 %v548
    %v1303 = vpop.f32.mrf.mxu0
    %v1304 = vadd.f32 0.0, %v1303
    %v1305 = vpop.f32.mrf.mxu0
    %1306 = vdwg.mxu0
    %1307 = vmatpush.bf16.msra.mxu0 %v1058
    %1308 = vmatpush.bf16.msra.mxu0 %v1050
    %1309 = vmatpush.bf16.msra.mxu0 %v1042
    %1310 = vmatpush.bf16.msra.mxu0 %v1034
    %1311 = vmatpush.bf16.msra.mxu0 %v1026
    %1312 = vmatpush.bf16.msra.mxu0 %v1018
    %1313 = vmatpush.bf16.msra.mxu0 %v1010
    %1314 = vmatpush.bf16.msra.mxu0 %v1002
    %1315 = vmatmul.bf16.gmra.mxu0 %v549
    %v1316 = vpop.f32.mrf.mxu0
    %v1317 = vadd.f32 %v1304, %v1316
    %v1318 = vpop.f32.mrf.mxu0
    %1319 = vdwg.mxu0
    %1320 = vmatpush.bf16.msra.mxu0 %v995
    %1321 = vmatpush.bf16.msra.mxu0 %v987
    %1322 = vmatpush.bf16.msra.mxu0 %v979
    %1323 = vmatpush.bf16.msra.mxu0 %v971
    %1324 = vmatpush.bf16.msra.mxu0 %v963
    %1325 = vmatpush.bf16.msra.mxu0 %v955
    %1326 = vmatpush.bf16.msra.mxu0 %v947
    %1327 = vmatpush.bf16.msra.mxu0 %v939
    %1328 = vmatmul.bf16.gmra.mxu0 %v548
    %v1329 = vpop.f32.mrf.mxu0
    %v1330 = vadd.f32 0.0, %v1329
    %v1331 = vpop.f32.mrf.mxu0
    %1332 = vdwg.mxu0
    %1333 = vmatpush.bf16.msra.mxu0 %v1059
    %1334 = vmatpush.bf16.msra.mxu0 %v1051
    %1335 = vmatpush.bf16.msra.mxu0 %v1043
    %1336 = vmatpush.bf16.msra.mxu0 %v1035
    %1337 = vmatpush.bf16.msra.mxu0 %v1027
    %1338 = vmatpush.bf16.msra.mxu0 %v1019
    %1339 = vmatpush.bf16.msra.mxu0 %v1011
    %1340 = vmatpush.bf16.msra.mxu0 %v1003
    %1341 = vmatmul.bf16.gmra.mxu0 %v549
    %v1342 = vpop.f32.mrf.mxu0
    %v1343 = vadd.f32 %v1330, %v1342
    %v1344 = vpop.f32.mrf.mxu0
    %1345 = vdwg.mxu0
    %1346 = vmatpush.bf16.msra.mxu0 %v996
    %1347 = vmatpush.bf16.msra.mxu0 %v988
    %1348 = vmatpush.bf16.msra.mxu0 %v980
    %1349 = vmatpush.bf16.msra.mxu0 %v972
    %1350 = vmatpush.bf16.msra.mxu0 %v964
    %1351 = vmatpush.bf16.msra.mxu0 %v956
    %1352 = vmatpush.bf16.msra.mxu0 %v948
    %1353 = vmatpush.bf16.msra.mxu0 %v940
    %1354 = vmatmul.bf16.gmra.mxu0 %v548
    %v1355 = vpop.f32.mrf.mxu0
    %v1356 = vadd.f32 0.0, %v1355
    %v1357 = vpop.f32.mrf.mxu0
    %1358 = vdwg.mxu0
    %1359 = vmatpush.bf16.msra.mxu0 %v1060
    %1360 = vmatpush.bf16.msra.mxu0 %v1052
    %1361 = vmatpush.bf16.msra.mxu0 %v1044
    %1362 = vmatpush.bf16.msra.mxu0 %v1036
    %1363 = vmatpush.bf16.msra.mxu0 %v1028
    %1364 = vmatpush.bf16.msra.mxu0 %v1020
    %1365 = vmatpush.bf16.msra.mxu0 %v1012
    %1366 = vmatpush.bf16.msra.mxu0 %v1004
    %1367 = vmatmul.bf16.gmra.mxu0 %v549
    %v1368 = vpop.f32.mrf.mxu0
    %v1369 = vadd.f32 %v1356, %v1368
    %v1370 = vpop.f32.mrf.mxu0
    %1371 = vdwg.mxu0
    %1372 = vmatpush.bf16.msra.mxu0 %v997
    %1373 = vmatpush.bf16.msra.mxu0 %v989
    %1374 = vmatpush.bf16.msra.mxu0 %v981
    %1375 = vmatpush.bf16.msra.mxu0 %v973
    %1376 = vmatpush.bf16.msra.mxu0 %v965
    %1377 = vmatpush.bf16.msra.mxu0 %v957
    %1378 = vmatpush.bf16.msra.mxu0 %v949
    %1379 = vmatpush.bf16.msra.mxu0 %v941
    %1380 = vmatmul.bf16.gmra.mxu0 %v548
    %v1381 = vpop.f32.mrf.mxu0
    %v1382 = vadd.f32 0.0, %v1381
    %v1383 = vpop.f32.mrf.mxu0
    %1384 = vdwg.mxu0
    %1385 = vmatpush.bf16.msra.mxu0 %v1061
    %1386 = vmatpush.bf16.msra.mxu0 %v1053
    %1387 = vmatpush.bf16.msra.mxu0 %v1045
    %1388 = vmatpush.bf16.msra.mxu0 %v1037
    %1389 = vmatpush.bf16.msra.mxu0 %v1029
    %1390 = vmatpush.bf16.msra.mxu0 %v1021
    %1391 = vmatpush.bf16.msra.mxu0 %v1013
    %1392 = vmatpush.bf16.msra.mxu0 %v1005
    %1393 = vmatmul.bf16.gmra.mxu0 %v549
    %v1394 = vpop.f32.mrf.mxu0
    %v1395 = vadd.f32 %v1382, %v1394
    %v1396 = vpop.f32.mrf.mxu0
    %1397 = vdwg.mxu0
    %vm1398 = vcmp.ge.f32.partialorder %v1213, 0.0
    %vm1399 = vcmp.ge.f32.partialorder %v1239, 0.0
    %vm1400 = vcmp.ge.f32.partialorder %v1265, 0.0
    %vm1401 = vcmp.ge.f32.partialorder %v1291, 0.0
    %vm1402 = vcmp.ge.f32.partialorder %v1317, 0.0
    %vm1403 = vcmp.ge.f32.partialorder %v1343, 0.0
    %vm1404 = vcmp.ge.f32.partialorder %v1369, 0.0
    %vm1405 = vcmp.ge.f32.partialorder %v1395, 0.0
    %v1406 = vmul.f32 %v1213, 0.01
    %v1407 = vmul.f32 %v1239, 0.01
    %v1408 = vmul.f32 %v1265, 0.01
    %v1409 = vmul.f32 %v1291, 0.01
    %v1410 = vmul.f32 %v1317, 0.01
    %v1411 = vmul.f32 %v1343, 0.01
    %v1412 = vmul.f32 %v1369, 0.01
    %v1413 = vmul.f32 %v1395, 0.01
    %v1414 = vsel %vm1398, %v1213, %v1406
    %v1415 = vsel %vm1399, %v1239, %v1407
    %v1416 = vsel %vm1400, %v1265, %v1408
    %v1417 = vsel %vm1401, %v1291, %v1409
    %v1418 = vsel %vm1402, %v1317, %v1410
    %v1419 = vsel %vm1403, %v1343, %v1411
    %v1420 = vsel %vm1404, %v1369, %v1412
    %v1421 = vsel %vm1405, %v1395, %v1413
    %v1422 = vpack.c.bf16 %v1414, %v1414
    %v1423 = vpack.c.bf16 %v1415, %v1415
    %v1424 = vpack.c.bf16 %v1416, %v1416
    %v1425 = vpack.c.bf16 %v1417, %v1417
    %v1426 = vpack.c.bf16 %v1418, %v1418
    %v1427 = vpack.c.bf16 %v1419, %v1419
    %v1428 = vpack.c.bf16 %v1420, %v1420
    %v1429 = vpack.c.bf16 %v1421, %v1421
    %v1558 = vunpack.c.l.b16 %v186
    %v1559 = vunpack.c.h.b16 %v186
    %v1560 = vunpack.c.l.b16 %v187
    %v1561 = vunpack.c.h.b16 %v187
    %v1562 = vunpack.c.l.b16 %v188
    %v1563 = vunpack.c.h.b16 %v188
    %v1564 = vunpack.c.l.b16 %v189
    %v1565 = vunpack.c.h.b16 %v189
    %v1566 = vunpack.c.l.b16 %v190
    %v1567 = vunpack.c.h.b16 %v190
    %v1568 = vunpack.c.l.b16 %v191
    %v1569 = vunpack.c.h.b16 %v191
    %v1570 = vunpack.c.l.b16 %v192
    %v1571 = vunpack.c.h.b16 %v192
    %v1572 = vunpack.c.l.b16 %v193
    %v1573 = vunpack.c.h.b16 %v193
    %v1574 = vunpack.c.l.b16 %v194
    %v1575 = vunpack.c.h.b16 %v194
    %v1576 = vunpack.c.l.b16 %v195
    %v1577 = vunpack.c.h.b16 %v195
    %v1578 = vunpack.c.l.b16 %v196
    %v1579 = vunpack.c.h.b16 %v196
    %v1580 = vunpack.c.l.b16 %v197
    %v1581 = vunpack.c.h.b16 %v197
    %v1582 = vunpack.c.l.b16 %v198
    %v1583 = vunpack.c.h.b16 %v198
    %v1584 = vunpack.c.l.b16 %v199
    %v1585 = vunpack.c.h.b16 %v199
    %v1586 = vunpack.c.l.b16 %v200
    %v1587 = vunpack.c.h.b16 %v200
    %v1588 = vunpack.c.l.b16 %v201
    %v1589 = vunpack.c.h.b16 %v201
    %v1590 = vunpack.c.l.b16 %v202
    %v1591 = vunpack.c.h.b16 %v202
    %v1592 = vunpack.c.l.b16 %v203
    %v1593 = vunpack.c.h.b16 %v203
    %v1594 = vunpack.c.l.b16 %v204
    %v1595 = vunpack.c.h.b16 %v204
    %v1596 = vunpack.c.l.b16 %v205
    %v1597 = vunpack.c.h.b16 %v205
    %v1598 = vunpack.c.l.b16 %v206
    %v1599 = vunpack.c.h.b16 %v206
    %v1600 = vunpack.c.l.b16 %v207
    %v1601 = vunpack.c.h.b16 %v207
    %v1602 = vunpack.c.l.b16 %v208
    %v1603 = vunpack.c.h.b16 %v208
    %v1604 = vunpack.c.l.b16 %v209
    %v1605 = vunpack.c.h.b16 %v209
    %v1606 = vunpack.c.l.b16 %v210
    %v1607 = vunpack.c.h.b16 %v210
    %v1608 = vunpack.c.l.b16 %v211
    %v1609 = vunpack.c.h.b16 %v211
    %v1610 = vunpack.c.l.b16 %v212
    %v1611 = vunpack.c.h.b16 %v212
    %v1612 = vunpack.c.l.b16 %v213
    %v1613 = vunpack.c.h.b16 %v213
    %v1614 = vunpack.c.l.b16 %v214
    %v1615 = vunpack.c.h.b16 %v214
    %v1616 = vunpack.c.l.b16 %v215
    %v1617 = vunpack.c.h.b16 %v215
    %v1618 = vunpack.c.l.b16 %v216
    %v1619 = vunpack.c.h.b16 %v216
    %v1620 = vunpack.c.l.b16 %v217
    %v1621 = vunpack.c.h.b16 %v217
    %v1622 = vunpack.c.l.b16 %v218
    %v1623 = vunpack.c.h.b16 %v218
    %v1624 = vunpack.c.l.b16 %v219
    %v1625 = vunpack.c.h.b16 %v219
    %v1626 = vunpack.c.l.b16 %v220
    %v1627 = vunpack.c.h.b16 %v220
    %v1628 = vunpack.c.l.b16 %v221
    %v1629 = vunpack.c.h.b16 %v221
    %v1630 = vunpack.c.l.b16 %v222
    %v1631 = vunpack.c.h.b16 %v222
    %v1632 = vunpack.c.l.b16 %v223
    %v1633 = vunpack.c.h.b16 %v223
    %v1634 = vunpack.c.l.b16 %v224
    %v1635 = vunpack.c.h.b16 %v224
    %v1636 = vunpack.c.l.b16 %v225
    %v1637 = vunpack.c.h.b16 %v225
    %v1638 = vunpack.c.l.b16 %v226
    %v1639 = vunpack.c.h.b16 %v226
    %v1640 = vunpack.c.l.b16 %v227
    %v1641 = vunpack.c.h.b16 %v227
    %v1642 = vunpack.c.l.b16 %v228
    %v1643 = vunpack.c.h.b16 %v228
    %v1644 = vunpack.c.l.b16 %v229
    %v1645 = vunpack.c.h.b16 %v229
    %v1646 = vunpack.c.l.b16 %v230
    %v1647 = vunpack.c.h.b16 %v230
    %v1648 = vunpack.c.l.b16 %v231
    %v1649 = vunpack.c.h.b16 %v231
    %v1650 = vunpack.c.l.b16 %v232
    %v1651 = vunpack.c.h.b16 %v232
    %v1652 = vunpack.c.l.b16 %v233
    %v1653 = vunpack.c.h.b16 %v233
    %v1654 = vunpack.c.l.b16 %v234
    %v1655 = vunpack.c.h.b16 %v234
    %v1656 = vunpack.c.l.b16 %v235
    %v1657 = vunpack.c.h.b16 %v235
    %v1658 = vunpack.c.l.b16 %v236
    %v1659 = vunpack.c.h.b16 %v236
    %v1660 = vunpack.c.l.b16 %v237
    %v1661 = vunpack.c.h.b16 %v237
    %v1662 = vunpack.c.l.b16 %v238
    %v1663 = vunpack.c.h.b16 %v238
    %v1664 = vunpack.c.l.b16 %v239
    %v1665 = vunpack.c.h.b16 %v239
    %v1666 = vunpack.c.l.b16 %v240
    %v1667 = vunpack.c.h.b16 %v240
    %v1668 = vunpack.c.l.b16 %v241
    %v1669 = vunpack.c.h.b16 %v241
    %v1670 = vunpack.c.l.b16 %v242
    %v1671 = vunpack.c.h.b16 %v242
    %v1672 = vunpack.c.l.b16 %v243
    %v1673 = vunpack.c.h.b16 %v243
    %v1674 = vunpack.c.l.b16 %v244
    %v1675 = vunpack.c.h.b16 %v244
    %v1676 = vunpack.c.l.b16 %v245
    %v1677 = vunpack.c.h.b16 %v245
    %v1678 = vunpack.c.l.b16 %v246
    %v1679 = vunpack.c.h.b16 %v246
    %v1680 = vunpack.c.l.b16 %v247
    %v1681 = vunpack.c.h.b16 %v247
    %v1682 = vunpack.c.l.b16 %v248
    %v1683 = vunpack.c.h.b16 %v248
    %v1684 = vunpack.c.l.b16 %v249
    %v1685 = vunpack.c.h.b16 %v249
    %v1686 = vunpack.c.l.b16 %v250
    %v1687 = vunpack.c.h.b16 %v250
    %v1688 = vunpack.c.l.b16 %v251
    %v1689 = vunpack.c.h.b16 %v251
    %v1690 = vunpack.c.l.b16 %v252
    %v1691 = vunpack.c.h.b16 %v252
    %v1692 = vunpack.c.l.b16 %v253
    %v1693 = vunpack.c.h.b16 %v253
    %v1694 = vunpack.c.l.b16 %v254
    %v1695 = vunpack.c.h.b16 %v254
    %v1696 = vunpack.c.l.b16 %v255
    %v1697 = vunpack.c.h.b16 %v255
    %v1698 = vunpack.c.l.b16 %v256
    %v1699 = vunpack.c.h.b16 %v256
    %v1700 = vunpack.c.l.b16 %v257
    %v1701 = vunpack.c.h.b16 %v257
    %v1702 = vunpack.c.l.b16 %v258
    %v1703 = vunpack.c.h.b16 %v258
    %v1704 = vunpack.c.l.b16 %v259
    %v1705 = vunpack.c.h.b16 %v259
    %v1706 = vunpack.c.l.b16 %v260
    %v1707 = vunpack.c.h.b16 %v260
    %v1708 = vunpack.c.l.b16 %v261
    %v1709 = vunpack.c.h.b16 %v261
    %v1710 = vunpack.c.l.b16 %v262
    %v1711 = vunpack.c.h.b16 %v262
    %v1712 = vunpack.c.l.b16 %v263
    %v1713 = vunpack.c.h.b16 %v263
    %v1714 = vunpack.c.l.b16 %v264
    %v1715 = vunpack.c.h.b16 %v264
    %v1716 = vunpack.c.l.b16 %v265
    %v1717 = vunpack.c.h.b16 %v265
    %v1718 = vunpack.c.l.b16 %v266
    %v1719 = vunpack.c.h.b16 %v266
    %v1720 = vunpack.c.l.b16 %v267
    %v1721 = vunpack.c.h.b16 %v267
    %v1722 = vunpack.c.l.b16 %v268
    %v1723 = vunpack.c.h.b16 %v268
    %v1724 = vunpack.c.l.b16 %v269
    %v1725 = vunpack.c.h.b16 %v269
    %v1726 = vunpack.c.l.b16 %v270
    %v1727 = vunpack.c.h.b16 %v270
    %v1728 = vunpack.c.l.b16 %v271
    %v1729 = vunpack.c.h.b16 %v271
    %v1730 = vunpack.c.l.b16 %v272
    %v1731 = vunpack.c.h.b16 %v272
    %v1732 = vunpack.c.l.b16 %v273
    %v1733 = vunpack.c.h.b16 %v273
    %v1734 = vunpack.c.l.b16 %v274
    %v1735 = vunpack.c.h.b16 %v274
    %v1736 = vunpack.c.l.b16 %v275
    %v1737 = vunpack.c.h.b16 %v275
    %v1738 = vunpack.c.l.b16 %v276
    %v1739 = vunpack.c.h.b16 %v276
    %v1740 = vunpack.c.l.b16 %v277
    %v1741 = vunpack.c.h.b16 %v277
    %v1742 = vunpack.c.l.b16 %v278
    %v1743 = vunpack.c.h.b16 %v278
    %v1744 = vunpack.c.l.b16 %v279
    %v1745 = vunpack.c.h.b16 %v279
    %v1746 = vunpack.c.l.b16 %v280
    %v1747 = vunpack.c.h.b16 %v280
    %v1748 = vunpack.c.l.b16 %v281
    %v1749 = vunpack.c.h.b16 %v281
    %v1750 = vunpack.c.l.b16 %v282
    %v1751 = vunpack.c.h.b16 %v282
    %v1752 = vunpack.c.l.b16 %v283
    %v1753 = vunpack.c.h.b16 %v283
    %v1754 = vunpack.c.l.b16 %v284
    %v1755 = vunpack.c.h.b16 %v284
    %v1756 = vunpack.c.l.b16 %v285
    %v1757 = vunpack.c.h.b16 %v285
    %v1758 = vunpack.c.l.b16 %v286
    %v1759 = vunpack.c.h.b16 %v286
    %v1760 = vunpack.c.l.b16 %v287
    %v1761 = vunpack.c.h.b16 %v287
    %v1762 = vunpack.c.l.b16 %v288
    %v1763 = vunpack.c.h.b16 %v288
    %v1764 = vunpack.c.l.b16 %v289
    %v1765 = vunpack.c.h.b16 %v289
    %v1766 = vunpack.c.l.b16 %v290
    %v1767 = vunpack.c.h.b16 %v290
    %v1768 = vunpack.c.l.b16 %v291
    %v1769 = vunpack.c.h.b16 %v291
    %v1770 = vunpack.c.l.b16 %v292
    %v1771 = vunpack.c.h.b16 %v292
    %v1772 = vunpack.c.l.b16 %v293
    %v1773 = vunpack.c.h.b16 %v293
    %v1774 = vunpack.c.l.b16 %v294
    %v1775 = vunpack.c.h.b16 %v294
    %v1776 = vunpack.c.l.b16 %v295
    %v1777 = vunpack.c.h.b16 %v295
    %v1778 = vunpack.c.l.b16 %v296
    %v1779 = vunpack.c.h.b16 %v296
    %v1780 = vunpack.c.l.b16 %v297
    %v1781 = vunpack.c.h.b16 %v297
    %v1782 = vunpack.c.l.b16 %v298
    %v1783 = vunpack.c.h.b16 %v298
    %v1784 = vunpack.c.l.b16 %v299
    %v1785 = vunpack.c.h.b16 %v299
    %v1786 = vunpack.c.l.b16 %v300
    %v1787 = vunpack.c.h.b16 %v300
    %v1788 = vunpack.c.l.b16 %v301
    %v1789 = vunpack.c.h.b16 %v301
    %v1790 = vunpack.c.l.b16 %v302
    %v1791 = vunpack.c.h.b16 %v302
    %v1792 = vunpack.c.l.b16 %v303
    %v1793 = vunpack.c.h.b16 %v303
    %v1794 = vunpack.c.l.b16 %v304
    %v1795 = vunpack.c.h.b16 %v304
    %v1796 = vunpack.c.l.b16 %v305
    %v1797 = vunpack.c.h.b16 %v305
    %v1798 = vunpack.c.l.b16 %v306
    %v1799 = vunpack.c.h.b16 %v306
    %v1800 = vunpack.c.l.b16 %v307
    %v1801 = vunpack.c.h.b16 %v307
    %v1802 = vunpack.c.l.b16 %v308
    %v1803 = vunpack.c.h.b16 %v308
    %v1804 = vunpack.c.l.b16 %v309
    %v1805 = vunpack.c.h.b16 %v309
    %v1806 = vunpack.c.l.b16 %v310
    %v1807 = vunpack.c.h.b16 %v310
    %v1808 = vunpack.c.l.b16 %v311
    %v1809 = vunpack.c.h.b16 %v311
    %v1810 = vunpack.c.l.b16 %v312
    %v1811 = vunpack.c.h.b16 %v312
    %v1812 = vunpack.c.l.b16 %v313
    %v1813 = vunpack.c.h.b16 %v313
    %v1814 = vpack.c.b16 %v1560, %v1558
    %v1815 = vpack.c.b16 %v1561, %v1559
    %v1816 = vpack.c.b16 %v1564, %v1562
    %v1817 = vpack.c.b16 %v1565, %v1563
    %v1818 = vpack.c.b16 %v1568, %v1566
    %v1819 = vpack.c.b16 %v1569, %v1567
    %v1820 = vpack.c.b16 %v1572, %v1570
    %v1821 = vpack.c.b16 %v1573, %v1571
    %v1822 = vpack.c.b16 %v1576, %v1574
    %v1823 = vpack.c.b16 %v1577, %v1575
    %v1824 = vpack.c.b16 %v1580, %v1578
    %v1825 = vpack.c.b16 %v1581, %v1579
    %v1826 = vpack.c.b16 %v1584, %v1582
    %v1827 = vpack.c.b16 %v1585, %v1583
    %v1828 = vpack.c.b16 %v1588, %v1586
    %v1829 = vpack.c.b16 %v1589, %v1587
    %v1830 = vpack.c.b16 %v1592, %v1590
    %v1831 = vpack.c.b16 %v1593, %v1591
    %v1832 = vpack.c.b16 %v1596, %v1594
    %v1833 = vpack.c.b16 %v1597, %v1595
    %v1834 = vpack.c.b16 %v1600, %v1598
    %v1835 = vpack.c.b16 %v1601, %v1599
    %v1836 = vpack.c.b16 %v1604, %v1602
    %v1837 = vpack.c.b16 %v1605, %v1603
    %v1838 = vpack.c.b16 %v1608, %v1606
    %v1839 = vpack.c.b16 %v1609, %v1607
    %v1840 = vpack.c.b16 %v1612, %v1610
    %v1841 = vpack.c.b16 %v1613, %v1611
    %v1842 = vpack.c.b16 %v1616, %v1614
    %v1843 = vpack.c.b16 %v1617, %v1615
    %v1844 = vpack.c.b16 %v1620, %v1618
    %v1845 = vpack.c.b16 %v1621, %v1619
    %v1846 = vpack.c.b16 %v1624, %v1622
    %v1847 = vpack.c.b16 %v1625, %v1623
    %v1848 = vpack.c.b16 %v1628, %v1626
    %v1849 = vpack.c.b16 %v1629, %v1627
    %v1850 = vpack.c.b16 %v1632, %v1630
    %v1851 = vpack.c.b16 %v1633, %v1631
    %v1852 = vpack.c.b16 %v1636, %v1634
    %v1853 = vpack.c.b16 %v1637, %v1635
    %v1854 = vpack.c.b16 %v1640, %v1638
    %v1855 = vpack.c.b16 %v1641, %v1639
    %v1856 = vpack.c.b16 %v1644, %v1642
    %v1857 = vpack.c.b16 %v1645, %v1643
    %v1858 = vpack.c.b16 %v1648, %v1646
    %v1859 = vpack.c.b16 %v1649, %v1647
    %v1860 = vpack.c.b16 %v1652, %v1650
    %v1861 = vpack.c.b16 %v1653, %v1651
    %v1862 = vpack.c.b16 %v1656, %v1654
    %v1863 = vpack.c.b16 %v1657, %v1655
    %v1864 = vpack.c.b16 %v1660, %v1658
    %v1865 = vpack.c.b16 %v1661, %v1659
    %v1866 = vpack.c.b16 %v1664, %v1662
    %v1867 = vpack.c.b16 %v1665, %v1663
    %v1868 = vpack.c.b16 %v1668, %v1666
    %v1869 = vpack.c.b16 %v1669, %v1667
    %v1870 = vpack.c.b16 %v1672, %v1670
    %v1871 = vpack.c.b16 %v1673, %v1671
    %v1872 = vpack.c.b16 %v1676, %v1674
    %v1873 = vpack.c.b16 %v1677, %v1675
    %v1874 = vpack.c.b16 %v1680, %v1678
    %v1875 = vpack.c.b16 %v1681, %v1679
    %v1876 = vpack.c.b16 %v1684, %v1682
    %v1877 = vpack.c.b16 %v1685, %v1683
    %v1878 = vpack.c.b16 %v1688, %v1686
    %v1879 = vpack.c.b16 %v1689, %v1687
    %v1880 = vpack.c.b16 %v1692, %v1690
    %v1881 = vpack.c.b16 %v1693, %v1691
    %v1882 = vpack.c.b16 %v1696, %v1694
    %v1883 = vpack.c.b16 %v1697, %v1695
    %v1884 = vpack.c.b16 %v1700, %v1698
    %v1885 = vpack.c.b16 %v1701, %v1699
    %v1886 = vpack.c.b16 %v1704, %v1702
    %v1887 = vpack.c.b16 %v1705, %v1703
    %v1888 = vpack.c.b16 %v1708, %v1706
    %v1889 = vpack.c.b16 %v1709, %v1707
    %v1890 = vpack.c.b16 %v1712, %v1710
    %v1891 = vpack.c.b16 %v1713, %v1711
    %v1892 = vpack.c.b16 %v1716, %v1714
    %v1893 = vpack.c.b16 %v1717, %v1715
    %v1894 = vpack.c.b16 %v1720, %v1718
    %v1895 = vpack.c.b16 %v1721, %v1719
    %v1896 = vpack.c.b16 %v1724, %v1722
    %v1897 = vpack.c.b16 %v1725, %v1723
    %v1898 = vpack.c.b16 %v1728, %v1726
    %v1899 = vpack.c.b16 %v1729, %v1727
    %v1900 = vpack.c.b16 %v1732, %v1730
    %v1901 = vpack.c.b16 %v1733, %v1731
    %v1902 = vpack.c.b16 %v1736, %v1734
    %v1903 = vpack.c.b16 %v1737, %v1735
    %v1904 = vpack.c.b16 %v1740, %v1738
    %v1905 = vpack.c.b16 %v1741, %v1739
    %v1906 = vpack.c.b16 %v1744, %v1742
    %v1907 = vpack.c.b16 %v1745, %v1743
    %v1908 = vpack.c.b16 %v1748, %v1746
    %v1909 = vpack.c.b16 %v1749, %v1747
    %v1910 = vpack.c.b16 %v1752, %v1750
    %v1911 = vpack.c.b16 %v1753, %v1751
    %v1912 = vpack.c.b16 %v1756, %v1754
    %v1913 = vpack.c.b16 %v1757, %v1755
    %v1914 = vpack.c.b16 %v1760, %v1758
    %v1915 = vpack.c.b16 %v1761, %v1759
    %v1916 = vpack.c.b16 %v1764, %v1762
    %v1917 = vpack.c.b16 %v1765, %v1763
    %v1918 = vpack.c.b16 %v1768, %v1766
    %v1919 = vpack.c.b16 %v1769, %v1767
    %v1920 = vpack.c.b16 %v1772, %v1770
    %v1921 = vpack.c.b16 %v1773, %v1771
    %v1922 = vpack.c.b16 %v1776, %v1774
    %v1923 = vpack.c.b16 %v1777, %v1775
    %v1924 = vpack.c.b16 %v1780, %v1778
    %v1925 = vpack.c.b16 %v1781, %v1779
    %v1926 = vpack.c.b16 %v1784, %v1782
    %v1927 = vpack.c.b16 %v1785, %v1783
    %v1928 = vpack.c.b16 %v1788, %v1786
    %v1929 = vpack.c.b16 %v1789, %v1787
    %v1930 = vpack.c.b16 %v1792, %v1790
    %v1931 = vpack.c.b16 %v1793, %v1791
    %v1932 = vpack.c.b16 %v1796, %v1794
    %v1933 = vpack.c.b16 %v1797, %v1795
    %v1934 = vpack.c.b16 %v1800, %v1798
    %v1935 = vpack.c.b16 %v1801, %v1799
    %v1936 = vpack.c.b16 %v1804, %v1802
    %v1937 = vpack.c.b16 %v1805, %v1803
    %v1938 = vpack.c.b16 %v1808, %v1806
    %v1939 = vpack.c.b16 %v1809, %v1807
    %v1940 = vpack.c.b16 %v1812, %v1810
    %v1941 = vpack.c.b16 %v1813, %v1811
    %2070 = vmatpush.bf16.msra.mxu0 %v1828
    %2071 = vmatpush.bf16.msra.mxu0 %v1826
    %2072 = vmatpush.bf16.msra.mxu0 %v1824
    %2073 = vmatpush.bf16.msra.mxu0 %v1822
    %2074 = vmatpush.bf16.msra.mxu0 %v1820
    %2075 = vmatpush.bf16.msra.mxu0 %v1818
    %2076 = vmatpush.bf16.msra.mxu0 %v1816
    %2077 = vmatpush.bf16.msra.mxu0 %v1814
    %2078 = vmatmul.bf16.gmra.mxu0 %v1422
    %v2079 = vpop.f32.mrf.mxu0
    %v2080 = vadd.f32 0.0, %v2079
    %v2081 = vpop.f32.mrf.mxu0
    %2082 = vdwg.mxu0
    %2083 = vmatpush.bf16.msra.mxu0 %v1844
    %2084 = vmatpush.bf16.msra.mxu0 %v1842
    %2085 = vmatpush.bf16.msra.mxu0 %v1840
    %2086 = vmatpush.bf16.msra.mxu0 %v1838
    %2087 = vmatpush.bf16.msra.mxu0 %v1836
    %2088 = vmatpush.bf16.msra.mxu0 %v1834
    %2089 = vmatpush.bf16.msra.mxu0 %v1832
    %2090 = vmatpush.bf16.msra.mxu0 %v1830
    %2091 = vmatmul.bf16.gmra.mxu0 %v1423
    %v2092 = vpop.f32.mrf.mxu0
    %v2093 = vadd.f32 %v2080, %v2092
    %v2094 = vpop.f32.mrf.mxu0
    %2095 = vdwg.mxu0
    %2096 = vmatpush.bf16.msra.mxu0 %v1860
    %2097 = vmatpush.bf16.msra.mxu0 %v1858
    %2098 = vmatpush.bf16.msra.mxu0 %v1856
    %2099 = vmatpush.bf16.msra.mxu0 %v1854
    %2100 = vmatpush.bf16.msra.mxu0 %v1852
    %2101 = vmatpush.bf16.msra.mxu0 %v1850
    %2102 = vmatpush.bf16.msra.mxu0 %v1848
    %2103 = vmatpush.bf16.msra.mxu0 %v1846
    %2104 = vmatmul.bf16.gmra.mxu0 %v1424
    %v2105 = vpop.f32.mrf.mxu0
    %v2106 = vadd.f32 %v2093, %v2105
    %v2107 = vpop.f32.mrf.mxu0
    %2108 = vdwg.mxu0
    %2109 = vmatpush.bf16.msra.mxu0 %v1876
    %2110 = vmatpush.bf16.msra.mxu0 %v1874
    %2111 = vmatpush.bf16.msra.mxu0 %v1872
    %2112 = vmatpush.bf16.msra.mxu0 %v1870
    %2113 = vmatpush.bf16.msra.mxu0 %v1868
    %2114 = vmatpush.bf16.msra.mxu0 %v1866
    %2115 = vmatpush.bf16.msra.mxu0 %v1864
    %2116 = vmatpush.bf16.msra.mxu0 %v1862
    %2117 = vmatmul.bf16.gmra.mxu0 %v1425
    %v2118 = vpop.f32.mrf.mxu0
    %v2119 = vadd.f32 %v2106, %v2118
    %v2120 = vpop.f32.mrf.mxu0
    %2121 = vdwg.mxu0
    %2122 = vmatpush.bf16.msra.mxu0 %v1892
    %2123 = vmatpush.bf16.msra.mxu0 %v1890
    %2124 = vmatpush.bf16.msra.mxu0 %v1888
    %2125 = vmatpush.bf16.msra.mxu0 %v1886
    %2126 = vmatpush.bf16.msra.mxu0 %v1884
    %2127 = vmatpush.bf16.msra.mxu0 %v1882
    %2128 = vmatpush.bf16.msra.mxu0 %v1880
    %2129 = vmatpush.bf16.msra.mxu0 %v1878
    %2130 = vmatmul.bf16.gmra.mxu0 %v1426
    %v2131 = vpop.f32.mrf.mxu0
    %v2132 = vadd.f32 %v2119, %v2131
    %v2133 = vpop.f32.mrf.mxu0
    %2134 = vdwg.mxu0
    %2135 = vmatpush.bf16.msra.mxu0 %v1908
    %2136 = vmatpush.bf16.msra.mxu0 %v1906
    %2137 = vmatpush.bf16.msra.mxu0 %v1904
    %2138 = vmatpush.bf16.msra.mxu0 %v1902
    %2139 = vmatpush.bf16.msra.mxu0 %v1900
    %2140 = vmatpush.bf16.msra.mxu0 %v1898
    %2141 = vmatpush.bf16.msra.mxu0 %v1896
    %2142 = vmatpush.bf16.msra.mxu0 %v1894
    %2143 = vmatmul.bf16.gmra.mxu0 %v1427
    %v2144 = vpop.f32.mrf.mxu0
    %v2145 = vadd.f32 %v2132, %v2144
    %v2146 = vpop.f32.mrf.mxu0
    %2147 = vdwg.mxu0
    %2148 = vmatpush.bf16.msra.mxu0 %v1924
    %2149 = vmatpush.bf16.msra.mxu0 %v1922
    %2150 = vmatpush.bf16.msra.mxu0 %v1920
    %2151 = vmatpush.bf16.msra.mxu0 %v1918
    %2152 = vmatpush.bf16.msra.mxu0 %v1916
    %2153 = vmatpush.bf16.msra.mxu0 %v1914
    %2154 = vmatpush.bf16.msra.mxu0 %v1912
    %2155 = vmatpush.bf16.msra.mxu0 %v1910
    %2156 = vmatmul.bf16.gmra.mxu0 %v1428
    %v2157 = vpop.f32.mrf.mxu0
    %v2158 = vadd.f32 %v2145, %v2157
    %v2159 = vpop.f32.mrf.mxu0
    %2160 = vdwg.mxu0
    %2161 = vmatpush.bf16.msra.mxu0 %v1940
    %2162 = vmatpush.bf16.msra.mxu0 %v1938
    %2163 = vmatpush.bf16.msra.mxu0 %v1936
    %2164 = vmatpush.bf16.msra.mxu0 %v1934
    %2165 = vmatpush.bf16.msra.mxu0 %v1932
    %2166 = vmatpush.bf16.msra.mxu0 %v1930
    %2167 = vmatpush.bf16.msra.mxu0 %v1928
    %2168 = vmatpush.bf16.msra.mxu0 %v1926
    %2169 = vmatmul.bf16.gmra.mxu0 %v1429
    %v2170 = vpop.f32.mrf.mxu0
    %v2171 = vadd.f32 %v2158, %v2170
    %v2172 = vpop.f32.mrf.mxu0
    %2173 = vdwg.mxu0
    %2174 = vmatpush.bf16.msra.mxu0 %v1829
    %2175 = vmatpush.bf16.msra.mxu0 %v1827
    %2176 = vmatpush.bf16.msra.mxu0 %v1825
    %2177 = vmatpush.bf16.msra.mxu0 %v1823
    %2178 = vmatpush.bf16.msra.mxu0 %v1821
    %2179 = vmatpush.bf16.msra.mxu0 %v1819
    %2180 = vmatpush.bf16.msra.mxu0 %v1817
    %2181 = vmatpush.bf16.msra.mxu0 %v1815
    %2182 = vmatmul.bf16.gmra.mxu0 %v1422
    %v2183 = vpop.f32.mrf.mxu0
    %v2184 = vadd.f32 0.0, %v2183
    %v2185 = vpop.f32.mrf.mxu0
    %2186 = vdwg.mxu0
    %2187 = vmatpush.bf16.msra.mxu0 %v1845
    %2188 = vmatpush.bf16.msra.mxu0 %v1843
    %2189 = vmatpush.bf16.msra.mxu0 %v1841
    %2190 = vmatpush.bf16.msra.mxu0 %v1839
    %2191 = vmatpush.bf16.msra.mxu0 %v1837
    %2192 = vmatpush.bf16.msra.mxu0 %v1835
    %2193 = vmatpush.bf16.msra.mxu0 %v1833
    %2194 = vmatpush.bf16.msra.mxu0 %v1831
    %2195 = vmatmul.bf16.gmra.mxu0 %v1423
    %v2196 = vpop.f32.mrf.mxu0
    %v2197 = vadd.f32 %v2184, %v2196
    %v2198 = vpop.f32.mrf.mxu0
    %2199 = vdwg.mxu0
    %2200 = vmatpush.bf16.msra.mxu0 %v1861
    %2201 = vmatpush.bf16.msra.mxu0 %v1859
    %2202 = vmatpush.bf16.msra.mxu0 %v1857
    %2203 = vmatpush.bf16.msra.mxu0 %v1855
    %2204 = vmatpush.bf16.msra.mxu0 %v1853
    %2205 = vmatpush.bf16.msra.mxu0 %v1851
    %2206 = vmatpush.bf16.msra.mxu0 %v1849
    %2207 = vmatpush.bf16.msra.mxu0 %v1847
    %2208 = vmatmul.bf16.gmra.mxu0 %v1424
    %v2209 = vpop.f32.mrf.mxu0
    %v2210 = vadd.f32 %v2197, %v2209
    %v2211 = vpop.f32.mrf.mxu0
    %2212 = vdwg.mxu0
    %2213 = vmatpush.bf16.msra.mxu0 %v1877
    %2214 = vmatpush.bf16.msra.mxu0 %v1875
    %2215 = vmatpush.bf16.msra.mxu0 %v1873
    %2216 = vmatpush.bf16.msra.mxu0 %v1871
    %2217 = vmatpush.bf16.msra.mxu0 %v1869
    %2218 = vmatpush.bf16.msra.mxu0 %v1867
    %2219 = vmatpush.bf16.msra.mxu0 %v1865
    %2220 = vmatpush.bf16.msra.mxu0 %v1863
    %2221 = vmatmul.bf16.gmra.mxu0 %v1425
    %v2222 = vpop.f32.mrf.mxu0
    %v2223 = vadd.f32 %v2210, %v2222
    %v2224 = vpop.f32.mrf.mxu0
    %2225 = vdwg.mxu0
    %2226 = vmatpush.bf16.msra.mxu0 %v1893
    %2227 = vmatpush.bf16.msra.mxu0 %v1891
    %2228 = vmatpush.bf16.msra.mxu0 %v1889
    %2229 = vmatpush.bf16.msra.mxu0 %v1887
    %2230 = vmatpush.bf16.msra.mxu0 %v1885
    %2231 = vmatpush.bf16.msra.mxu0 %v1883
    %2232 = vmatpush.bf16.msra.mxu0 %v1881
    %2233 = vmatpush.bf16.msra.mxu0 %v1879
    %2234 = vmatmul.bf16.gmra.mxu0 %v1426
    %v2235 = vpop.f32.mrf.mxu0
    %v2236 = vadd.f32 %v2223, %v2235
    %v2237 = vpop.f32.mrf.mxu0
    %2238 = vdwg.mxu0
    %2239 = vmatpush.bf16.msra.mxu0 %v1909
    %2240 = vmatpush.bf16.msra.mxu0 %v1907
    %2241 = vmatpush.bf16.msra.mxu0 %v1905
    %2242 = vmatpush.bf16.msra.mxu0 %v1903
    %2243 = vmatpush.bf16.msra.mxu0 %v1901
    %2244 = vmatpush.bf16.msra.mxu0 %v1899
    %2245 = vmatpush.bf16.msra.mxu0 %v1897
    %2246 = vmatpush.bf16.msra.mxu0 %v1895
    %2247 = vmatmul.bf16.gmra.mxu0 %v1427
    %v2248 = vpop.f32.mrf.mxu0
    %v2249 = vadd.f32 %v2236, %v2248
    %v2250 = vpop.f32.mrf.mxu0
    %2251 = vdwg.mxu0
    %2252 = vmatpush.bf16.msra.mxu0 %v1925
    %2253 = vmatpush.bf16.msra.mxu0 %v1923
    %2254 = vmatpush.bf16.msra.mxu0 %v1921
    %2255 = vmatpush.bf16.msra.mxu0 %v1919
    %2256 = vmatpush.bf16.msra.mxu0 %v1917
    %2257 = vmatpush.bf16.msra.mxu0 %v1915
    %2258 = vmatpush.bf16.msra.mxu0 %v1913
    %2259 = vmatpush.bf16.msra.mxu0 %v1911
    %2260 = vmatmul.bf16.gmra.mxu0 %v1428
    %v2261 = vpop.f32.mrf.mxu0
    %v2262 = vadd.f32 %v2249, %v2261
    %v2263 = vpop.f32.mrf.mxu0
    %2264 = vdwg.mxu0
    %2265 = vmatpush.bf16.msra.mxu0 %v1941
    %2266 = vmatpush.bf16.msra.mxu0 %v1939
    %2267 = vmatpush.bf16.msra.mxu0 %v1937
    %2268 = vmatpush.bf16.msra.mxu0 %v1935
    %2269 = vmatpush.bf16.msra.mxu0 %v1933
    %2270 = vmatpush.bf16.msra.mxu0 %v1931
    %2271 = vmatpush.bf16.msra.mxu0 %v1929
    %2272 = vmatpush.bf16.msra.mxu0 %v1927
    %2273 = vmatmul.bf16.gmra.mxu0 %v1429
    %v2274 = vpop.f32.mrf.mxu0
    %v2275 = vadd.f32 %v2262, %v2274
    %v2276 = vpop.f32.mrf.mxu0
    %2277 = vdwg.mxu0
    %s2278 = scalar_lea.vmem %s5, 8
    %v2279 = vld [vmem:[%s2278] sm:$0xff]
    %s2280 = scalar_lea.vmem %s6, 8
    %v2281 = vld [vmem:[%s2280] sm:$0xff]
    %2282 = vrot.lane.b32.xlu0 %v2171, 17
    %v2283 = vpop.permute.xlu0 %2282
    %2284 = vrot.lane.b32.xlu0 %v2275, 17
    %v2285 = vpop.permute.xlu0 %2284
    %v2286 = vsel %vm351, %v2283, %v2285
    %v2287 = vsel %vm351, %v2285, %v2283
    %v2288 = vmul.f32 %v2287, %v315
    %v2289 = vmul.f32 %v2286, %v316
    %2290 = vrot.lane.b32.xlu0 %v2171, 16
    %v2291 = vpop.permute.xlu0 %2290
    %2292 = vrot.lane.b32.xlu0 %v2275, 16
    %v2293 = vpop.permute.xlu0 %2292
    %v2294 = vsel %vm360, %v2291, %v2293
    %v2295 = vsel %vm360, %v2293, %v2291
    %v2296 = vmul.f32 %v2295, %v318
    %v2297 = vmul.f32 %v2294, %v319
    %2298 = vrot.lane.b32.xlu0 %v2171, 15
    %v2299 = vpop.permute.xlu0 %2298
    %2300 = vrot.lane.b32.xlu0 %v2275, 15
    %v2301 = vpop.permute.xlu0 %2300
    %v2302 = vsel %vm369, %v2299, %v2301
    %v2303 = vsel %vm369, %v2301, %v2299
    %v2304 = vmul.f32 %v2303, %v321
    %v2305 = vmul.f32 %v2302, %v322
    %2306 = vrot.lane.b32.xlu0 %v2171, 1
    %v2307 = vpop.permute.xlu0 %2306
    %2308 = vrot.lane.b32.xlu0 %v2275, 1
    %v2309 = vpop.permute.xlu0 %2308
    %v2310 = vsel %vm378, %v2307, %v2309
    %v2311 = vsel %vm378, %v2309, %v2307
    %v2312 = vmul.f32 %v2311, %v324
    %v2313 = vmul.f32 %v2310, %v325
    %v2314 = vmul.f32 %v2171, %v327
    %v2315 = vmul.f32 %v2275, %v328
    %2316 = vrot.lane.b32.xlu0 %v2171, 127
    %v2317 = vpop.permute.xlu0 %2316
    %2318 = vrot.lane.b32.xlu0 %v2275, 127
    %v2319 = vpop.permute.xlu0 %2318
    %v2320 = vsel %vm389, %v2317, %v2319
    %v2321 = vsel %vm389, %v2319, %v2317
    %v2322 = vmul.f32 %v2320, %v330
    %v2323 = vmul.f32 %v2321, %v331
    %2324 = vrot.lane.b32.xlu0 %v2171, 113
    %v2325 = vpop.permute.xlu0 %2324
    %2326 = vrot.lane.b32.xlu0 %v2275, 113
    %v2327 = vpop.permute.xlu0 %2326
    %v2328 = vsel %vm398, %v2325, %v2327
    %v2329 = vsel %vm398, %v2327, %v2325
    %v2330 = vmul.f32 %v2328, %v333
    %v2331 = vmul.f32 %v2329, %v334
    %2332 = vrot.lane.b32.xlu0 %v2171, 112
    %v2333 = vpop.permute.xlu0 %2332
    %2334 = vrot.lane.b32.xlu0 %v2275, 112
    %v2335 = vpop.permute.xlu0 %2334
    %v2336 = vsel %vm407, %v2333, %v2335
    %v2337 = vsel %vm407, %v2335, %v2333
    %v2338 = vmul.f32 %v2336, %v336
    %v2339 = vmul.f32 %v2337, %v337
    %2340 = vrot.lane.b32.xlu0 %v2171, 111
    %v2341 = vpop.permute.xlu0 %2340
    %2342 = vrot.lane.b32.xlu0 %v2275, 111
    %v2343 = vpop.permute.xlu0 %2342
    %v2344 = vsel %vm416, %v2341, %v2343
    %v2345 = vsel %vm416, %v2343, %v2341
    %v2346 = vmul.f32 %v2344, %v339
    %v2347 = vmul.f32 %v2345, %v340
    %2349 = vset.pattern.permute.xlu0 0
    %2350 = vperm.xlu0 %2349, %v2281
    %v2351 = vpop.permute.xlu0 %2350
    %v2354 = vsel %vm426, %v2279, 0
    %2356 = vmatpush.msra.mxu0 0.0
    %2357 = vmatpush.msra.mxu0 0.0
    %2358 = vmatpush.msra.mxu0 0.0
    %2359 = vmatpush.msra.mxu0 0.0
    %2360 = vmatpush.msra.mxu0 0.0
    %2361 = vmatpush.msra.mxu0 0.0
    %2362 = vmatpush.msra.mxu0 0.0
    %2363 = vmatpush.msra.mxu0 %v2346
    %2364 = vmatpush.msra.mxu0 %v2338
    %2365 = vmatpush.msra.mxu0 %v2330
    %2366 = vmatpush.msra.mxu0 %v2322
    %2367 = vmatpush.msra.mxu0 %v2314
    %2368 = vmatpush.msra.mxu0 %v2312
    %2369 = vmatpush.msra.mxu0 %v2304
    %2370 = vmatpush.msra.mxu0 %v2296
    %2371 = vmatpush.msra.mxu0 %v2288
    %2372 = vmatmul.f32.gmra.mxu0 %v2354
    %v2373 = vpop.f32.mrf.mxu0
    %v2374 = vadd.f32 %v2351, %v2373
    %2375 = vdwg.mxu0
    %2376 = vmatpush.msra.mxu0 0.0
    %2377 = vmatpush.msra.mxu0 0.0
    %2378 = vmatpush.msra.mxu0 0.0
    %2379 = vmatpush.msra.mxu0 0.0
    %2380 = vmatpush.msra.mxu0 0.0
    %2381 = vmatpush.msra.mxu0 0.0
    %2382 = vmatpush.msra.mxu0 0.0
    %2383 = vmatpush.msra.mxu0 %v2347
    %2384 = vmatpush.msra.mxu0 %v2339
    %2385 = vmatpush.msra.mxu0 %v2331
    %2386 = vmatpush.msra.mxu0 %v2323
    %2387 = vmatpush.msra.mxu0 %v2315
    %2388 = vmatpush.msra.mxu0 %v2313
    %2389 = vmatpush.msra.mxu0 %v2305
    %2390 = vmatpush.msra.mxu0 %v2297
    %2391 = vmatpush.msra.mxu0 %v2289
    %2392 = vmatmul.f32.gmra.mxu0 %v2354
    %v2393 = vpop.f32.mrf.mxu0
    %v2394 = vadd.f32 %v2351, %v2393
    %2395 = vdwg.mxu0
    %v2396 = vadd.f32 %v2374, %v2394
    %2397 = vadd.xlane.f32.xlu0 %v2396
    %v2398 = vpop.xlane.xlu0 %2397
    %v2399 = vmul.f32 %v2374, %v2374
    %v2400 = vmul.f32 %v2394, %v2394
    %v2401 = vadd.f32 %v2399, %v2400
    %2402 = vadd.xlane.f32.xlu0 %v2401
    %v2403 = vpop.xlane.xlu0 %2402
    %v2404 = vsel %vm478, %v2398, %v2403
    %2405 = vmatpush.msra.mxu0 0.0
    %2406 = vmatpush.msra.mxu0 0.0
    %2407 = vmatpush.msra.mxu0 0.0
    %2408 = vmatpush.msra.mxu0 0.0
    %2409 = vmatpush.msra.mxu0 0.0
    %2410 = vmatpush.msra.mxu0 0.0
    %2411 = vmatpush.msra.mxu0 0.0
    %2412 = vmatpush.msra.mxu0 0.0
    %2413 = vmatpush.msra.mxu0 0.0
    %2414 = vmatpush.msra.mxu0 0.0
    %2415 = vmatpush.msra.mxu0 0.0
    %2416 = vmatpush.msra.mxu0 0.0
    %2417 = vmatpush.msra.mxu0 0.0
    %2418 = vmatpush.msra.mxu0 0.0
    %2419 = vmatpush.msra.mxu0 0.0
    %2420 = vmatpush.msra.mxu0 %v2404
    %2421 = vmatmul.f32.gmra.mxu0 %v482
    %v2422 = vpop.f32.mrf.mxu0
    %v2423 = vadd.f32 0.0, %v2422
    %2424 = vdwg.mxu0
    %v2425 = vmul.f32 %v2423, %v2423
    %2427 = vrot.lane.b32.xlu0 %v2425, 1
    %v2428 = vpop.permute.xlu0 %2427
    %v2430 = vsub.f32 %v2423, %v2428
    %v2431 = vmax.f32 %v2430, 0.0
    %2433 = vset.pattern.permute.xlu0 0
    %2434 = vperm.xlu0 %2433, %v2423
    %v2435 = vpop.permute.xlu0 %2434
    %v2437 = vsub.f32 %v2374, %v2435
    %v2438 = vsub.f32 %v2394, %v2435
    %v2439 = vadd.f32 %v2431, 1e-05
    %v2440 = vrsqrt.pop %v2439
    %v2441 = vmul.f32 %v2440, %v2439
    %v2442 = vmul.f32 %v2441, %v2440
    %v2443 = vmul.f32 0.5, %v2442
    %v2444 = vsub.f32 1.5, %v2443
    %v2445 = vmul.f32 %v2440, %v2444
    %vm2446 = vweird.f32 %v2439
    %vm2447 = vweird.f32 %v2440
    %vm2448 = vmor %vm2446, %vm2447
    %v2449 = vsel %vm2448, %v2440, %v2445
    %2451 = vset.pattern.permute.xlu0 1
    %2452 = vperm.xlu0 %2451, %v2449
    %v2453 = vpop.permute.xlu0 %2452
    %v2455 = vmul.f32 %v2437, %v2453
    %v2456 = vmul.f32 %v2438, %v2453
    %2457 = vset.pattern.permute.xlu0 1
    %2458 = vperm.xlu0 %2457, %v2281
    %v2459 = vpop.permute.xlu0 %2458
    %v2461 = vmul.f32 %v2455, %v2459
    %v2462 = vmul.f32 %v2456, %v2459
    %2463 = vset.pattern.permute.xlu0 2
    %2464 = vperm.xlu0 %2463, %v2281
    %v2465 = vpop.permute.xlu0 %2464
    %v2467 = vadd.f32 %v2461, %v2465
    %v2468 = vadd.f32 %v2462, %v2465
    %v2469 = vadd.f32 %v341, %v2467
    %v2470 = vadd.f32 %v342, %v2468
    %s2471 = scalar_lea.vmem %s5, 16
    %v2472 = vld [vmem:[%s2471] sm:$0xff]
    %s2473 = scalar_lea.vmem %s6, 16
    %v2474 = vld [vmem:[%s2473] sm:$0xff]
    %2475 = vrot.lane.b32.xlu0 %v2469, 17
    %v2476 = vpop.permute.xlu0 %2475
    %2477 = vrot.lane.b32.xlu0 %v2470, 17
    %v2478 = vpop.permute.xlu0 %2477
    %v2479 = vsel %vm351, %v2476, %v2478
    %v2480 = vsel %vm351, %v2478, %v2476
    %v2481 = vmul.f32 %v2480, %v315
    %v2482 = vmul.f32 %v2479, %v316
    %2483 = vrot.lane.b32.xlu0 %v2469, 16
    %v2484 = vpop.permute.xlu0 %2483
    %2485 = vrot.lane.b32.xlu0 %v2470, 16
    %v2486 = vpop.permute.xlu0 %2485
    %v2487 = vsel %vm360, %v2484, %v2486
    %v2488 = vsel %vm360, %v2486, %v2484
    %v2489 = vmul.f32 %v2488, %v318
    %v2490 = vmul.f32 %v2487, %v319
    %2491 = vrot.lane.b32.xlu0 %v2469, 15
    %v2492 = vpop.permute.xlu0 %2491
    %2493 = vrot.lane.b32.xlu0 %v2470, 15
    %v2494 = vpop.permute.xlu0 %2493
    %v2495 = vsel %vm369, %v2492, %v2494
    %v2496 = vsel %vm369, %v2494, %v2492
    %v2497 = vmul.f32 %v2496, %v321
    %v2498 = vmul.f32 %v2495, %v322
    %2499 = vrot.lane.b32.xlu0 %v2469, 1
    %v2500 = vpop.permute.xlu0 %2499
    %2501 = vrot.lane.b32.xlu0 %v2470, 1
    %v2502 = vpop.permute.xlu0 %2501
    %v2503 = vsel %vm378, %v2500, %v2502
    %v2504 = vsel %vm378, %v2502, %v2500
    %v2505 = vmul.f32 %v2504, %v324
    %v2506 = vmul.f32 %v2503, %v325
    %v2507 = vmul.f32 %v2469, %v327
    %v2508 = vmul.f32 %v2470, %v328
    %2509 = vrot.lane.b32.xlu0 %v2469, 127
    %v2510 = vpop.permute.xlu0 %2509
    %2511 = vrot.lane.b32.xlu0 %v2470, 127
    %v2512 = vpop.permute.xlu0 %2511
    %v2513 = vsel %vm389, %v2510, %v2512
    %v2514 = vsel %vm389, %v2512, %v2510
    %v2515 = vmul.f32 %v2513, %v330
    %v2516 = vmul.f32 %v2514, %v331
    %2517 = vrot.lane.b32.xlu0 %v2469, 113
    %v2518 = vpop.permute.xlu0 %2517
    %2519 = vrot.lane.b32.xlu0 %v2470, 113
    %v2520 = vpop.permute.xlu0 %2519
    %v2521 = vsel %vm398, %v2518, %v2520
    %v2522 = vsel %vm398, %v2520, %v2518
    %v2523 = vmul.f32 %v2521, %v333
    %v2524 = vmul.f32 %v2522, %v334
    %2525 = vrot.lane.b32.xlu0 %v2469, 112
    %v2526 = vpop.permute.xlu0 %2525
    %2527 = vrot.lane.b32.xlu0 %v2470, 112
    %v2528 = vpop.permute.xlu0 %2527
    %v2529 = vsel %vm407, %v2526, %v2528
    %v2530 = vsel %vm407, %v2528, %v2526
    %v2531 = vmul.f32 %v2529, %v336
    %v2532 = vmul.f32 %v2530, %v337
    %2533 = vrot.lane.b32.xlu0 %v2469, 111
    %v2534 = vpop.permute.xlu0 %2533
    %2535 = vrot.lane.b32.xlu0 %v2470, 111
    %v2536 = vpop.permute.xlu0 %2535
    %v2537 = vsel %vm416, %v2534, %v2536
    %v2538 = vsel %vm416, %v2536, %v2534
    %v2539 = vmul.f32 %v2537, %v339
    %v2540 = vmul.f32 %v2538, %v340
    %2542 = vset.pattern.permute.xlu0 0
    %2543 = vperm.xlu0 %2542, %v2474
    %v2544 = vpop.permute.xlu0 %2543
    %v2547 = vsel %vm426, %v2472, 0
    %2549 = vmatpush.msra.mxu0 0.0
    %2550 = vmatpush.msra.mxu0 0.0
    %2551 = vmatpush.msra.mxu0 0.0
    %2552 = vmatpush.msra.mxu0 0.0
    %2553 = vmatpush.msra.mxu0 0.0
    %2554 = vmatpush.msra.mxu0 0.0
    %2555 = vmatpush.msra.mxu0 0.0
    %2556 = vmatpush.msra.mxu0 %v2539
    %2557 = vmatpush.msra.mxu0 %v2531
    %2558 = vmatpush.msra.mxu0 %v2523
    %2559 = vmatpush.msra.mxu0 %v2515
    %2560 = vmatpush.msra.mxu0 %v2507
    %2561 = vmatpush.msra.mxu0 %v2505
    %2562 = vmatpush.msra.mxu0 %v2497
    %2563 = vmatpush.msra.mxu0 %v2489
    %2564 = vmatpush.msra.mxu0 %v2481
    %2565 = vmatmul.f32.gmra.mxu0 %v2547
    %v2566 = vpop.f32.mrf.mxu0
    %v2567 = vadd.f32 %v2544, %v2566
    %2568 = vdwg.mxu0
    %2569 = vmatpush.msra.mxu0 0.0
    %2570 = vmatpush.msra.mxu0 0.0
    %2571 = vmatpush.msra.mxu0 0.0
    %2572 = vmatpush.msra.mxu0 0.0
    %2573 = vmatpush.msra.mxu0 0.0
    %2574 = vmatpush.msra.mxu0 0.0
    %2575 = vmatpush.msra.mxu0 0.0
    %2576 = vmatpush.msra.mxu0 %v2540
    %2577 = vmatpush.msra.mxu0 %v2532
    %2578 = vmatpush.msra.mxu0 %v2524
    %2579 = vmatpush.msra.mxu0 %v2516
    %2580 = vmatpush.msra.mxu0 %v2508
    %2581 = vmatpush.msra.mxu0 %v2506
    %2582 = vmatpush.msra.mxu0 %v2498
    %2583 = vmatpush.msra.mxu0 %v2490
    %2584 = vmatpush.msra.mxu0 %v2482
    %2585 = vmatmul.f32.gmra.mxu0 %v2547
    %v2586 = vpop.f32.mrf.mxu0
    %v2587 = vadd.f32 %v2544, %v2586
    %2588 = vdwg.mxu0
    %v2589 = vadd.f32 %v2567, %v2587
    %2590 = vadd.xlane.f32.xlu0 %v2589
    %v2591 = vpop.xlane.xlu0 %2590
    %v2592 = vmul.f32 %v2567, %v2567
    %v2593 = vmul.f32 %v2587, %v2587
    %v2594 = vadd.f32 %v2592, %v2593
    %2595 = vadd.xlane.f32.xlu0 %v2594
    %v2596 = vpop.xlane.xlu0 %2595
    %v2597 = vsel %vm478, %v2591, %v2596
    %2598 = vmatpush.msra.mxu0 0.0
    %2599 = vmatpush.msra.mxu0 0.0
    %2600 = vmatpush.msra.mxu0 0.0
    %2601 = vmatpush.msra.mxu0 0.0
    %2602 = vmatpush.msra.mxu0 0.0
    %2603 = vmatpush.msra.mxu0 0.0
    %2604 = vmatpush.msra.mxu0 0.0
    %2605 = vmatpush.msra.mxu0 0.0
    %2606 = vmatpush.msra.mxu0 0.0
    %2607 = vmatpush.msra.mxu0 0.0
    %2608 = vmatpush.msra.mxu0 0.0
    %2609 = vmatpush.msra.mxu0 0.0
    %2610 = vmatpush.msra.mxu0 0.0
    %2611 = vmatpush.msra.mxu0 0.0
    %2612 = vmatpush.msra.mxu0 0.0
    %2613 = vmatpush.msra.mxu0 %v2597
    %2614 = vmatmul.f32.gmra.mxu0 %v482
    %v2615 = vpop.f32.mrf.mxu0
    %v2616 = vadd.f32 0.0, %v2615
    %2617 = vdwg.mxu0
    %v2618 = vmul.f32 %v2616, %v2616
    %2620 = vrot.lane.b32.xlu0 %v2618, 1
    %v2621 = vpop.permute.xlu0 %2620
    %v2623 = vsub.f32 %v2616, %v2621
    %v2624 = vmax.f32 %v2623, 0.0
    %2626 = vset.pattern.permute.xlu0 0
    %2627 = vperm.xlu0 %2626, %v2616
    %v2628 = vpop.permute.xlu0 %2627
    %v2630 = vsub.f32 %v2567, %v2628
    %v2631 = vsub.f32 %v2587, %v2628
    %v2632 = vadd.f32 %v2624, 1e-05
    %v2633 = vrsqrt.pop %v2632
    %v2634 = vmul.f32 %v2633, %v2632
    %v2635 = vmul.f32 %v2634, %v2633
    %v2636 = vmul.f32 0.5, %v2635
    %v2637 = vsub.f32 1.5, %v2636
    %v2638 = vmul.f32 %v2633, %v2637
    %vm2639 = vweird.f32 %v2632
    %vm2640 = vweird.f32 %v2633
    %vm2641 = vmor %vm2639, %vm2640
    %v2642 = vsel %vm2641, %v2633, %v2638
    %2644 = vset.pattern.permute.xlu0 1
    %2645 = vperm.xlu0 %2644, %v2642
    %v2646 = vpop.permute.xlu0 %2645
    %v2648 = vmul.f32 %v2630, %v2646
    %v2649 = vmul.f32 %v2631, %v2646
    %2650 = vset.pattern.permute.xlu0 1
    %2651 = vperm.xlu0 %2650, %v2474
    %v2652 = vpop.permute.xlu0 %2651
    %v2654 = vmul.f32 %v2648, %v2652
    %v2655 = vmul.f32 %v2649, %v2652
    %2656 = vset.pattern.permute.xlu0 2
    %2657 = vperm.xlu0 %2656, %v2474
    %v2658 = vpop.permute.xlu0 %2657
    %v2660 = vadd.f32 %v2654, %v2658
    %v2661 = vadd.f32 %v2655, %v2658
    %v2662 = vpack.c.bf16 %v2660, %v2660
    %v2663 = vpack.c.bf16 %v2661, %v2661
    %2664 = vmatpush.bf16.msra.mxu0 %v990
    %2665 = vmatpush.bf16.msra.mxu0 %v982
    %2666 = vmatpush.bf16.msra.mxu0 %v974
    %2667 = vmatpush.bf16.msra.mxu0 %v966
    %2668 = vmatpush.bf16.msra.mxu0 %v958
    %2669 = vmatpush.bf16.msra.mxu0 %v950
    %2670 = vmatpush.bf16.msra.mxu0 %v942
    %2671 = vmatpush.bf16.msra.mxu0 %v934
    %2672 = vmatmul.bf16.gmra.mxu0 %v2662
    %v2673 = vpop.f32.mrf.mxu0
    %v2674 = vadd.f32 0.0, %v2673
    %v2675 = vpop.f32.mrf.mxu0
    %2676 = vdwg.mxu0
    %2677 = vmatpush.bf16.msra.mxu0 %v1054
    %2678 = vmatpush.bf16.msra.mxu0 %v1046
    %2679 = vmatpush.bf16.msra.mxu0 %v1038
    %2680 = vmatpush.bf16.msra.mxu0 %v1030
    %2681 = vmatpush.bf16.msra.mxu0 %v1022
    %2682 = vmatpush.bf16.msra.mxu0 %v1014
    %2683 = vmatpush.bf16.msra.mxu0 %v1006
    %2684 = vmatpush.bf16.msra.mxu0 %v998
    %2685 = vmatmul.bf16.gmra.mxu0 %v2663
    %v2686 = vpop.f32.mrf.mxu0
    %v2687 = vadd.f32 %v2674, %v2686
    %v2688 = vpop.f32.mrf.mxu0
    %2689 = vdwg.mxu0
    %2690 = vmatpush.bf16.msra.mxu0 %v991
    %2691 = vmatpush.bf16.msra.mxu0 %v983
    %2692 = vmatpush.bf16.msra.mxu0 %v975
    %2693 = vmatpush.bf16.msra.mxu0 %v967
    %2694 = vmatpush.bf16.msra.mxu0 %v959
    %2695 = vmatpush.bf16.msra.mxu0 %v951
    %2696 = vmatpush.bf16.msra.mxu0 %v943
    %2697 = vmatpush.bf16.msra.mxu0 %v935
    %2698 = vmatmul.bf16.gmra.mxu0 %v2662
    %v2699 = vpop.f32.mrf.mxu0
    %v2700 = vadd.f32 0.0, %v2699
    %v2701 = vpop.f32.mrf.mxu0
    %2702 = vdwg.mxu0
    %2703 = vmatpush.bf16.msra.mxu0 %v1055
    %2704 = vmatpush.bf16.msra.mxu0 %v1047
    %2705 = vmatpush.bf16.msra.mxu0 %v1039
    %2706 = vmatpush.bf16.msra.mxu0 %v1031
    %2707 = vmatpush.bf16.msra.mxu0 %v1023
    %2708 = vmatpush.bf16.msra.mxu0 %v1015
    %2709 = vmatpush.bf16.msra.mxu0 %v1007
    %2710 = vmatpush.bf16.msra.mxu0 %v999
    %2711 = vmatmul.bf16.gmra.mxu0 %v2663
    %v2712 = vpop.f32.mrf.mxu0
    %v2713 = vadd.f32 %v2700, %v2712
    %v2714 = vpop.f32.mrf.mxu0
    %2715 = vdwg.mxu0
    %2716 = vmatpush.bf16.msra.mxu0 %v992
    %2717 = vmatpush.bf16.msra.mxu0 %v984
    %2718 = vmatpush.bf16.msra.mxu0 %v976
    %2719 = vmatpush.bf16.msra.mxu0 %v968
    %2720 = vmatpush.bf16.msra.mxu0 %v960
    %2721 = vmatpush.bf16.msra.mxu0 %v952
    %2722 = vmatpush.bf16.msra.mxu0 %v944
    %2723 = vmatpush.bf16.msra.mxu0 %v936
    %2724 = vmatmul.bf16.gmra.mxu0 %v2662
    %v2725 = vpop.f32.mrf.mxu0
    %v2726 = vadd.f32 0.0, %v2725
    %v2727 = vpop.f32.mrf.mxu0
    %2728 = vdwg.mxu0
    %2729 = vmatpush.bf16.msra.mxu0 %v1056
    %2730 = vmatpush.bf16.msra.mxu0 %v1048
    %2731 = vmatpush.bf16.msra.mxu0 %v1040
    %2732 = vmatpush.bf16.msra.mxu0 %v1032
    %2733 = vmatpush.bf16.msra.mxu0 %v1024
    %2734 = vmatpush.bf16.msra.mxu0 %v1016
    %2735 = vmatpush.bf16.msra.mxu0 %v1008
    %2736 = vmatpush.bf16.msra.mxu0 %v1000
    %2737 = vmatmul.bf16.gmra.mxu0 %v2663
    %v2738 = vpop.f32.mrf.mxu0
    %v2739 = vadd.f32 %v2726, %v2738
    %v2740 = vpop.f32.mrf.mxu0
    %2741 = vdwg.mxu0
    %2742 = vmatpush.bf16.msra.mxu0 %v993
    %2743 = vmatpush.bf16.msra.mxu0 %v985
    %2744 = vmatpush.bf16.msra.mxu0 %v977
    %2745 = vmatpush.bf16.msra.mxu0 %v969
    %2746 = vmatpush.bf16.msra.mxu0 %v961
    %2747 = vmatpush.bf16.msra.mxu0 %v953
    %2748 = vmatpush.bf16.msra.mxu0 %v945
    %2749 = vmatpush.bf16.msra.mxu0 %v937
    %2750 = vmatmul.bf16.gmra.mxu0 %v2662
    %v2751 = vpop.f32.mrf.mxu0
    %v2752 = vadd.f32 0.0, %v2751
    %v2753 = vpop.f32.mrf.mxu0
    %2754 = vdwg.mxu0
    %2755 = vmatpush.bf16.msra.mxu0 %v1057
    %2756 = vmatpush.bf16.msra.mxu0 %v1049
    %2757 = vmatpush.bf16.msra.mxu0 %v1041
    %2758 = vmatpush.bf16.msra.mxu0 %v1033
    %2759 = vmatpush.bf16.msra.mxu0 %v1025
    %2760 = vmatpush.bf16.msra.mxu0 %v1017
    %2761 = vmatpush.bf16.msra.mxu0 %v1009
    %2762 = vmatpush.bf16.msra.mxu0 %v1001
    %2763 = vmatmul.bf16.gmra.mxu0 %v2663
    %v2764 = vpop.f32.mrf.mxu0
    %v2765 = vadd.f32 %v2752, %v2764
    %v2766 = vpop.f32.mrf.mxu0
    %2767 = vdwg.mxu0
    %2768 = vmatpush.bf16.msra.mxu0 %v994
    %2769 = vmatpush.bf16.msra.mxu0 %v986
    %2770 = vmatpush.bf16.msra.mxu0 %v978
    %2771 = vmatpush.bf16.msra.mxu0 %v970
    %2772 = vmatpush.bf16.msra.mxu0 %v962
    %2773 = vmatpush.bf16.msra.mxu0 %v954
    %2774 = vmatpush.bf16.msra.mxu0 %v946
    %2775 = vmatpush.bf16.msra.mxu0 %v938
    %2776 = vmatmul.bf16.gmra.mxu0 %v2662
    %v2777 = vpop.f32.mrf.mxu0
    %v2778 = vadd.f32 0.0, %v2777
    %v2779 = vpop.f32.mrf.mxu0
    %2780 = vdwg.mxu0
    %2781 = vmatpush.bf16.msra.mxu0 %v1058
    %2782 = vmatpush.bf16.msra.mxu0 %v1050
    %2783 = vmatpush.bf16.msra.mxu0 %v1042
    %2784 = vmatpush.bf16.msra.mxu0 %v1034
    %2785 = vmatpush.bf16.msra.mxu0 %v1026
    %2786 = vmatpush.bf16.msra.mxu0 %v1018
    %2787 = vmatpush.bf16.msra.mxu0 %v1010
    %2788 = vmatpush.bf16.msra.mxu0 %v1002
    %2789 = vmatmul.bf16.gmra.mxu0 %v2663
    %v2790 = vpop.f32.mrf.mxu0
    %v2791 = vadd.f32 %v2778, %v2790
    %v2792 = vpop.f32.mrf.mxu0
    %2793 = vdwg.mxu0
    %2794 = vmatpush.bf16.msra.mxu0 %v995
    %2795 = vmatpush.bf16.msra.mxu0 %v987
    %2796 = vmatpush.bf16.msra.mxu0 %v979
    %2797 = vmatpush.bf16.msra.mxu0 %v971
    %2798 = vmatpush.bf16.msra.mxu0 %v963
    %2799 = vmatpush.bf16.msra.mxu0 %v955
    %2800 = vmatpush.bf16.msra.mxu0 %v947
    %2801 = vmatpush.bf16.msra.mxu0 %v939
    %2802 = vmatmul.bf16.gmra.mxu0 %v2662
    %v2803 = vpop.f32.mrf.mxu0
    %v2804 = vadd.f32 0.0, %v2803
    %v2805 = vpop.f32.mrf.mxu0
    %2806 = vdwg.mxu0
    %2807 = vmatpush.bf16.msra.mxu0 %v1059
    %2808 = vmatpush.bf16.msra.mxu0 %v1051
    %2809 = vmatpush.bf16.msra.mxu0 %v1043
    %2810 = vmatpush.bf16.msra.mxu0 %v1035
    %2811 = vmatpush.bf16.msra.mxu0 %v1027
    %2812 = vmatpush.bf16.msra.mxu0 %v1019
    %2813 = vmatpush.bf16.msra.mxu0 %v1011
    %2814 = vmatpush.bf16.msra.mxu0 %v1003
    %2815 = vmatmul.bf16.gmra.mxu0 %v2663
    %v2816 = vpop.f32.mrf.mxu0
    %v2817 = vadd.f32 %v2804, %v2816
    %v2818 = vpop.f32.mrf.mxu0
    %2819 = vdwg.mxu0
    %2820 = vmatpush.bf16.msra.mxu0 %v996
    %2821 = vmatpush.bf16.msra.mxu0 %v988
    %2822 = vmatpush.bf16.msra.mxu0 %v980
    %2823 = vmatpush.bf16.msra.mxu0 %v972
    %2824 = vmatpush.bf16.msra.mxu0 %v964
    %2825 = vmatpush.bf16.msra.mxu0 %v956
    %2826 = vmatpush.bf16.msra.mxu0 %v948
    %2827 = vmatpush.bf16.msra.mxu0 %v940
    %2828 = vmatmul.bf16.gmra.mxu0 %v2662
    %v2829 = vpop.f32.mrf.mxu0
    %v2830 = vadd.f32 0.0, %v2829
    %v2831 = vpop.f32.mrf.mxu0
    %2832 = vdwg.mxu0
    %2833 = vmatpush.bf16.msra.mxu0 %v1060
    %2834 = vmatpush.bf16.msra.mxu0 %v1052
    %2835 = vmatpush.bf16.msra.mxu0 %v1044
    %2836 = vmatpush.bf16.msra.mxu0 %v1036
    %2837 = vmatpush.bf16.msra.mxu0 %v1028
    %2838 = vmatpush.bf16.msra.mxu0 %v1020
    %2839 = vmatpush.bf16.msra.mxu0 %v1012
    %2840 = vmatpush.bf16.msra.mxu0 %v1004
    %2841 = vmatmul.bf16.gmra.mxu0 %v2663
    %v2842 = vpop.f32.mrf.mxu0
    %v2843 = vadd.f32 %v2830, %v2842
    %v2844 = vpop.f32.mrf.mxu0
    %2845 = vdwg.mxu0
    %2846 = vmatpush.bf16.msra.mxu0 %v997
    %2847 = vmatpush.bf16.msra.mxu0 %v989
    %2848 = vmatpush.bf16.msra.mxu0 %v981
    %2849 = vmatpush.bf16.msra.mxu0 %v973
    %2850 = vmatpush.bf16.msra.mxu0 %v965
    %2851 = vmatpush.bf16.msra.mxu0 %v957
    %2852 = vmatpush.bf16.msra.mxu0 %v949
    %2853 = vmatpush.bf16.msra.mxu0 %v941
    %2854 = vmatmul.bf16.gmra.mxu0 %v2662
    %v2855 = vpop.f32.mrf.mxu0
    %v2856 = vadd.f32 0.0, %v2855
    %v2857 = vpop.f32.mrf.mxu0
    %2858 = vdwg.mxu0
    %2859 = vmatpush.bf16.msra.mxu0 %v1061
    %2860 = vmatpush.bf16.msra.mxu0 %v1053
    %2861 = vmatpush.bf16.msra.mxu0 %v1045
    %2862 = vmatpush.bf16.msra.mxu0 %v1037
    %2863 = vmatpush.bf16.msra.mxu0 %v1029
    %2864 = vmatpush.bf16.msra.mxu0 %v1021
    %2865 = vmatpush.bf16.msra.mxu0 %v1013
    %2866 = vmatpush.bf16.msra.mxu0 %v1005
    %2867 = vmatmul.bf16.gmra.mxu0 %v2663
    %v2868 = vpop.f32.mrf.mxu0
    %v2869 = vadd.f32 %v2856, %v2868
    %v2870 = vpop.f32.mrf.mxu0
    %2871 = vdwg.mxu0
    %vm2872 = vcmp.ge.f32.partialorder %v2687, 0.0
    %vm2873 = vcmp.ge.f32.partialorder %v2713, 0.0
    %vm2874 = vcmp.ge.f32.partialorder %v2739, 0.0
    %vm2875 = vcmp.ge.f32.partialorder %v2765, 0.0
    %vm2876 = vcmp.ge.f32.partialorder %v2791, 0.0
    %vm2877 = vcmp.ge.f32.partialorder %v2817, 0.0
    %vm2878 = vcmp.ge.f32.partialorder %v2843, 0.0
    %vm2879 = vcmp.ge.f32.partialorder %v2869, 0.0
    %v2880 = vmul.f32 %v2687, 0.01
    %v2881 = vmul.f32 %v2713, 0.01
    %v2882 = vmul.f32 %v2739, 0.01
    %v2883 = vmul.f32 %v2765, 0.01
    %v2884 = vmul.f32 %v2791, 0.01
    %v2885 = vmul.f32 %v2817, 0.01
    %v2886 = vmul.f32 %v2843, 0.01
    %v2887 = vmul.f32 %v2869, 0.01
    %v2888 = vsel %vm2872, %v2687, %v2880
    %v2889 = vsel %vm2873, %v2713, %v2881
    %v2890 = vsel %vm2874, %v2739, %v2882
    %v2891 = vsel %vm2875, %v2765, %v2883
    %v2892 = vsel %vm2876, %v2791, %v2884
    %v2893 = vsel %vm2877, %v2817, %v2885
    %v2894 = vsel %vm2878, %v2843, %v2886
    %v2895 = vsel %vm2879, %v2869, %v2887
    %v2896 = vpack.c.bf16 %v2888, %v2888
    %v2897 = vpack.c.bf16 %v2889, %v2889
    %v2898 = vpack.c.bf16 %v2890, %v2890
    %v2899 = vpack.c.bf16 %v2891, %v2891
    %v2900 = vpack.c.bf16 %v2892, %v2892
    %v2901 = vpack.c.bf16 %v2893, %v2893
    %v2902 = vpack.c.bf16 %v2894, %v2894
    %v2903 = vpack.c.bf16 %v2895, %v2895
    %2904 = vmatpush.bf16.msra.mxu0 %v1828
    %2905 = vmatpush.bf16.msra.mxu0 %v1826
    %2906 = vmatpush.bf16.msra.mxu0 %v1824
    %2907 = vmatpush.bf16.msra.mxu0 %v1822
    %2908 = vmatpush.bf16.msra.mxu0 %v1820
    %2909 = vmatpush.bf16.msra.mxu0 %v1818
    %2910 = vmatpush.bf16.msra.mxu0 %v1816
    %2911 = vmatpush.bf16.msra.mxu0 %v1814
    %2912 = vmatmul.bf16.gmra.mxu0 %v2896
    %v2913 = vpop.f32.mrf.mxu0
    %v2914 = vadd.f32 0.0, %v2913
    %v2915 = vpop.f32.mrf.mxu0
    %2916 = vdwg.mxu0
    %2917 = vmatpush.bf16.msra.mxu0 %v1844
    %2918 = vmatpush.bf16.msra.mxu0 %v1842
    %2919 = vmatpush.bf16.msra.mxu0 %v1840
    %2920 = vmatpush.bf16.msra.mxu0 %v1838
    %2921 = vmatpush.bf16.msra.mxu0 %v1836
    %2922 = vmatpush.bf16.msra.mxu0 %v1834
    %2923 = vmatpush.bf16.msra.mxu0 %v1832
    %2924 = vmatpush.bf16.msra.mxu0 %v1830
    %2925 = vmatmul.bf16.gmra.mxu0 %v2897
    %v2926 = vpop.f32.mrf.mxu0
    %v2927 = vadd.f32 %v2914, %v2926
    %v2928 = vpop.f32.mrf.mxu0
    %2929 = vdwg.mxu0
    %2930 = vmatpush.bf16.msra.mxu0 %v1860
    %2931 = vmatpush.bf16.msra.mxu0 %v1858
    %2932 = vmatpush.bf16.msra.mxu0 %v1856
    %2933 = vmatpush.bf16.msra.mxu0 %v1854
    %2934 = vmatpush.bf16.msra.mxu0 %v1852
    %2935 = vmatpush.bf16.msra.mxu0 %v1850
    %2936 = vmatpush.bf16.msra.mxu0 %v1848
    %2937 = vmatpush.bf16.msra.mxu0 %v1846
    %2938 = vmatmul.bf16.gmra.mxu0 %v2898
    %v2939 = vpop.f32.mrf.mxu0
    %v2940 = vadd.f32 %v2927, %v2939
    %v2941 = vpop.f32.mrf.mxu0
    %2942 = vdwg.mxu0
    %2943 = vmatpush.bf16.msra.mxu0 %v1876
    %2944 = vmatpush.bf16.msra.mxu0 %v1874
    %2945 = vmatpush.bf16.msra.mxu0 %v1872
    %2946 = vmatpush.bf16.msra.mxu0 %v1870
    %2947 = vmatpush.bf16.msra.mxu0 %v1868
    %2948 = vmatpush.bf16.msra.mxu0 %v1866
    %2949 = vmatpush.bf16.msra.mxu0 %v1864
    %2950 = vmatpush.bf16.msra.mxu0 %v1862
    %2951 = vmatmul.bf16.gmra.mxu0 %v2899
    %v2952 = vpop.f32.mrf.mxu0
    %v2953 = vadd.f32 %v2940, %v2952
    %v2954 = vpop.f32.mrf.mxu0
    %2955 = vdwg.mxu0
    %2956 = vmatpush.bf16.msra.mxu0 %v1892
    %2957 = vmatpush.bf16.msra.mxu0 %v1890
    %2958 = vmatpush.bf16.msra.mxu0 %v1888
    %2959 = vmatpush.bf16.msra.mxu0 %v1886
    %2960 = vmatpush.bf16.msra.mxu0 %v1884
    %2961 = vmatpush.bf16.msra.mxu0 %v1882
    %2962 = vmatpush.bf16.msra.mxu0 %v1880
    %2963 = vmatpush.bf16.msra.mxu0 %v1878
    %2964 = vmatmul.bf16.gmra.mxu0 %v2900
    %v2965 = vpop.f32.mrf.mxu0
    %v2966 = vadd.f32 %v2953, %v2965
    %v2967 = vpop.f32.mrf.mxu0
    %2968 = vdwg.mxu0
    %2969 = vmatpush.bf16.msra.mxu0 %v1908
    %2970 = vmatpush.bf16.msra.mxu0 %v1906
    %2971 = vmatpush.bf16.msra.mxu0 %v1904
    %2972 = vmatpush.bf16.msra.mxu0 %v1902
    %2973 = vmatpush.bf16.msra.mxu0 %v1900
    %2974 = vmatpush.bf16.msra.mxu0 %v1898
    %2975 = vmatpush.bf16.msra.mxu0 %v1896
    %2976 = vmatpush.bf16.msra.mxu0 %v1894
    %2977 = vmatmul.bf16.gmra.mxu0 %v2901
    %v2978 = vpop.f32.mrf.mxu0
    %v2979 = vadd.f32 %v2966, %v2978
    %v2980 = vpop.f32.mrf.mxu0
    %2981 = vdwg.mxu0
    %2982 = vmatpush.bf16.msra.mxu0 %v1924
    %2983 = vmatpush.bf16.msra.mxu0 %v1922
    %2984 = vmatpush.bf16.msra.mxu0 %v1920
    %2985 = vmatpush.bf16.msra.mxu0 %v1918
    %2986 = vmatpush.bf16.msra.mxu0 %v1916
    %2987 = vmatpush.bf16.msra.mxu0 %v1914
    %2988 = vmatpush.bf16.msra.mxu0 %v1912
    %2989 = vmatpush.bf16.msra.mxu0 %v1910
    %2990 = vmatmul.bf16.gmra.mxu0 %v2902
    %v2991 = vpop.f32.mrf.mxu0
    %v2992 = vadd.f32 %v2979, %v2991
    %v2993 = vpop.f32.mrf.mxu0
    %2994 = vdwg.mxu0
    %2995 = vmatpush.bf16.msra.mxu0 %v1940
    %2996 = vmatpush.bf16.msra.mxu0 %v1938
    %2997 = vmatpush.bf16.msra.mxu0 %v1936
    %2998 = vmatpush.bf16.msra.mxu0 %v1934
    %2999 = vmatpush.bf16.msra.mxu0 %v1932
    %3000 = vmatpush.bf16.msra.mxu0 %v1930
    %3001 = vmatpush.bf16.msra.mxu0 %v1928
    %3002 = vmatpush.bf16.msra.mxu0 %v1926
    %3003 = vmatmul.bf16.gmra.mxu0 %v2903
    %v3004 = vpop.f32.mrf.mxu0
    %v3005 = vadd.f32 %v2992, %v3004
    %v3006 = vpop.f32.mrf.mxu0
    %3007 = vdwg.mxu0
    %3008 = vmatpush.bf16.msra.mxu0 %v1829
    %3009 = vmatpush.bf16.msra.mxu0 %v1827
    %3010 = vmatpush.bf16.msra.mxu0 %v1825
    %3011 = vmatpush.bf16.msra.mxu0 %v1823
    %3012 = vmatpush.bf16.msra.mxu0 %v1821
    %3013 = vmatpush.bf16.msra.mxu0 %v1819
    %3014 = vmatpush.bf16.msra.mxu0 %v1817
    %3015 = vmatpush.bf16.msra.mxu0 %v1815
    %3016 = vmatmul.bf16.gmra.mxu0 %v2896
    %v3017 = vpop.f32.mrf.mxu0
    %v3018 = vadd.f32 0.0, %v3017
    %v3019 = vpop.f32.mrf.mxu0
    %3020 = vdwg.mxu0
    %3021 = vmatpush.bf16.msra.mxu0 %v1845
    %3022 = vmatpush.bf16.msra.mxu0 %v1843
    %3023 = vmatpush.bf16.msra.mxu0 %v1841
    %3024 = vmatpush.bf16.msra.mxu0 %v1839
    %3025 = vmatpush.bf16.msra.mxu0 %v1837
    %3026 = vmatpush.bf16.msra.mxu0 %v1835
    %3027 = vmatpush.bf16.msra.mxu0 %v1833
    %3028 = vmatpush.bf16.msra.mxu0 %v1831
    %3029 = vmatmul.bf16.gmra.mxu0 %v2897
    %v3030 = vpop.f32.mrf.mxu0
    %v3031 = vadd.f32 %v3018, %v3030
    %v3032 = vpop.f32.mrf.mxu0
    %3033 = vdwg.mxu0
    %3034 = vmatpush.bf16.msra.mxu0 %v1861
    %3035 = vmatpush.bf16.msra.mxu0 %v1859
    %3036 = vmatpush.bf16.msra.mxu0 %v1857
    %3037 = vmatpush.bf16.msra.mxu0 %v1855
    %3038 = vmatpush.bf16.msra.mxu0 %v1853
    %3039 = vmatpush.bf16.msra.mxu0 %v1851
    %3040 = vmatpush.bf16.msra.mxu0 %v1849
    %3041 = vmatpush.bf16.msra.mxu0 %v1847
    %3042 = vmatmul.bf16.gmra.mxu0 %v2898
    %v3043 = vpop.f32.mrf.mxu0
    %v3044 = vadd.f32 %v3031, %v3043
    %v3045 = vpop.f32.mrf.mxu0
    %3046 = vdwg.mxu0
    %3047 = vmatpush.bf16.msra.mxu0 %v1877
    %3048 = vmatpush.bf16.msra.mxu0 %v1875
    %3049 = vmatpush.bf16.msra.mxu0 %v1873
    %3050 = vmatpush.bf16.msra.mxu0 %v1871
    %3051 = vmatpush.bf16.msra.mxu0 %v1869
    %3052 = vmatpush.bf16.msra.mxu0 %v1867
    %3053 = vmatpush.bf16.msra.mxu0 %v1865
    %3054 = vmatpush.bf16.msra.mxu0 %v1863
    %3055 = vmatmul.bf16.gmra.mxu0 %v2899
    %v3056 = vpop.f32.mrf.mxu0
    %v3057 = vadd.f32 %v3044, %v3056
    %v3058 = vpop.f32.mrf.mxu0
    %3059 = vdwg.mxu0
    %3060 = vmatpush.bf16.msra.mxu0 %v1893
    %3061 = vmatpush.bf16.msra.mxu0 %v1891
    %3062 = vmatpush.bf16.msra.mxu0 %v1889
    %3063 = vmatpush.bf16.msra.mxu0 %v1887
    %3064 = vmatpush.bf16.msra.mxu0 %v1885
    %3065 = vmatpush.bf16.msra.mxu0 %v1883
    %3066 = vmatpush.bf16.msra.mxu0 %v1881
    %3067 = vmatpush.bf16.msra.mxu0 %v1879
    %3068 = vmatmul.bf16.gmra.mxu0 %v2900
    %v3069 = vpop.f32.mrf.mxu0
    %v3070 = vadd.f32 %v3057, %v3069
    %v3071 = vpop.f32.mrf.mxu0
    %3072 = vdwg.mxu0
    %3073 = vmatpush.bf16.msra.mxu0 %v1909
    %3074 = vmatpush.bf16.msra.mxu0 %v1907
    %3075 = vmatpush.bf16.msra.mxu0 %v1905
    %3076 = vmatpush.bf16.msra.mxu0 %v1903
    %3077 = vmatpush.bf16.msra.mxu0 %v1901
    %3078 = vmatpush.bf16.msra.mxu0 %v1899
    %3079 = vmatpush.bf16.msra.mxu0 %v1897
    %3080 = vmatpush.bf16.msra.mxu0 %v1895
    %3081 = vmatmul.bf16.gmra.mxu0 %v2901
    %v3082 = vpop.f32.mrf.mxu0
    %v3083 = vadd.f32 %v3070, %v3082
    %v3084 = vpop.f32.mrf.mxu0
    %3085 = vdwg.mxu0
    %3086 = vmatpush.bf16.msra.mxu0 %v1925
    %3087 = vmatpush.bf16.msra.mxu0 %v1923
    %3088 = vmatpush.bf16.msra.mxu0 %v1921
    %3089 = vmatpush.bf16.msra.mxu0 %v1919
    %3090 = vmatpush.bf16.msra.mxu0 %v1917
    %3091 = vmatpush.bf16.msra.mxu0 %v1915
    %3092 = vmatpush.bf16.msra.mxu0 %v1913
    %3093 = vmatpush.bf16.msra.mxu0 %v1911
    %3094 = vmatmul.bf16.gmra.mxu0 %v2902
    %v3095 = vpop.f32.mrf.mxu0
    %v3096 = vadd.f32 %v3083, %v3095
    %v3097 = vpop.f32.mrf.mxu0
    %3098 = vdwg.mxu0
    %3099 = vmatpush.bf16.msra.mxu0 %v1941
    %3100 = vmatpush.bf16.msra.mxu0 %v1939
    %3101 = vmatpush.bf16.msra.mxu0 %v1937
    %3102 = vmatpush.bf16.msra.mxu0 %v1935
    %3103 = vmatpush.bf16.msra.mxu0 %v1933
    %3104 = vmatpush.bf16.msra.mxu0 %v1931
    %3105 = vmatpush.bf16.msra.mxu0 %v1929
    %3106 = vmatpush.bf16.msra.mxu0 %v1927
    %3107 = vmatmul.bf16.gmra.mxu0 %v2903
    %v3108 = vpop.f32.mrf.mxu0
    %v3109 = vadd.f32 %v3096, %v3108
    %v3110 = vpop.f32.mrf.mxu0
    %3111 = vdwg.mxu0
    %s3112 = scalar_lea.vmem %s5, 24
    %v3113 = vld [vmem:[%s3112] sm:$0xff]
    %s3114 = scalar_lea.vmem %s6, 24
    %v3115 = vld [vmem:[%s3114] sm:$0xff]
    %3116 = vrot.lane.b32.xlu0 %v3005, 17
    %v3117 = vpop.permute.xlu0 %3116
    %3118 = vrot.lane.b32.xlu0 %v3109, 17
    %v3119 = vpop.permute.xlu0 %3118
    %v3120 = vsel %vm351, %v3117, %v3119
    %v3121 = vsel %vm351, %v3119, %v3117
    %v3122 = vmul.f32 %v3121, %v315
    %v3123 = vmul.f32 %v3120, %v316
    %3124 = vrot.lane.b32.xlu0 %v3005, 16
    %v3125 = vpop.permute.xlu0 %3124
    %3126 = vrot.lane.b32.xlu0 %v3109, 16
    %v3127 = vpop.permute.xlu0 %3126
    %v3128 = vsel %vm360, %v3125, %v3127
    %v3129 = vsel %vm360, %v3127, %v3125
    %v3130 = vmul.f32 %v3129, %v318
    %v3131 = vmul.f32 %v3128, %v319
    %3132 = vrot.lane.b32.xlu0 %v3005, 15
    %v3133 = vpop.permute.xlu0 %3132
    %3134 = vrot.lane.b32.xlu0 %v3109, 15
    %v3135 = vpop.permute.xlu0 %3134
    %v3136 = vsel %vm369, %v3133, %v3135
    %v3137 = vsel %vm369, %v3135, %v3133
    %v3138 = vmul.f32 %v3137, %v321
    %v3139 = vmul.f32 %v3136, %v322
    %3140 = vrot.lane.b32.xlu0 %v3005, 1
    %v3141 = vpop.permute.xlu0 %3140
    %3142 = vrot.lane.b32.xlu0 %v3109, 1
    %v3143 = vpop.permute.xlu0 %3142
    %v3144 = vsel %vm378, %v3141, %v3143
    %v3145 = vsel %vm378, %v3143, %v3141
    %v3146 = vmul.f32 %v3145, %v324
    %v3147 = vmul.f32 %v3144, %v325
    %v3148 = vmul.f32 %v3005, %v327
    %v3149 = vmul.f32 %v3109, %v328
    %3150 = vrot.lane.b32.xlu0 %v3005, 127
    %v3151 = vpop.permute.xlu0 %3150
    %3152 = vrot.lane.b32.xlu0 %v3109, 127
    %v3153 = vpop.permute.xlu0 %3152
    %v3154 = vsel %vm389, %v3151, %v3153
    %v3155 = vsel %vm389, %v3153, %v3151
    %v3156 = vmul.f32 %v3154, %v330
    %v3157 = vmul.f32 %v3155, %v331
    %3158 = vrot.lane.b32.xlu0 %v3005, 113
    %v3159 = vpop.permute.xlu0 %3158
    %3160 = vrot.lane.b32.xlu0 %v3109, 113
    %v3161 = vpop.permute.xlu0 %3160
    %v3162 = vsel %vm398, %v3159, %v3161
    %v3163 = vsel %vm398, %v3161, %v3159
    %v3164 = vmul.f32 %v3162, %v333
    %v3165 = vmul.f32 %v3163, %v334
    %3166 = vrot.lane.b32.xlu0 %v3005, 112
    %v3167 = vpop.permute.xlu0 %3166
    %3168 = vrot.lane.b32.xlu0 %v3109, 112
    %v3169 = vpop.permute.xlu0 %3168
    %v3170 = vsel %vm407, %v3167, %v3169
    %v3171 = vsel %vm407, %v3169, %v3167
    %v3172 = vmul.f32 %v3170, %v336
    %v3173 = vmul.f32 %v3171, %v337
    %3174 = vrot.lane.b32.xlu0 %v3005, 111
    %v3175 = vpop.permute.xlu0 %3174
    %3176 = vrot.lane.b32.xlu0 %v3109, 111
    %v3177 = vpop.permute.xlu0 %3176
    %v3178 = vsel %vm416, %v3175, %v3177
    %v3179 = vsel %vm416, %v3177, %v3175
    %v3180 = vmul.f32 %v3178, %v339
    %v3181 = vmul.f32 %v3179, %v340
    %3183 = vset.pattern.permute.xlu0 0
    %3184 = vperm.xlu0 %3183, %v3115
    %v3185 = vpop.permute.xlu0 %3184
    %v3188 = vsel %vm426, %v3113, 0
    %3190 = vmatpush.msra.mxu0 0.0
    %3191 = vmatpush.msra.mxu0 0.0
    %3192 = vmatpush.msra.mxu0 0.0
    %3193 = vmatpush.msra.mxu0 0.0
    %3194 = vmatpush.msra.mxu0 0.0
    %3195 = vmatpush.msra.mxu0 0.0
    %3196 = vmatpush.msra.mxu0 0.0
    %3197 = vmatpush.msra.mxu0 %v3180
    %3198 = vmatpush.msra.mxu0 %v3172
    %3199 = vmatpush.msra.mxu0 %v3164
    %3200 = vmatpush.msra.mxu0 %v3156
    %3201 = vmatpush.msra.mxu0 %v3148
    %3202 = vmatpush.msra.mxu0 %v3146
    %3203 = vmatpush.msra.mxu0 %v3138
    %3204 = vmatpush.msra.mxu0 %v3130
    %3205 = vmatpush.msra.mxu0 %v3122
    %3206 = vmatmul.f32.gmra.mxu0 %v3188
    %v3207 = vpop.f32.mrf.mxu0
    %v3208 = vadd.f32 %v3185, %v3207
    %3209 = vdwg.mxu0
    %3210 = vmatpush.msra.mxu0 0.0
    %3211 = vmatpush.msra.mxu0 0.0
    %3212 = vmatpush.msra.mxu0 0.0
    %3213 = vmatpush.msra.mxu0 0.0
    %3214 = vmatpush.msra.mxu0 0.0
    %3215 = vmatpush.msra.mxu0 0.0
    %3216 = vmatpush.msra.mxu0 0.0
    %3217 = vmatpush.msra.mxu0 %v3181
    %3218 = vmatpush.msra.mxu0 %v3173
    %3219 = vmatpush.msra.mxu0 %v3165
    %3220 = vmatpush.msra.mxu0 %v3157
    %3221 = vmatpush.msra.mxu0 %v3149
    %3222 = vmatpush.msra.mxu0 %v3147
    %3223 = vmatpush.msra.mxu0 %v3139
    %3224 = vmatpush.msra.mxu0 %v3131
    %3225 = vmatpush.msra.mxu0 %v3123
    %3226 = vmatmul.f32.gmra.mxu0 %v3188
    %v3227 = vpop.f32.mrf.mxu0
    %v3228 = vadd.f32 %v3185, %v3227
    %3229 = vdwg.mxu0
    %v3230 = vadd.f32 %v3208, %v3228
    %3231 = vadd.xlane.f32.xlu0 %v3230
    %v3232 = vpop.xlane.xlu0 %3231
    %v3233 = vmul.f32 %v3208, %v3208
    %v3234 = vmul.f32 %v3228, %v3228
    %v3235 = vadd.f32 %v3233, %v3234
    %3236 = vadd.xlane.f32.xlu0 %v3235
    %v3237 = vpop.xlane.xlu0 %3236
    %v3238 = vsel %vm478, %v3232, %v3237
    %3239 = vmatpush.msra.mxu0 0.0
    %3240 = vmatpush.msra.mxu0 0.0
    %3241 = vmatpush.msra.mxu0 0.0
    %3242 = vmatpush.msra.mxu0 0.0
    %3243 = vmatpush.msra.mxu0 0.0
    %3244 = vmatpush.msra.mxu0 0.0
    %3245 = vmatpush.msra.mxu0 0.0
    %3246 = vmatpush.msra.mxu0 0.0
    %3247 = vmatpush.msra.mxu0 0.0
    %3248 = vmatpush.msra.mxu0 0.0
    %3249 = vmatpush.msra.mxu0 0.0
    %3250 = vmatpush.msra.mxu0 0.0
    %3251 = vmatpush.msra.mxu0 0.0
    %3252 = vmatpush.msra.mxu0 0.0
    %3253 = vmatpush.msra.mxu0 0.0
    %3254 = vmatpush.msra.mxu0 %v3238
    %3255 = vmatmul.f32.gmra.mxu0 %v482
    %v3256 = vpop.f32.mrf.mxu0
    %v3257 = vadd.f32 0.0, %v3256
    %3258 = vdwg.mxu0
    %v3259 = vmul.f32 %v3257, %v3257
    %3261 = vrot.lane.b32.xlu0 %v3259, 1
    %v3262 = vpop.permute.xlu0 %3261
    %v3264 = vsub.f32 %v3257, %v3262
    %v3265 = vmax.f32 %v3264, 0.0
    %3267 = vset.pattern.permute.xlu0 0
    %3268 = vperm.xlu0 %3267, %v3257
    %v3269 = vpop.permute.xlu0 %3268
    %v3271 = vsub.f32 %v3208, %v3269
    %v3272 = vsub.f32 %v3228, %v3269
    %v3273 = vadd.f32 %v3265, 1e-05
    %v3274 = vrsqrt.pop %v3273
    %v3275 = vmul.f32 %v3274, %v3273
    %v3276 = vmul.f32 %v3275, %v3274
    %v3277 = vmul.f32 0.5, %v3276
    %v3278 = vsub.f32 1.5, %v3277
    %v3279 = vmul.f32 %v3274, %v3278
    %vm3280 = vweird.f32 %v3273
    %vm3281 = vweird.f32 %v3274
    %vm3282 = vmor %vm3280, %vm3281
    %v3283 = vsel %vm3282, %v3274, %v3279
    %3285 = vset.pattern.permute.xlu0 1
    %3286 = vperm.xlu0 %3285, %v3283
    %v3287 = vpop.permute.xlu0 %3286
    %v3289 = vmul.f32 %v3271, %v3287
    %v3290 = vmul.f32 %v3272, %v3287
    %3291 = vset.pattern.permute.xlu0 1
    %3292 = vperm.xlu0 %3291, %v3115
    %v3293 = vpop.permute.xlu0 %3292
    %v3295 = vmul.f32 %v3289, %v3293
    %v3296 = vmul.f32 %v3290, %v3293
    %3297 = vset.pattern.permute.xlu0 2
    %3298 = vperm.xlu0 %3297, %v3115
    %v3299 = vpop.permute.xlu0 %3298
    %v3301 = vadd.f32 %v3295, %v3299
    %v3302 = vadd.f32 %v3296, %v3299
    %v3303 = vadd.f32 %v2469, %v3301
    %v3304 = vadd.f32 %v2470, %v3302
    %3305 = vst [vmem:[%s7] sm:$0xff] %v3303
    %3306 = vst [vmem:[%s7 + $0x8] sm:$0xff] %v3304
    // Predicated region
    $region38: #{resnet_forward.1} parent=1 // pred_check
      _
    $region39: #{resnet_forward.1} parent=1 // pred_check_branch
      %3308 = sbr.rel (0) target = $region41
    $region40: #{resnet_forward.1} parent=1 // pred_region
      _
    $region41: #{resnet_forward.1} parent=1 // pred_fallthru
      _
    // Predicated region
    $region42: #{resnet_forward.1} parent=1 // pred_check
      _
    $region43: #{resnet_forward.1} parent=1 // pred_check_branch
      %3310 = sbr.rel (0) target = $region45
    $region44: #{resnet_forward.1} parent=1 // pred_region
      _
    $region45: #{resnet_forward.1} parent=1 // pred_fallthru
      _
    %3311 = vsyncpa [#allocation3], 1
    %3312 = vsyncpa [#allocation5], 1

</llo_original>
